<compile_context>
chip_gen: v7x
topology: tpu7x:2x2x1
jax: 0.10.0
libtpu: 0.0.40
codegen_flags: <defaults>
</compile_context>

<pallas_src>
from functools import partial
from typing import Tuple, Union

import jax
import jax.numpy as jnp
from jax import lax
from jax.experimental import pallas as pl
from jax.experimental.pallas import tpu as pltpu

_MiB = 1024 * 1024


def _pair(v):
    if isinstance(v, (tuple, list)):
        return (int(v[0]), int(v[1]))
    return (int(v), int(v))


def _round_up(v, m):
    return ((v + m - 1) // m) * m


def _vmem_capacity_bytes():
    """Per-core VMEM capacity; conservative (v7x-class) fallback if unknown."""
    try:
        return int(pltpu.get_tpu_info().vmem_capacity_bytes)
    except Exception:
        return 64 * _MiB


def _patch_kernel(x_ref, o_ref, *scratch, wh, ww, sh, sw, n_w, R, H, W, ph, pw,
                  padded, direct, use_concat):
    # x_ref : (Ct, H, W)   unpadded channel tile, revisited across the i axis
    # o_ref : direct -> (R, n_w, Ct, wh, ww)   final-layout block
    #         slab   -> (R, Ct, wh, n_w*ww)    lane-dense slab (wrapper transposes)
    # scratch: [(Ct, Hp, Wp)] zero-halo staging buffer (only when padded)
    i = pl.program_id(2)  # patch-row block index (sequential innermost axis)
    Ct = x_ref.shape[0]
    Hp, Wp = H + 2 * ph, W + 2 * pw
    w_out = n_w * ww

    if padded:
        pad_ref = scratch[0]

        # NOTE: keyed off i == 0, valid only while the i axis is the sequential
        # ("arbitrary") innermost axis (see TODO above for parallel-i).
        @pl.when(i == 0)
        def _stage_padded():
            zeros = lambda shp: jnp.zeros(shp, x_ref.dtype)
            # Zero only the halo border strips; the interior is overwritten.
            if ph:
                pad_ref[:, 0:ph, :] = zeros((Ct, ph, Wp))
                pad_ref[:, ph + H:Hp, :] = zeros((Ct, ph, Wp))
            if pw:
                pad_ref[:, :, 0:pw] = zeros((Ct, Hp, pw))
                pad_ref[:, :, pw + W:Wp] = zeros((Ct, Hp, pw))
            pad_ref[:, ph:ph + H, pw:pw + W] = x_ref[...]

        src = pad_ref
    else:
        src = x_ref

    def emit_row(r):
        row_start = (i * R + r) * sh
        # Only hint an alignment the compiler can actually exploit (sublane=8).
        row0 = pl.multiple_of(row_start, 8) if sh % 8 == 0 else row_start
        rows = pl.ds(row0, wh)
        if direct:
            # o_ref[r, j]: (Ct, wh, ww) -- final layout, no wrapper transpose.
            for j in range(n_w):
                o_ref[r, j] = src[:, rows, j * sw:j * sw + ww]
        elif sw == ww:
            # Non-overlapping columns: one contiguous lane-dense copy.
            o_ref[r] = src[:, rows, 0:w_out]
        elif use_concat:
            # Assemble the whole lane-dense row in registers (XLU/VALU work),
            # then issue a single wide store instead of n_w masked stores.
            pieces = [src[:, rows, j * sw:j * sw + ww] for j in range(n_w)]
            o_ref[r] = jnp.concatenate(pieces, axis=-1)
        else:
            # Fallback: per-column masked stores (always lowers).
            for j in range(n_w):
                o_ref[r, :, :, j * ww:(j + 1) * ww] = (
                    src[:, rows, j * sw:j * sw + ww])

    per_row_ops = 1 if (not direct and sw == ww) else max(n_w, 1)
    if R <= 8 or R * per_row_ops <= 64:
        for r in range(R):           # static unroll: static sublane/lane starts
            emit_row(r)
    else:
        def body(r, carry):
            emit_row(r)
            return carry
        # Partial unroll keeps LLO scheduling visibility without code blowup.
        lax.fori_loop(0, R, body, 0, unroll=4)


def _choose_tiles(C, H, W, Hp, Wp, wh, ww, n_w, n_h, itemsize, padded, direct,
                  budget_bytes):
    """Pick channel tile Ct and patch-rows-per-step R against a VMEM budget,
    accounting for (sublane, 128-lane) layout padding of every buffer."""
    sub = max(8, 32 // itemsize)      # f32: 8, bf16: 16, int8/fp8: 32 sublanes
    lane = 128
    w_out = n_w * ww

    def in_bytes(ct):
        b = 2 * ct * _round_up(H, sub) * _round_up(W, lane) * itemsize  # dbl-buf
        if padded:
            b += ct * _round_up(Hp, sub) * _round_up(Wp, lane) * itemsize
        return b

    def out_bytes(ct, r):
        if direct:
            blk = r * n_w * ct * _round_up(wh, sub) * _round_up(ww, lane)
        else:
            blk = r * ct * _round_up(wh, sub) * _round_up(w_out, lane)
        return 2 * blk * itemsize                                       # dbl-buf

    half = budget_bytes // 2
    Ct = 1
    for d in range(C, 0, -1):
        if C % d == 0 and in_bytes(d) <= half:
            Ct = d
            break
    R = 1
    for d in range(n_h, 0, -1):
        if n_h % d == 0 and out_bytes(Ct, d) <= half:
            R = d
            break
    return Ct, R


def extract_tensor_patches(
    x: jax.Array,
    window_size: Union[int, Tuple[int, int]],
    stride: Union[int, Tuple[int, int]] = 1,
    padding: Union[int, Tuple[int, int]] = 0,
) -> jax.Array:
    if x.ndim != 4:
        raise ValueError(f"Expected BxCxHxW input, got shape {x.shape}")

    wh, ww = _pair(window_size)
    sh, sw = _pair(stride)
    ph, pw = _pair(padding)

    B, C, H, W = x.shape
    Hp, Wp = H + 2 * ph, W + 2 * pw
    n_h = (Hp - wh) // sh + 1
    n_w = (Wp - ww) // sw + 1
    N = n_h * n_w
    w_out = n_w * ww
    padded = bool(ph or pw)
    itemsize = jnp.dtype(x.dtype).itemsize

    # Large windows: write the final layout directly (wrapper reshape is free).
    # Small windows: lane-dense slab + XLA transpose.
    direct = wh * ww * itemsize >= 512

    # Generation-aware VMEM sizing (v7x: 64 MiB/TC, v5e/v6e: 128 MiB).
    vmem_cap = _vmem_capacity_bytes()
    vmem_limit = max(32 * _MiB, min(vmem_cap - 16 * _MiB, 112 * _MiB))
    budget = (vmem_limit * 3) // 5   # tiles + scratch, leave pipeline headroom

    Ct, R = _choose_tiles(C, H, W, Hp, Wp, wh, ww, n_w, n_h, itemsize, padded,
                          direct, budget)
    n_c = C // Ct
    n_i = n_h // R

    scratch_shapes = []
    if padded:
        scratch_shapes.append(pltpu.VMEM((Ct, Hp, Wp), x.dtype))

    if direct:
        out_shape = jax.ShapeDtypeStruct((B, n_h, n_w, C, wh, ww), x.dtype)
        out_spec = pl.BlockSpec((None, R, n_w, Ct, wh, ww),
                                lambda b, c, i: (b, i, 0, c, 0, 0))
    else:
        out_shape = jax.ShapeDtypeStruct((B, n_h, C, wh, w_out), x.dtype)
        out_spec = pl.BlockSpec((None, R, Ct, wh, w_out),
                                lambda b, c, i: (b, i, c, 0, 0))

    def _build(use_concat):
        kernel = partial(_patch_kernel, wh=wh, ww=ww, sh=sh, sw=sw, n_w=n_w,
                         R=R, H=H, W=W, ph=ph, pw=pw, padded=padded,
                         direct=direct, use_concat=use_concat)
        return pl.pallas_call(
            kernel,
            out_shape=out_shape,
            grid_spec=pltpu.PrefetchScalarGridSpec(
                num_scalar_prefetch=0,
                grid=(B, n_c, n_i),
                in_specs=[
                    # (Ct, H, W) channel tile; block index independent of the
                    # patch-row axis -> DMA'd once per (b, c) and revisited.
                    pl.BlockSpec((None, Ct, H, W), lambda b, c, i: (b, c, 0, 0)),
                ],
                out_specs=out_spec,
                scratch_shapes=scratch_shapes,
            ),
            compiler_params=pltpu.CompilerParams(
                dimension_semantics=("parallel", "parallel", "arbitrary"),
                vmem_limit_bytes=int(vmem_limit),
            ),
        )

    want_concat = (not direct) and (sw != ww)
    if want_concat:
        try:
            raw = _build(True)(x)
        except Exception:
            # Unaligned lane concatenation not supported by this Mosaic build;
            # fall back to per-column masked stores (correct, just slower).
            raw = _build(False)(x)
    else:
        raw = _build(False)(x)

    if direct:
        return raw.reshape(B, N, C, wh, ww)               # free: pure reshape
    # Small-window slab: cheap layout glue in XLA.
    out = raw.reshape(B, n_h, C, wh, n_w, ww)
    out = out.transpose(0, 1, 4, 2, 3, 5)
    return out.reshape(B, N, C, wh, ww)


class ExtractTensorPatches:
    """JAX/Pallas equivalent of kornia.contrib.ExtractTensorPatches."""

    def __init__(self, window_size, stride=1, padding=0):
        self.window_size = _pair(window_size)
        self.stride = _pair(stride)
        self.padding = _pair(padding)

    def __call__(self, x):
        return extract_tensor_patches(x, self.window_size, self.stride,
                                      self.padding)


def _reference(x, window_size, stride, padding):
    """Pure-JAX reference matching the PyTorch semantics."""
    wh, ww = _pair(window_size)
    sh, sw = _pair(stride)
    ph, pw = _pair(padding)
    if ph or pw:
        x = jnp.pad(x, ((0, 0), (0, 0), (ph, ph), (pw, pw)))
    B, C, Hp, Wp = x.shape
    n_h = (Hp - wh) // sh + 1
    n_w = (Wp - ww) // sw + 1
    patches = []
    for i in range(n_h):
        for j in range(n_w):
            patches.append(x[:, :, i * sh:i * sh + wh, j * sw:j * sw + ww])
    return jnp.stack(patches, axis=1)  # (B, N, C, wh, ww)


if __name__ == "__main__":
    key = jax.random.PRNGKey(0)

    # 1) Overlapping patches + padding: slab layout, in-register row assembly
    #    (single wide store / row), zero-halo staging scratch.
    B, C, H, W = 2, 4, 16, 16
    x = jax.random.normal(key, (B, C, H, W), dtype=jnp.float32)
    module = ExtractTensorPatches((4, 4), (2, 2), (1, 1))
    out = jax.block_until_ready(module(x))
    ref = _reference(x, (4, 4), (2, 2), (1, 1))
    assert out.shape == ref.shape, (out.shape, ref.shape)
    assert jnp.allclose(out, ref), "overlap+padding result mismatch"

    # 2) Non-overlapping, no padding: single contiguous lane-dense copy / row.
    out2 = jax.block_until_ready(extract_tensor_patches(x, (4, 4), (4, 4), 0))
    ref2 = _reference(x, (4, 4), (4, 4), 0)
    assert out2.shape == ref2.shape, (out2.shape, ref2.shape)
    assert jnp.allclose(out2, ref2), "fast-path result mismatch"

    # 3) Large window -> direct final-layout writes (no wrapper transpose),
    #    RGB-like channel count and H-only padding.
    x3 = jax.random.normal(jax.random.PRNGKey(0), (1, 3, 32, 32),
                           dtype=jnp.float32)
    out3 = jax.block_until_ready(
        extract_tensor_patches(x3, (8, 16), (4, 8), (2, 0)))
    ref3 = _reference(x3, (8, 16), (4, 8), (2, 0))
    assert out3.shape == ref3.shape, (out3.shape, ref3.shape)
    assert jnp.allclose(out3, ref3), "direct-layout result mismatch"

    print("KERNEL_OK")
</pallas_src>

<mosaic_0001>
module attributes {stable_mosaic.version = 11 : i64} {
  func.func @_patch_kernel(%arg0: i32, %arg1: i32, %arg2: i32, %arg3: memref<1x4x16x16xf32, #tpu.memory_space<vmem>>, %arg4: memref<1x8x4x4x32xf32, #tpu.memory_space<vmem>>, %arg5: memref<4x18x18xf32, #tpu.memory_space<vmem>>) attributes {dimension_semantics = [#tpu.dimension_semantics<parallel>, #tpu.dimension_semantics<parallel>, #tpu.dimension_semantics<arbitrary>], iteration_bounds = array<i64: 2, 1, 1>, scalar_prefetch = 0 : i64, scratch_operands = 1 : i64, tpu.core_type = #tpu.core_type<tc>, window_params = [{transform_indices = @transform_0, window_bounds = array<i64: 1, 4, 16, 16>}, {transform_indices = @transform_1, window_bounds = array<i64: 1, 8, 4, 4, 32>}]} {
    %c0_i32 = arith.constant 0 : i32
    %0 = arith.cmpi eq, %arg2, %c0_i32 : i32
    %1 = arith.extui %0 : i1 to i32
    %c0_i32_0 = arith.constant 0 : i32
    %2 = arith.cmpi ne, %1, %c0_i32_0 : i32
    scf.if %2 {
      %cst = arith.constant 0.000000e+00 : f32
      %187 = vector.broadcast %cst : f32 to vector<4x1x18xf32>
      %c0_173 = arith.constant 0 : index
      %c0_174 = arith.constant 0 : index
      %c0_175 = arith.constant 0 : index
      %188 = vector.load %arg5[%c0_173, %c0_174, %c0_175] : memref<4x18x18xf32, #tpu.memory_space<vmem>>, vector<4x1x18xf32>
      tpu.vector_store %arg5[%c0_173, %c0_174, %c0_175], %187 {strides = array<i32>} : memref<4x18x18xf32, #tpu.memory_space<vmem>>, vector<4x1x18xf32>,
      %cst_176 = arith.constant 0.000000e+00 : f32
      %189 = vector.broadcast %cst_176 : f32 to vector<4x1x18xf32>
      %c0_177 = arith.constant 0 : index
      %c17 = arith.constant 17 : index
      %c0_178 = arith.constant 0 : index
      %190 = vector.load %arg5[%c0_177, %c17, %c0_178] : memref<4x18x18xf32, #tpu.memory_space<vmem>>, vector<4x1x18xf32>
      tpu.vector_store %arg5[%c0_177, %c17, %c0_178], %189 {strides = array<i32>} : memref<4x18x18xf32, #tpu.memory_space<vmem>>, vector<4x1x18xf32>,
      %cst_179 = arith.constant 0.000000e+00 : f32
      %191 = vector.broadcast %cst_179 : f32 to vector<4x18x1xf32>
      %c0_180 = arith.constant 0 : index
      %c0_181 = arith.constant 0 : index
      %c0_182 = arith.constant 0 : index
      %192 = vector.load %arg5[%c0_180, %c0_181, %c0_182] : memref<4x18x18xf32, #tpu.memory_space<vmem>>, vector<4x18x1xf32>
      tpu.vector_store %arg5[%c0_180, %c0_181, %c0_182], %191 {strides = array<i32>} : memref<4x18x18xf32, #tpu.memory_space<vmem>>, vector<4x18x1xf32>,
      %cst_183 = arith.constant 0.000000e+00 : f32
      %193 = vector.broadcast %cst_183 : f32 to vector<4x18x1xf32>
      %c0_184 = arith.constant 0 : index
      %c0_185 = arith.constant 0 : index
      %c17_186 = arith.constant 17 : index
      %194 = vector.load %arg5[%c0_184, %c0_185, %c17_186] : memref<4x18x18xf32, #tpu.memory_space<vmem>>, vector<4x18x1xf32>
      tpu.vector_store %arg5[%c0_184, %c0_185, %c17_186], %193 {strides = array<i32>} : memref<4x18x18xf32, #tpu.memory_space<vmem>>, vector<4x18x1xf32>,
      %c0_187 = arith.constant 0 : index
      %c0_188 = arith.constant 0 : index
      %c0_189 = arith.constant 0 : index
      %c0_190 = arith.constant 0 : index
      %195 = vector.load %arg3[%c0_187, %c0_188, %c0_189, %c0_190] : memref<1x4x16x16xf32, #tpu.memory_space<vmem>>, vector<1x4x16x16xf32>
      %196 = vector.shape_cast %195 : vector<1x4x16x16xf32> to vector<4x16x16xf32>
      %c0_191 = arith.constant 0 : index
      %c1_192 = arith.constant 1 : index
      %c1_193 = arith.constant 1 : index
      %197 = vector.load %arg5[%c0_191, %c1_192, %c1_193] : memref<4x18x18xf32, #tpu.memory_space<vmem>>, vector<4x16x16xf32>
      tpu.vector_store %arg5[%c0_191, %c1_192, %c1_193], %196 {strides = array<i32>} : memref<4x18x18xf32, #tpu.memory_space<vmem>>, vector<4x16x16xf32>,
    } else {
    }
    %c8_i32 = arith.constant 8 : i32
    %3 = arith.muli %arg2, %c8_i32 : i32
    %c0_i32_1 = arith.constant 0 : i32
    %4 = arith.addi %3, %c0_i32_1 : i32
    %c2_i32 = arith.constant 2 : i32
    %5 = arith.muli %4, %c2_i32 : i32
    %c0 = arith.constant 0 : index
    %6 = arith.index_cast %5 : i32 to index
    %c0_2 = arith.constant 0 : index
    %7 = vector.load %arg5[%c0, %6, %c0_2] : memref<4x18x18xf32, #tpu.memory_space<vmem>>, vector<4x4x4xf32>
    %c0_3 = arith.constant 0 : index
    %8 = arith.index_cast %5 : i32 to index
    %c2 = arith.constant 2 : index
    %9 = vector.load %arg5[%c0_3, %8, %c2] : memref<4x18x18xf32, #tpu.memory_space<vmem>>, vector<4x4x4xf32>
    %c0_4 = arith.constant 0 : index
    %10 = arith.index_cast %5 : i32 to index
    %c4 = arith.constant 4 : index
    %11 = vector.load %arg5[%c0_4, %10, %c4] : memref<4x18x18xf32, #tpu.memory_space<vmem>>, vector<4x4x4xf32>
    %c0_5 = arith.constant 0 : index
    %12 = arith.index_cast %5 : i32 to index
    %c6 = arith.constant 6 : index
    %13 = vector.load %arg5[%c0_5, %12, %c6] : memref<4x18x18xf32, #tpu.memory_space<vmem>>, vector<4x4x4xf32>
    %c0_6 = arith.constant 0 : index
    %14 = arith.index_cast %5 : i32 to index
    %c8 = arith.constant 8 : index
    %15 = vector.load %arg5[%c0_6, %14, %c8] : memref<4x18x18xf32, #tpu.memory_space<vmem>>, vector<4x4x4xf32>
    %c0_7 = arith.constant 0 : index
    %16 = arith.index_cast %5 : i32 to index
    %c10 = arith.constant 10 : index
    %17 = vector.load %arg5[%c0_7, %16, %c10] : memref<4x18x18xf32, #tpu.memory_space<vmem>>, vector<4x4x4xf32>
    %c0_8 = arith.constant 0 : index
    %18 = arith.index_cast %5 : i32 to index
    %c12 = arith.constant 12 : index
    %19 = vector.load %arg5[%c0_8, %18, %c12] : memref<4x18x18xf32, #tpu.memory_space<vmem>>, vector<4x4x4xf32>
    %c0_9 = arith.constant 0 : index
    %20 = arith.index_cast %5 : i32 to index
    %c14 = arith.constant 14 : index
    %21 = vector.load %arg5[%c0_9, %20, %c14] : memref<4x18x18xf32, #tpu.memory_space<vmem>>, vector<4x4x4xf32>
    %22 = tpu.concatenate %7, %9, %11, %13, %15, %17, %19, %21 in 2 : vector<4x4x4xf32>, vector<4x4x4xf32>, vector<4x4x4xf32>, vector<4x4x4xf32>, vector<4x4x4xf32>, vector<4x4x4xf32>, vector<4x4x4xf32>, vector<4x4x4xf32> -> vector<4x4x32xf32>
    %c0_10 = arith.constant 0 : index
    %c0_11 = arith.constant 0 : index
    %c0_12 = arith.constant 0 : index
    %c0_13 = arith.constant 0 : index
    %c0_14 = arith.constant 0 : index
    %23 = vector.load %arg4[%c0_10, %c0_11, %c0_12, %c0_13, %c0_14] : memref<1x8x4x4x32xf32, #tpu.memory_space<vmem>>, vector<1x1x4x4x32xf32>
    %24 = vector.shape_cast %23 : vector<1x1x4x4x32xf32> to vector<4x4x32xf32>
    %25 = vector.shape_cast %22 : vector<4x4x32xf32> to vector<1x1x4x4x32xf32>
    tpu.vector_store %arg4[%c0_10, %c0_11, %c0_12, %c0_13, %c0_14], %25 {strides = array<i32>} : memref<1x8x4x4x32xf32, #tpu.memory_space<vmem>>, vector<1x1x4x4x32xf32>,
    %c8_i32_15 = arith.constant 8 : i32
    %26 = arith.muli %arg2, %c8_i32_15 : i32
    %c1_i32 = arith.constant 1 : i32
    %27 = arith.addi %26, %c1_i32 : i32
    %c2_i32_16 = arith.constant 2 : i32
    %28 = arith.muli %27, %c2_i32_16 : i32
    %c0_17 = arith.constant 0 : index
    %29 = arith.index_cast %28 : i32 to index
    %c0_18 = arith.constant 0 : index
    %30 = vector.load %arg5[%c0_17, %29, %c0_18] : memref<4x18x18xf32, #tpu.memory_space<vmem>>, vector<4x4x4xf32>
    %c0_19 = arith.constant 0 : index
    %31 = arith.index_cast %28 : i32 to index
    %c2_20 = arith.constant 2 : index
    %32 = vector.load %arg5[%c0_19, %31, %c2_20] : memref<4x18x18xf32, #tpu.memory_space<vmem>>, vector<4x4x4xf32>
    %c0_21 = arith.constant 0 : index
    %33 = arith.index_cast %28 : i32 to index
    %c4_22 = arith.constant 4 : index
    %34 = vector.load %arg5[%c0_21, %33, %c4_22] : memref<4x18x18xf32, #tpu.memory_space<vmem>>, vector<4x4x4xf32>
    %c0_23 = arith.constant 0 : index
    %35 = arith.index_cast %28 : i32 to index
    %c6_24 = arith.constant 6 : index
    %36 = vector.load %arg5[%c0_23, %35, %c6_24] : memref<4x18x18xf32, #tpu.memory_space<vmem>>, vector<4x4x4xf32>
    %c0_25 = arith.constant 0 : index
    %37 = arith.index_cast %28 : i32 to index
    %c8_26 = arith.constant 8 : index
    %38 = vector.load %arg5[%c0_25, %37, %c8_26] : memref<4x18x18xf32, #tpu.memory_space<vmem>>, vector<4x4x4xf32>
    %c0_27 = arith.constant 0 : index
    %39 = arith.index_cast %28 : i32 to index
    %c10_28 = arith.constant 10 : index
    %40 = vector.load %arg5[%c0_27, %39, %c10_28] : memref<4x18x18xf32, #tpu.memory_space<vmem>>, vector<4x4x4xf32>
    %c0_29 = arith.constant 0 : index
    %41 = arith.index_cast %28 : i32 to index
    %c12_30 = arith.constant 12 : index
    %42 = vector.load %arg5[%c0_29, %41, %c12_30] : memref<4x18x18xf32, #tpu.memory_space<vmem>>, vector<4x4x4xf32>
    %c0_31 = arith.constant 0 : index
    %43 = arith.index_cast %28 : i32 to index
    %c14_32 = arith.constant 14 : index
    %44 = vector.load %arg5[%c0_31, %43, %c14_32] : memref<4x18x18xf32, #tpu.memory_space<vmem>>, vector<4x4x4xf32>
    %45 = tpu.concatenate %30, %32, %34, %36, %38, %40, %42, %44 in 2 : vector<4x4x4xf32>, vector<4x4x4xf32>, vector<4x4x4xf32>, vector<4x4x4xf32>, vector<4x4x4xf32>, vector<4x4x4xf32>, vector<4x4x4xf32>, vector<4x4x4xf32> -> vector<4x4x32xf32>
    %c0_33 = arith.constant 0 : index
    %c1 = arith.constant 1 : index
    %c0_34 = arith.constant 0 : index
    %c0_35 = arith.constant 0 : index
    %c0_36 = arith.constant 0 : index
    %46 = vector.load %arg4[%c0_33, %c1, %c0_34, %c0_35, %c0_36] : memref<1x8x4x4x32xf32, #tpu.memory_space<vmem>>, vector<1x1x4x4x32xf32>
    %47 = vector.shape_cast %46 : vector<1x1x4x4x32xf32> to vector<4x4x32xf32>
    %48 = vector.shape_cast %45 : vector<4x4x32xf32> to vector<1x1x4x4x32xf32>
    tpu.vector_store %arg4[%c0_33, %c1, %c0_34, %c0_35, %c0_36], %48 {strides = array<i32>} : memref<1x8x4x4x32xf32, #tpu.memory_space<vmem>>, vector<1x1x4x4x32xf32>,
    %c8_i32_37 = arith.constant 8 : i32
    %49 = arith.muli %arg2, %c8_i32_37 : i32
    %c2_i32_38 = arith.constant 2 : i32
    %50 = arith.addi %49, %c2_i32_38 : i32
    %c2_i32_39 = arith.constant 2 : i32
    %51 = arith.muli %50, %c2_i32_39 : i32
    %c0_40 = arith.constant 0 : index
    %52 = arith.index_cast %51 : i32 to index
    %c0_41 = arith.constant 0 : index
    %53 = vector.load %arg5[%c0_40, %52, %c0_41] : memref<4x18x18xf32, #tpu.memory_space<vmem>>, vector<4x4x4xf32>
    %c0_42 = arith.constant 0 : index
    %54 = arith.index_cast %51 : i32 to index
    %c2_43 = arith.constant 2 : index
    %55 = vector.load %arg5[%c0_42, %54, %c2_43] : memref<4x18x18xf32, #tpu.memory_space<vmem>>, vector<4x4x4xf32>
    %c0_44 = arith.constant 0 : index
    %56 = arith.index_cast %51 : i32 to index
    %c4_45 = arith.constant 4 : index
    %57 = vector.load %arg5[%c0_44, %56, %c4_45] : memref<4x18x18xf32, #tpu.memory_space<vmem>>, vector<4x4x4xf32>
    %c0_46 = arith.constant 0 : index
    %58 = arith.index_cast %51 : i32 to index
    %c6_47 = arith.constant 6 : index
    %59 = vector.load %arg5[%c0_46, %58, %c6_47] : memref<4x18x18xf32, #tpu.memory_space<vmem>>, vector<4x4x4xf32>
    %c0_48 = arith.constant 0 : index
    %60 = arith.index_cast %51 : i32 to index
    %c8_49 = arith.constant 8 : index
    %61 = vector.load %arg5[%c0_48, %60, %c8_49] : memref<4x18x18xf32, #tpu.memory_space<vmem>>, vector<4x4x4xf32>
    %c0_50 = arith.constant 0 : index
    %62 = arith.index_cast %51 : i32 to index
    %c10_51 = arith.constant 10 : index
    %63 = vector.load %arg5[%c0_50, %62, %c10_51] : memref<4x18x18xf32, #tpu.memory_space<vmem>>, vector<4x4x4xf32>
    %c0_52 = arith.constant 0 : index
    %64 = arith.index_cast %51 : i32 to index
    %c12_53 = arith.constant 12 : index
    %65 = vector.load %arg5[%c0_52, %64, %c12_53] : memref<4x18x18xf32, #tpu.memory_space<vmem>>, vector<4x4x4xf32>
    %c0_54 = arith.constant 0 : index
    %66 = arith.index_cast %51 : i32 to index
    %c14_55 = arith.constant 14 : index
    %67 = vector.load %arg5[%c0_54, %66, %c14_55] : memref<4x18x18xf32, #tpu.memory_space<vmem>>, vector<4x4x4xf32>
    %68 = tpu.concatenate %53, %55, %57, %59, %61, %63, %65, %67 in 2 : vector<4x4x4xf32>, vector<4x4x4xf32>, vector<4x4x4xf32>, vector<4x4x4xf32>, vector<4x4x4xf32>, vector<4x4x4xf32>, vector<4x4x4xf32>, vector<4x4x4xf32> -> vector<4x4x32xf32>
    %c0_56 = arith.constant 0 : index
    %c2_57 = arith.constant 2 : index
    %c0_58 = arith.constant 0 : index
    %c0_59 = arith.constant 0 : index
    %c0_60 = arith.constant 0 : index
    %69 = vector.load %arg4[%c0_56, %c2_57, %c0_58, %c0_59, %c0_60] : memref<1x8x4x4x32xf32, #tpu.memory_space<vmem>>, vector<1x1x4x4x32xf32>
    %70 = vector.shape_cast %69 : vector<1x1x4x4x32xf32> to vector<4x4x32xf32>
    %71 = vector.shape_cast %68 : vector<4x4x32xf32> to vector<1x1x4x4x32xf32>
    tpu.vector_store %arg4[%c0_56, %c2_57, %c0_58, %c0_59, %c0_60], %71 {strides = array<i32>} : memref<1x8x4x4x32xf32, #tpu.memory_space<vmem>>, vector<1x1x4x4x32xf32>,
    %c8_i32_61 = arith.constant 8 : i32
    %72 = arith.muli %arg2, %c8_i32_61 : i32
    %c3_i32 = arith.constant 3 : i32
    %73 = arith.addi %72, %c3_i32 : i32
    %c2_i32_62 = arith.constant 2 : i32
    %74 = arith.muli %73, %c2_i32_62 : i32
    %c0_63 = arith.constant 0 : index
    %75 = arith.index_cast %74 : i32 to index
    %c0_64 = arith.constant 0 : index
    %76 = vector.load %arg5[%c0_63, %75, %c0_64] : memref<4x18x18xf32, #tpu.memory_space<vmem>>, vector<4x4x4xf32>
    %c0_65 = arith.constant 0 : index
    %77 = arith.index_cast %74 : i32 to index
    %c2_66 = arith.constant 2 : index
    %78 = vector.load %arg5[%c0_65, %77, %c2_66] : memref<4x18x18xf32, #tpu.memory_space<vmem>>, vector<4x4x4xf32>
    %c0_67 = arith.constant 0 : index
    %79 = arith.index_cast %74 : i32 to index
    %c4_68 = arith.constant 4 : index
    %80 = vector.load %arg5[%c0_67, %79, %c4_68] : memref<4x18x18xf32, #tpu.memory_space<vmem>>, vector<4x4x4xf32>
    %c0_69 = arith.constant 0 : index
    %81 = arith.index_cast %74 : i32 to index
    %c6_70 = arith.constant 6 : index
    %82 = vector.load %arg5[%c0_69, %81, %c6_70] : memref<4x18x18xf32, #tpu.memory_space<vmem>>, vector<4x4x4xf32>
    %c0_71 = arith.constant 0 : index
    %83 = arith.index_cast %74 : i32 to index
    %c8_72 = arith.constant 8 : index
    %84 = vector.load %arg5[%c0_71, %83, %c8_72] : memref<4x18x18xf32, #tpu.memory_space<vmem>>, vector<4x4x4xf32>
    %c0_73 = arith.constant 0 : index
    %85 = arith.index_cast %74 : i32 to index
    %c10_74 = arith.constant 10 : index
    %86 = vector.load %arg5[%c0_73, %85, %c10_74] : memref<4x18x18xf32, #tpu.memory_space<vmem>>, vector<4x4x4xf32>
    %c0_75 = arith.constant 0 : index
    %87 = arith.index_cast %74 : i32 to index
    %c12_76 = arith.constant 12 : index
    %88 = vector.load %arg5[%c0_75, %87, %c12_76] : memref<4x18x18xf32, #tpu.memory_space<vmem>>, vector<4x4x4xf32>
    %c0_77 = arith.constant 0 : index
    %89 = arith.index_cast %74 : i32 to index
    %c14_78 = arith.constant 14 : index
    %90 = vector.load %arg5[%c0_77, %89, %c14_78] : memref<4x18x18xf32, #tpu.memory_space<vmem>>, vector<4x4x4xf32>
    %91 = tpu.concatenate %76, %78, %80, %82, %84, %86, %88, %90 in 2 : vector<4x4x4xf32>, vector<4x4x4xf32>, vector<4x4x4xf32>, vector<4x4x4xf32>, vector<4x4x4xf32>, vector<4x4x4xf32>, vector<4x4x4xf32>, vector<4x4x4xf32> -> vector<4x4x32xf32>
    %c0_79 = arith.constant 0 : index
    %c3 = arith.constant 3 : index
    %c0_80 = arith.constant 0 : index
    %c0_81 = arith.constant 0 : index
    %c0_82 = arith.constant 0 : index
    %92 = vector.load %arg4[%c0_79, %c3, %c0_80, %c0_81, %c0_82] : memref<1x8x4x4x32xf32, #tpu.memory_space<vmem>>, vector<1x1x4x4x32xf32>
    %93 = vector.shape_cast %92 : vector<1x1x4x4x32xf32> to vector<4x4x32xf32>
    %94 = vector.shape_cast %91 : vector<4x4x32xf32> to vector<1x1x4x4x32xf32>
    tpu.vector_store %arg4[%c0_79, %c3, %c0_80, %c0_81, %c0_82], %94 {strides = array<i32>} : memref<1x8x4x4x32xf32, #tpu.memory_space<vmem>>, vector<1x1x4x4x32xf32>,
    %c8_i32_83 = arith.constant 8 : i32
    %95 = arith.muli %arg2, %c8_i32_83 : i32
    %c4_i32 = arith.constant 4 : i32
    %96 = arith.addi %95, %c4_i32 : i32
    %c2_i32_84 = arith.constant 2 : i32
    %97 = arith.muli %96, %c2_i32_84 : i32
    %c0_85 = arith.constant 0 : index
    %98 = arith.index_cast %97 : i32 to index
    %c0_86 = arith.constant 0 : index
    %99 = vector.load %arg5[%c0_85, %98, %c0_86] : memref<4x18x18xf32, #tpu.memory_space<vmem>>, vector<4x4x4xf32>
    %c0_87 = arith.constant 0 : index
    %100 = arith.index_cast %97 : i32 to index
    %c2_88 = arith.constant 2 : index
    %101 = vector.load %arg5[%c0_87, %100, %c2_88] : memref<4x18x18xf32, #tpu.memory_space<vmem>>, vector<4x4x4xf32>
    %c0_89 = arith.constant 0 : index
    %102 = arith.index_cast %97 : i32 to index
    %c4_90 = arith.constant 4 : index
    %103 = vector.load %arg5[%c0_89, %102, %c4_90] : memref<4x18x18xf32, #tpu.memory_space<vmem>>, vector<4x4x4xf32>
    %c0_91 = arith.constant 0 : index
    %104 = arith.index_cast %97 : i32 to index
    %c6_92 = arith.constant 6 : index
    %105 = vector.load %arg5[%c0_91, %104, %c6_92] : memref<4x18x18xf32, #tpu.memory_space<vmem>>, vector<4x4x4xf32>
    %c0_93 = arith.constant 0 : index
    %106 = arith.index_cast %97 : i32 to index
    %c8_94 = arith.constant 8 : index
    %107 = vector.load %arg5[%c0_93, %106, %c8_94] : memref<4x18x18xf32, #tpu.memory_space<vmem>>, vector<4x4x4xf32>
    %c0_95 = arith.constant 0 : index
    %108 = arith.index_cast %97 : i32 to index
    %c10_96 = arith.constant 10 : index
    %109 = vector.load %arg5[%c0_95, %108, %c10_96] : memref<4x18x18xf32, #tpu.memory_space<vmem>>, vector<4x4x4xf32>
    %c0_97 = arith.constant 0 : index
    %110 = arith.index_cast %97 : i32 to index
    %c12_98 = arith.constant 12 : index
    %111 = vector.load %arg5[%c0_97, %110, %c12_98] : memref<4x18x18xf32, #tpu.memory_space<vmem>>, vector<4x4x4xf32>
    %c0_99 = arith.constant 0 : index
    %112 = arith.index_cast %97 : i32 to index
    %c14_100 = arith.constant 14 : index
    %113 = vector.load %arg5[%c0_99, %112, %c14_100] : memref<4x18x18xf32, #tpu.memory_space<vmem>>, vector<4x4x4xf32>
    %114 = tpu.concatenate %99, %101, %103, %105, %107, %109, %111, %113 in 2 : vector<4x4x4xf32>, vector<4x4x4xf32>, vector<4x4x4xf32>, vector<4x4x4xf32>, vector<4x4x4xf32>, vector<4x4x4xf32>, vector<4x4x4xf32>, vector<4x4x4xf32> -> vector<4x4x32xf32>
    %c0_101 = arith.constant 0 : index
    %c4_102 = arith.constant 4 : index
    %c0_103 = arith.constant 0 : index
    %c0_104 = arith.constant 0 : index
    %c0_105 = arith.constant 0 : index
    %115 = vector.load %arg4[%c0_101, %c4_102, %c0_103, %c0_104, %c0_105] : memref<1x8x4x4x32xf32, #tpu.memory_space<vmem>>, vector<1x1x4x4x32xf32>
    %116 = vector.shape_cast %115 : vector<1x1x4x4x32xf32> to vector<4x4x32xf32>
    %117 = vector.shape_cast %114 : vector<4x4x32xf32> to vector<1x1x4x4x32xf32>
    tpu.vector_store %arg4[%c0_101, %c4_102, %c0_103, %c0_104, %c0_105], %117 {strides = array<i32>} : memref<1x8x4x4x32xf32, #tpu.memory_space<vmem>>, vector<1x1x4x4x32xf32>,
    %c8_i32_106 = arith.constant 8 : i32
    %118 = arith.muli %arg2, %c8_i32_106 : i32
    %c5_i32 = arith.constant 5 : i32
    %119 = arith.addi %118, %c5_i32 : i32
    %c2_i32_107 = arith.constant 2 : i32
    %120 = arith.muli %119, %c2_i32_107 : i32
    %c0_108 = arith.constant 0 : index
    %121 = arith.index_cast %120 : i32 to index
    %c0_109 = arith.constant 0 : index
    %122 = vector.load %arg5[%c0_108, %121, %c0_109] : memref<4x18x18xf32, #tpu.memory_space<vmem>>, vector<4x4x4xf32>
    %c0_110 = arith.constant 0 : index
    %123 = arith.index_cast %120 : i32 to index
    %c2_111 = arith.constant 2 : index
    %124 = vector.load %arg5[%c0_110, %123, %c2_111] : memref<4x18x18xf32, #tpu.memory_space<vmem>>, vector<4x4x4xf32>
    %c0_112 = arith.constant 0 : index
    %125 = arith.index_cast %120 : i32 to index
    %c4_113 = arith.constant 4 : index
    %126 = vector.load %arg5[%c0_112, %125, %c4_113] : memref<4x18x18xf32, #tpu.memory_space<vmem>>, vector<4x4x4xf32>
    %c0_114 = arith.constant 0 : index
    %127 = arith.index_cast %120 : i32 to index
    %c6_115 = arith.constant 6 : index
    %128 = vector.load %arg5[%c0_114, %127, %c6_115] : memref<4x18x18xf32, #tpu.memory_space<vmem>>, vector<4x4x4xf32>
    %c0_116 = arith.constant 0 : index
    %129 = arith.index_cast %120 : i32 to index
    %c8_117 = arith.constant 8 : index
    %130 = vector.load %arg5[%c0_116, %129, %c8_117] : memref<4x18x18xf32, #tpu.memory_space<vmem>>, vector<4x4x4xf32>
    %c0_118 = arith.constant 0 : index
    %131 = arith.index_cast %120 : i32 to index
    %c10_119 = arith.constant 10 : index
    %132 = vector.load %arg5[%c0_118, %131, %c10_119] : memref<4x18x18xf32, #tpu.memory_space<vmem>>, vector<4x4x4xf32>
    %c0_120 = arith.constant 0 : index
    %133 = arith.index_cast %120 : i32 to index
    %c12_121 = arith.constant 12 : index
    %134 = vector.load %arg5[%c0_120, %133, %c12_121] : memref<4x18x18xf32, #tpu.memory_space<vmem>>, vector<4x4x4xf32>
    %c0_122 = arith.constant 0 : index
    %135 = arith.index_cast %120 : i32 to index
    %c14_123 = arith.constant 14 : index
    %136 = vector.load %arg5[%c0_122, %135, %c14_123] : memref<4x18x18xf32, #tpu.memory_space<vmem>>, vector<4x4x4xf32>
    %137 = tpu.concatenate %122, %124, %126, %128, %130, %132, %134, %136 in 2 : vector<4x4x4xf32>, vector<4x4x4xf32>, vector<4x4x4xf32>, vector<4x4x4xf32>, vector<4x4x4xf32>, vector<4x4x4xf32>, vector<4x4x4xf32>, vector<4x4x4xf32> -> vector<4x4x32xf32>
    %c0_124 = arith.constant 0 : index
    %c5 = arith.constant 5 : index
    %c0_125 = arith.constant 0 : index
    %c0_126 = arith.constant 0 : index
    %c0_127 = arith.constant 0 : index
    %138 = vector.load %arg4[%c0_124, %c5, %c0_125, %c0_126, %c0_127] : memref<1x8x4x4x32xf32, #tpu.memory_space<vmem>>, vector<1x1x4x4x32xf32>
    %139 = vector.shape_cast %138 : vector<1x1x4x4x32xf32> to vector<4x4x32xf32>
    %140 = vector.shape_cast %137 : vector<4x4x32xf32> to vector<1x1x4x4x32xf32>
    tpu.vector_store %arg4[%c0_124, %c5, %c0_125, %c0_126, %c0_127], %140 {strides = array<i32>} : memref<1x8x4x4x32xf32, #tpu.memory_space<vmem>>, vector<1x1x4x4x32xf32>,
    %c8_i32_128 = arith.constant 8 : i32
    %141 = arith.muli %arg2, %c8_i32_128 : i32
    %c6_i32 = arith.constant 6 : i32
    %142 = arith.addi %141, %c6_i32 : i32
    %c2_i32_129 = arith.constant 2 : i32
    %143 = arith.muli %142, %c2_i32_129 : i32
    %c0_130 = arith.constant 0 : index
    %144 = arith.index_cast %143 : i32 to index
    %c0_131 = arith.constant 0 : index
    %145 = vector.load %arg5[%c0_130, %144, %c0_131] : memref<4x18x18xf32, #tpu.memory_space<vmem>>, vector<4x4x4xf32>
    %c0_132 = arith.constant 0 : index
    %146 = arith.index_cast %143 : i32 to index
    %c2_133 = arith.constant 2 : index
    %147 = vector.load %arg5[%c0_132, %146, %c2_133] : memref<4x18x18xf32, #tpu.memory_space<vmem>>, vector<4x4x4xf32>
    %c0_134 = arith.constant 0 : index
    %148 = arith.index_cast %143 : i32 to index
    %c4_135 = arith.constant 4 : index
    %149 = vector.load %arg5[%c0_134, %148, %c4_135] : memref<4x18x18xf32, #tpu.memory_space<vmem>>, vector<4x4x4xf32>
    %c0_136 = arith.constant 0 : index
    %150 = arith.index_cast %143 : i32 to index
    %c6_137 = arith.constant 6 : index
    %151 = vector.load %arg5[%c0_136, %150, %c6_137] : memref<4x18x18xf32, #tpu.memory_space<vmem>>, vector<4x4x4xf32>
    %c0_138 = arith.constant 0 : index
    %152 = arith.index_cast %143 : i32 to index
    %c8_139 = arith.constant 8 : index
    %153 = vector.load %arg5[%c0_138, %152, %c8_139] : memref<4x18x18xf32, #tpu.memory_space<vmem>>, vector<4x4x4xf32>
    %c0_140 = arith.constant 0 : index
    %154 = arith.index_cast %143 : i32 to index
    %c10_141 = arith.constant 10 : index
    %155 = vector.load %arg5[%c0_140, %154, %c10_141] : memref<4x18x18xf32, #tpu.memory_space<vmem>>, vector<4x4x4xf32>
    %c0_142 = arith.constant 0 : index
    %156 = arith.index_cast %143 : i32 to index
    %c12_143 = arith.constant 12 : index
    %157 = vector.load %arg5[%c0_142, %156, %c12_143] : memref<4x18x18xf32, #tpu.memory_space<vmem>>, vector<4x4x4xf32>
    %c0_144 = arith.constant 0 : index
    %158 = arith.index_cast %143 : i32 to index
    %c14_145 = arith.constant 14 : index
    %159 = vector.load %arg5[%c0_144, %158, %c14_145] : memref<4x18x18xf32, #tpu.memory_space<vmem>>, vector<4x4x4xf32>
    %160 = tpu.concatenate %145, %147, %149, %151, %153, %155, %157, %159 in 2 : vector<4x4x4xf32>, vector<4x4x4xf32>, vector<4x4x4xf32>, vector<4x4x4xf32>, vector<4x4x4xf32>, vector<4x4x4xf32>, vector<4x4x4xf32>, vector<4x4x4xf32> -> vector<4x4x32xf32>
    %c0_146 = arith.constant 0 : index
    %c6_147 = arith.constant 6 : index
    %c0_148 = arith.constant 0 : index
    %c0_149 = arith.constant 0 : index
    %c0_150 = arith.constant 0 : index
    %161 = vector.load %arg4[%c0_146, %c6_147, %c0_148, %c0_149, %c0_150] : memref<1x8x4x4x32xf32, #tpu.memory_space<vmem>>, vector<1x1x4x4x32xf32>
    %162 = vector.shape_cast %161 : vector<1x1x4x4x32xf32> to vector<4x4x32xf32>
    %163 = vector.shape_cast %160 : vector<4x4x32xf32> to vector<1x1x4x4x32xf32>
    tpu.vector_store %arg4[%c0_146, %c6_147, %c0_148, %c0_149, %c0_150], %163 {strides = array<i32>} : memref<1x8x4x4x32xf32, #tpu.memory_space<vmem>>, vector<1x1x4x4x32xf32>,
    %c8_i32_151 = arith.constant 8 : i32
    %164 = arith.muli %arg2, %c8_i32_151 : i32
    %c7_i32 = arith.constant 7 : i32
    %165 = arith.addi %164, %c7_i32 : i32
    %c2_i32_152 = arith.constant 2 : i32
    %166 = arith.muli %165, %c2_i32_152 : i32
    %c0_153 = arith.constant 0 : index
    %167 = arith.index_cast %166 : i32 to index
    %c0_154 = arith.constant 0 : index
    %168 = vector.load %arg5[%c0_153, %167, %c0_154] : memref<4x18x18xf32, #tpu.memory_space<vmem>>, vector<4x4x4xf32>
    %c0_155 = arith.constant 0 : index
    %169 = arith.index_cast %166 : i32 to index
    %c2_156 = arith.constant 2 : index
    %170 = vector.load %arg5[%c0_155, %169, %c2_156] : memref<4x18x18xf32, #tpu.memory_space<vmem>>, vector<4x4x4xf32>
    %c0_157 = arith.constant 0 : index
    %171 = arith.index_cast %166 : i32 to index
    %c4_158 = arith.constant 4 : index
    %172 = vector.load %arg5[%c0_157, %171, %c4_158] : memref<4x18x18xf32, #tpu.memory_space<vmem>>, vector<4x4x4xf32>
    %c0_159 = arith.constant 0 : index
    %173 = arith.index_cast %166 : i32 to index
    %c6_160 = arith.constant 6 : index
    %174 = vector.load %arg5[%c0_159, %173, %c6_160] : memref<4x18x18xf32, #tpu.memory_space<vmem>>, vector<4x4x4xf32>
    %c0_161 = arith.constant 0 : index
    %175 = arith.index_cast %166 : i32 to index
    %c8_162 = arith.constant 8 : index
    %176 = vector.load %arg5[%c0_161, %175, %c8_162] : memref<4x18x18xf32, #tpu.memory_space<vmem>>, vector<4x4x4xf32>
    %c0_163 = arith.constant 0 : index
    %177 = arith.index_cast %166 : i32 to index
    %c10_164 = arith.constant 10 : index
    %178 = vector.load %arg5[%c0_163, %177, %c10_164] : memref<4x18x18xf32, #tpu.memory_space<vmem>>, vector<4x4x4xf32>
    %c0_165 = arith.constant 0 : index
    %179 = arith.index_cast %166 : i32 to index
    %c12_166 = arith.constant 12 : index
    %180 = vector.load %arg5[%c0_165, %179, %c12_166] : memref<4x18x18xf32, #tpu.memory_space<vmem>>, vector<4x4x4xf32>
    %c0_167 = arith.constant 0 : index
    %181 = arith.index_cast %166 : i32 to index
    %c14_168 = arith.constant 14 : index
    %182 = vector.load %arg5[%c0_167, %181, %c14_168] : memref<4x18x18xf32, #tpu.memory_space<vmem>>, vector<4x4x4xf32>
    %183 = tpu.concatenate %168, %170, %172, %174, %176, %178, %180, %182 in 2 : vector<4x4x4xf32>, vector<4x4x4xf32>, vector<4x4x4xf32>, vector<4x4x4xf32>, vector<4x4x4xf32>, vector<4x4x4xf32>, vector<4x4x4xf32>, vector<4x4x4xf32> -> vector<4x4x32xf32>
    %c0_169 = arith.constant 0 : index
    %c7 = arith.constant 7 : index
    %c0_170 = arith.constant 0 : index
    %c0_171 = arith.constant 0 : index
    %c0_172 = arith.constant 0 : index
    %184 = vector.load %arg4[%c0_169, %c7, %c0_170, %c0_171, %c0_172] : memref<1x8x4x4x32xf32, #tpu.memory_space<vmem>>, vector<1x1x4x4x32xf32>
    %185 = vector.shape_cast %184 : vector<1x1x4x4x32xf32> to vector<4x4x32xf32>
    %186 = vector.shape_cast %183 : vector<4x4x32xf32> to vector<1x1x4x4x32xf32>
    tpu.vector_store %arg4[%c0_169, %c7, %c0_170, %c0_171, %c0_172], %186 {strides = array<i32>} : memref<1x8x4x4x32xf32, #tpu.memory_space<vmem>>, vector<1x1x4x4x32xf32>,
    return
  }
  func.func @transform_0(%arg0: i32, %arg1: i32, %arg2: i32) -> (i32, i32, i32, i32) {
    %c0_i32 = arith.constant 0 : i32
    %c0_i32_0 = arith.constant 0 : i32
    %c0_i32_1 = arith.constant 0 : i32
    return %arg0, %arg1, %c0_i32, %c0_i32_0 : i32, i32, i32, i32
  }
  func.func @transform_1(%arg0: i32, %arg1: i32, %arg2: i32) -> (i32, i32, i32, i32, i32) {
    %c0_i32 = arith.constant 0 : i32
    %c0_i32_0 = arith.constant 0 : i32
    %c0_i32_1 = arith.constant 0 : i32
    return %arg0, %arg2, %arg1, %c0_i32, %c0_i32_0 : i32, i32, i32, i32, i32
  }
}

module attributes {stable_mosaic.version = 11 : i64} {
  func.func @_patch_kernel(%arg0: i32, %arg1: i32, %arg2: i32, %arg3: memref<1x4x16x16xf32, #tpu.memory_space<vmem>>, %arg4: memref<1x8x4x4x32xf32, #tpu.memory_space<vmem>>, %arg5: memref<4x18x18xf32, #tpu.memory_space<vmem>>) attributes {dimension_semantics = [#tpu.dimension_semantics<parallel>, #tpu.dimension_semantics<parallel>, #tpu.dimension_semantics<arbitrary>], iteration_bounds = array<i64: 2, 1, 1>, scalar_prefetch = 0 : i64, scratch_operands = 1 : i64, tpu.core_type = #tpu.core_type<tc>, window_params = [{transform_indices = @transform_0, window_bounds = array<i64: 1, 4, 16, 16>}, {transform_indices = @transform_1, window_bounds = array<i64: 1, 8, 4, 4, 32>}]} {
    %c0_i32 = arith.constant 0 : i32
    %0 = arith.cmpi eq, %arg2, %c0_i32 : i32
    %1 = arith.extui %0 : i1 to i32
    %c0_i32_0 = arith.constant 0 : i32
    %2 = arith.cmpi ne, %1, %c0_i32_0 : i32
    scf.if %2 {
      %cst = arith.constant 0.000000e+00 : f32
      %347 = vector.broadcast %cst : f32 to vector<4x1x18xf32>
      %c0_449 = arith.constant 0 : index
      %c0_450 = arith.constant 0 : index
      %c0_451 = arith.constant 0 : index
      %348 = vector.load %arg5[%c0_449, %c0_450, %c0_451] : memref<4x18x18xf32, #tpu.memory_space<vmem>>, vector<4x1x18xf32>
      tpu.vector_store %arg5[%c0_449, %c0_450, %c0_451], %347 {strides = array<i32>} : memref<4x18x18xf32, #tpu.memory_space<vmem>>, vector<4x1x18xf32>,
      %cst_452 = arith.constant 0.000000e+00 : f32
      %349 = vector.broadcast %cst_452 : f32 to vector<4x1x18xf32>
      %c0_453 = arith.constant 0 : index
      %c17 = arith.constant 17 : index
      %c0_454 = arith.constant 0 : index
      %350 = vector.load %arg5[%c0_453, %c17, %c0_454] : memref<4x18x18xf32, #tpu.memory_space<vmem>>, vector<4x1x18xf32>
      tpu.vector_store %arg5[%c0_453, %c17, %c0_454], %349 {strides = array<i32>} : memref<4x18x18xf32, #tpu.memory_space<vmem>>, vector<4x1x18xf32>,
      %cst_455 = arith.constant 0.000000e+00 : f32
      %351 = vector.broadcast %cst_455 : f32 to vector<4x18x1xf32>
      %c0_456 = arith.constant 0 : index
      %c0_457 = arith.constant 0 : index
      %c0_458 = arith.constant 0 : index
      %352 = vector.load %arg5[%c0_456, %c0_457, %c0_458] : memref<4x18x18xf32, #tpu.memory_space<vmem>>, vector<4x18x1xf32>
      tpu.vector_store %arg5[%c0_456, %c0_457, %c0_458], %351 {strides = array<i32>} : memref<4x18x18xf32, #tpu.memory_space<vmem>>, vector<4x18x1xf32>,
      %cst_459 = arith.constant 0.000000e+00 : f32
      %353 = vector.broadcast %cst_459 : f32 to vector<4x18x1xf32>
      %c0_460 = arith.constant 0 : index
      %c0_461 = arith.constant 0 : index
      %c17_462 = arith.constant 17 : index
      %354 = vector.load %arg5[%c0_460, %c0_461, %c17_462] : memref<4x18x18xf32, #tpu.memory_space<vmem>>, vector<4x18x1xf32>
      tpu.vector_store %arg5[%c0_460, %c0_461, %c17_462], %353 {strides = array<i32>} : memref<4x18x18xf32, #tpu.memory_space<vmem>>, vector<4x18x1xf32>,
      %c0_463 = arith.constant 0 : index
      %c0_464 = arith.constant 0 : index
      %c0_465 = arith.constant 0 : index
      %c0_466 = arith.constant 0 : index
      %355 = vector.load %arg3[%c0_463, %c0_464, %c0_465, %c0_466] : memref<1x4x16x16xf32, #tpu.memory_space<vmem>>, vector<1x4x16x16xf32>
      %356 = vector.shape_cast %355 : vector<1x4x16x16xf32> to vector<4x16x16xf32>
      %c0_467 = arith.constant 0 : index
      %c1_468 = arith.constant 1 : index
      %c1_469 = arith.constant 1 : index
      %357 = vector.load %arg5[%c0_467, %c1_468, %c1_469] : memref<4x18x18xf32, #tpu.memory_space<vmem>>, vector<4x16x16xf32>
      tpu.vector_store %arg5[%c0_467, %c1_468, %c1_469], %356 {strides = array<i32>} : memref<4x18x18xf32, #tpu.memory_space<vmem>>, vector<4x16x16xf32>,
    } else {
    }
    %c8_i32 = arith.constant 8 : i32
    %3 = arith.muli %arg2, %c8_i32 : i32
    %c0_i32_1 = arith.constant 0 : i32
    %4 = arith.addi %3, %c0_i32_1 : i32
    %c2_i32 = arith.constant 2 : i32
    %5 = arith.muli %4, %c2_i32 : i32
    %c0 = arith.constant 0 : index
    %6 = arith.index_cast %5 : i32 to index
    %c0_2 = arith.constant 0 : index
    %7 = vector.load %arg5[%c0, %6, %c0_2] : memref<4x18x18xf32, #tpu.memory_space<vmem>>, vector<4x4x4xf32>
    %c0_3 = arith.constant 0 : index
    %c0_4 = arith.constant 0 : index
    %c0_5 = arith.constant 0 : index
    %c0_6 = arith.constant 0 : index
    %c0_7 = arith.constant 0 : index
    %8 = vector.load %arg4[%c0_3, %c0_4, %c0_5, %c0_6, %c0_7] : memref<1x8x4x4x32xf32, #tpu.memory_space<vmem>>, vector<1x1x4x4x4xf32>
    %9 = vector.shape_cast %8 : vector<1x1x4x4x4xf32> to vector<4x4x4xf32>
    %10 = vector.shape_cast %7 : vector<4x4x4xf32> to vector<1x1x4x4x4xf32>
    tpu.vector_store %arg4[%c0_3, %c0_4, %c0_5, %c0_6, %c0_7], %10 {strides = array<i32>} : memref<1x8x4x4x32xf32, #tpu.memory_space<vmem>>, vector<1x1x4x4x4xf32>,
    %c0_8 = arith.constant 0 : index
    %11 = arith.index_cast %5 : i32 to index
    %c2 = arith.constant 2 : index
    %12 = vector.load %arg5[%c0_8, %11, %c2] : memref<4x18x18xf32, #tpu.memory_space<vmem>>, vector<4x4x4xf32>
    %c0_9 = arith.constant 0 : index
    %c0_10 = arith.constant 0 : index
    %c0_11 = arith.constant 0 : index
    %c0_12 = arith.constant 0 : index
    %c4 = arith.constant 4 : index
    %13 = vector.load %arg4[%c0_9, %c0_10, %c0_11, %c0_12, %c4] : memref<1x8x4x4x32xf32, #tpu.memory_space<vmem>>, vector<1x1x4x4x4xf32>
    %14 = vector.shape_cast %13 : vector<1x1x4x4x4xf32> to vector<4x4x4xf32>
    %15 = vector.shape_cast %12 : vector<4x4x4xf32> to vector<1x1x4x4x4xf32>
    tpu.vector_store %arg4[%c0_9, %c0_10, %c0_11, %c0_12, %c4], %15 {strides = array<i32>} : memref<1x8x4x4x32xf32, #tpu.memory_space<vmem>>, vector<1x1x4x4x4xf32>,
    %c0_13 = arith.constant 0 : index
    %16 = arith.index_cast %5 : i32 to index
    %c4_14 = arith.constant 4 : index
    %17 = vector.load %arg5[%c0_13, %16, %c4_14] : memref<4x18x18xf32, #tpu.memory_space<vmem>>, vector<4x4x4xf32>
    %c0_15 = arith.constant 0 : index
    %c0_16 = arith.constant 0 : index
    %c0_17 = arith.constant 0 : index
    %c0_18 = arith.constant 0 : index
    %c8 = arith.constant 8 : index
    %18 = vector.load %arg4[%c0_15, %c0_16, %c0_17, %c0_18, %c8] : memref<1x8x4x4x32xf32, #tpu.memory_space<vmem>>, vector<1x1x4x4x4xf32>
    %19 = vector.shape_cast %18 : vector<1x1x4x4x4xf32> to vector<4x4x4xf32>
    %20 = vector.shape_cast %17 : vector<4x4x4xf32> to vector<1x1x4x4x4xf32>
    tpu.vector_store %arg4[%c0_15, %c0_16, %c0_17, %c0_18, %c8], %20 {strides = array<i32>} : memref<1x8x4x4x32xf32, #tpu.memory_space<vmem>>, vector<1x1x4x4x4xf32>,
    %c0_19 = arith.constant 0 : index
    %21 = arith.index_cast %5 : i32 to index
    %c6 = arith.constant 6 : index
    %22 = vector.load %arg5[%c0_19, %21, %c6] : memref<4x18x18xf32, #tpu.memory_space<vmem>>, vector<4x4x4xf32>
    %c0_20 = arith.constant 0 : index
    %c0_21 = arith.constant 0 : index
    %c0_22 = arith.constant 0 : index
    %c0_23 = arith.constant 0 : index
    %c12 = arith.constant 12 : index
    %23 = vector.load %arg4[%c0_20, %c0_21, %c0_22, %c0_23, %c12] : memref<1x8x4x4x32xf32, #tpu.memory_space<vmem>>, vector<1x1x4x4x4xf32>
    %24 = vector.shape_cast %23 : vector<1x1x4x4x4xf32> to vector<4x4x4xf32>
    %25 = vector.shape_cast %22 : vector<4x4x4xf32> to vector<1x1x4x4x4xf32>
    tpu.vector_store %arg4[%c0_20, %c0_21, %c0_22, %c0_23, %c12], %25 {strides = array<i32>} : memref<1x8x4x4x32xf32, #tpu.memory_space<vmem>>, vector<1x1x4x4x4xf32>,
    %c0_24 = arith.constant 0 : index
    %26 = arith.index_cast %5 : i32 to index
    %c8_25 = arith.constant 8 : index
    %27 = vector.load %arg5[%c0_24, %26, %c8_25] : memref<4x18x18xf32, #tpu.memory_space<vmem>>, vector<4x4x4xf32>
    %c0_26 = arith.constant 0 : index
    %c0_27 = arith.constant 0 : index
    %c0_28 = arith.constant 0 : index
    %c0_29 = arith.constant 0 : index
    %c16 = arith.constant 16 : index
    %28 = vector.load %arg4[%c0_26, %c0_27, %c0_28, %c0_29, %c16] : memref<1x8x4x4x32xf32, #tpu.memory_space<vmem>>, vector<1x1x4x4x4xf32>
    %29 = vector.shape_cast %28 : vector<1x1x4x4x4xf32> to vector<4x4x4xf32>
    %30 = vector.shape_cast %27 : vector<4x4x4xf32> to vector<1x1x4x4x4xf32>
    tpu.vector_store %arg4[%c0_26, %c0_27, %c0_28, %c0_29, %c16], %30 {strides = array<i32>} : memref<1x8x4x4x32xf32, #tpu.memory_space<vmem>>, vector<1x1x4x4x4xf32>,
    %c0_30 = arith.constant 0 : index
    %31 = arith.index_cast %5 : i32 to index
    %c10 = arith.constant 10 : index
    %32 = vector.load %arg5[%c0_30, %31, %c10] : memref<4x18x18xf32, #tpu.memory_space<vmem>>, vector<4x4x4xf32>
    %c0_31 = arith.constant 0 : index
    %c0_32 = arith.constant 0 : index
    %c0_33 = arith.constant 0 : index
    %c0_34 = arith.constant 0 : index
    %c20 = arith.constant 20 : index
    %33 = vector.load %arg4[%c0_31, %c0_32, %c0_33, %c0_34, %c20] : memref<1x8x4x4x32xf32, #tpu.memory_space<vmem>>, vector<1x1x4x4x4xf32>
    %34 = vector.shape_cast %33 : vector<1x1x4x4x4xf32> to vector<4x4x4xf32>
    %35 = vector.shape_cast %32 : vector<4x4x4xf32> to vector<1x1x4x4x4xf32>
    tpu.vector_store %arg4[%c0_31, %c0_32, %c0_33, %c0_34, %c20], %35 {strides = array<i32>} : memref<1x8x4x4x32xf32, #tpu.memory_space<vmem>>, vector<1x1x4x4x4xf32>,
    %c0_35 = arith.constant 0 : index
    %36 = arith.index_cast %5 : i32 to index
    %c12_36 = arith.constant 12 : index
    %37 = vector.load %arg5[%c0_35, %36, %c12_36] : memref<4x18x18xf32, #tpu.memory_space<vmem>>, vector<4x4x4xf32>
    %c0_37 = arith.constant 0 : index
    %c0_38 = arith.constant 0 : index
    %c0_39 = arith.constant 0 : index
    %c0_40 = arith.constant 0 : index
    %c24 = arith.constant 24 : index
    %38 = vector.load %arg4[%c0_37, %c0_38, %c0_39, %c0_40, %c24] : memref<1x8x4x4x32xf32, #tpu.memory_space<vmem>>, vector<1x1x4x4x4xf32>
    %39 = vector.shape_cast %38 : vector<1x1x4x4x4xf32> to vector<4x4x4xf32>
    %40 = vector.shape_cast %37 : vector<4x4x4xf32> to vector<1x1x4x4x4xf32>
    tpu.vector_store %arg4[%c0_37, %c0_38, %c0_39, %c0_40, %c24], %40 {strides = array<i32>} : memref<1x8x4x4x32xf32, #tpu.memory_space<vmem>>, vector<1x1x4x4x4xf32>,
    %c0_41 = arith.constant 0 : index
    %41 = arith.index_cast %5 : i32 to index
    %c14 = arith.constant 14 : index
    %42 = vector.load %arg5[%c0_41, %41, %c14] : memref<4x18x18xf32, #tpu.memory_space<vmem>>, vector<4x4x4xf32>
    %c0_42 = arith.constant 0 : index
    %c0_43 = arith.constant 0 : index
    %c0_44 = arith.constant 0 : index
    %c0_45 = arith.constant 0 : index
    %c28 = arith.constant 28 : index
    %43 = vector.load %arg4[%c0_42, %c0_43, %c0_44, %c0_45, %c28] : memref<1x8x4x4x32xf32, #tpu.memory_space<vmem>>, vector<1x1x4x4x4xf32>
    %44 = vector.shape_cast %43 : vector<1x1x4x4x4xf32> to vector<4x4x4xf32>
    %45 = vector.shape_cast %42 : vector<4x4x4xf32> to vector<1x1x4x4x4xf32>
    tpu.vector_store %arg4[%c0_42, %c0_43, %c0_44, %c0_45, %c28], %45 {strides = array<i32>} : memref<1x8x4x4x32xf32, #tpu.memory_space<vmem>>, vector<1x1x4x4x4xf32>,
    %c8_i32_46 = arith.constant 8 : i32
    %46 = arith.muli %arg2, %c8_i32_46 : i32
    %c1_i32 = arith.constant 1 : i32
    %47 = arith.addi %46, %c1_i32 : i32
    %c2_i32_47 = arith.constant 2 : i32
    %48 = arith.muli %47, %c2_i32_47 : i32
    %c0_48 = arith.constant 0 : index
    %49 = arith.index_cast %48 : i32 to index
    %c0_49 = arith.constant 0 : index
    %50 = vector.load %arg5[%c0_48, %49, %c0_49] : memref<4x18x18xf32, #tpu.memory_space<vmem>>, vector<4x4x4xf32>
    %c0_50 = arith.constant 0 : index
    %c1 = arith.constant 1 : index
    %c0_51 = arith.constant 0 : index
    %c0_52 = arith.constant 0 : index
    %c0_53 = arith.constant 0 : index
    %51 = vector.load %arg4[%c0_50, %c1, %c0_51, %c0_52, %c0_53] : memref<1x8x4x4x32xf32, #tpu.memory_space<vmem>>, vector<1x1x4x4x4xf32>
    %52 = vector.shape_cast %51 : vector<1x1x4x4x4xf32> to vector<4x4x4xf32>
    %53 = vector.shape_cast %50 : vector<4x4x4xf32> to vector<1x1x4x4x4xf32>
    tpu.vector_store %arg4[%c0_50, %c1, %c0_51, %c0_52, %c0_53], %53 {strides = array<i32>} : memref<1x8x4x4x32xf32, #tpu.memory_space<vmem>>, vector<1x1x4x4x4xf32>,
    %c0_54 = arith.constant 0 : index
    %54 = arith.index_cast %48 : i32 to index
    %c2_55 = arith.constant 2 : index
    %55 = vector.load %arg5[%c0_54, %54, %c2_55] : memref<4x18x18xf32, #tpu.memory_space<vmem>>, vector<4x4x4xf32>
    %c0_56 = arith.constant 0 : index
    %c1_57 = arith.constant 1 : index
    %c0_58 = arith.constant 0 : index
    %c0_59 = arith.constant 0 : index
    %c4_60 = arith.constant 4 : index
    %56 = vector.load %arg4[%c0_56, %c1_57, %c0_58, %c0_59, %c4_60] : memref<1x8x4x4x32xf32, #tpu.memory_space<vmem>>, vector<1x1x4x4x4xf32>
    %57 = vector.shape_cast %56 : vector<1x1x4x4x4xf32> to vector<4x4x4xf32>
    %58 = vector.shape_cast %55 : vector<4x4x4xf32> to vector<1x1x4x4x4xf32>
    tpu.vector_store %arg4[%c0_56, %c1_57, %c0_58, %c0_59, %c4_60], %58 {strides = array<i32>} : memref<1x8x4x4x32xf32, #tpu.memory_space<vmem>>, vector<1x1x4x4x4xf32>,
    %c0_61 = arith.constant 0 : index
    %59 = arith.index_cast %48 : i32 to index
    %c4_62 = arith.constant 4 : index
    %60 = vector.load %arg5[%c0_61, %59, %c4_62] : memref<4x18x18xf32, #tpu.memory_space<vmem>>, vector<4x4x4xf32>
    %c0_63 = arith.constant 0 : index
    %c1_64 = arith.constant 1 : index
    %c0_65 = arith.constant 0 : index
    %c0_66 = arith.constant 0 : index
    %c8_67 = arith.constant 8 : index
    %61 = vector.load %arg4[%c0_63, %c1_64, %c0_65, %c0_66, %c8_67] : memref<1x8x4x4x32xf32, #tpu.memory_space<vmem>>, vector<1x1x4x4x4xf32>
    %62 = vector.shape_cast %61 : vector<1x1x4x4x4xf32> to vector<4x4x4xf32>
    %63 = vector.shape_cast %60 : vector<4x4x4xf32> to vector<1x1x4x4x4xf32>
    tpu.vector_store %arg4[%c0_63, %c1_64, %c0_65, %c0_66, %c8_67], %63 {strides = array<i32>} : memref<1x8x4x4x32xf32, #tpu.memory_space<vmem>>, vector<1x1x4x4x4xf32>,
    %c0_68 = arith.constant 0 : index
    %64 = arith.index_cast %48 : i32 to index
    %c6_69 = arith.constant 6 : index
    %65 = vector.load %arg5[%c0_68, %64, %c6_69] : memref<4x18x18xf32, #tpu.memory_space<vmem>>, vector<4x4x4xf32>
    %c0_70 = arith.constant 0 : index
    %c1_71 = arith.constant 1 : index
    %c0_72 = arith.constant 0 : index
    %c0_73 = arith.constant 0 : index
    %c12_74 = arith.constant 12 : index
    %66 = vector.load %arg4[%c0_70, %c1_71, %c0_72, %c0_73, %c12_74] : memref<1x8x4x4x32xf32, #tpu.memory_space<vmem>>, vector<1x1x4x4x4xf32>
    %67 = vector.shape_cast %66 : vector<1x1x4x4x4xf32> to vector<4x4x4xf32>
    %68 = vector.shape_cast %65 : vector<4x4x4xf32> to vector<1x1x4x4x4xf32>
    tpu.vector_store %arg4[%c0_70, %c1_71, %c0_72, %c0_73, %c12_74], %68 {strides = array<i32>} : memref<1x8x4x4x32xf32, #tpu.memory_space<vmem>>, vector<1x1x4x4x4xf32>,
    %c0_75 = arith.constant 0 : index
    %69 = arith.index_cast %48 : i32 to index
    %c8_76 = arith.constant 8 : index
    %70 = vector.load %arg5[%c0_75, %69, %c8_76] : memref<4x18x18xf32, #tpu.memory_space<vmem>>, vector<4x4x4xf32>
    %c0_77 = arith.constant 0 : index
    %c1_78 = arith.constant 1 : index
    %c0_79 = arith.constant 0 : index
    %c0_80 = arith.constant 0 : index
    %c16_81 = arith.constant 16 : index
    %71 = vector.load %arg4[%c0_77, %c1_78, %c0_79, %c0_80, %c16_81] : memref<1x8x4x4x32xf32, #tpu.memory_space<vmem>>, vector<1x1x4x4x4xf32>
    %72 = vector.shape_cast %71 : vector<1x1x4x4x4xf32> to vector<4x4x4xf32>
    %73 = vector.shape_cast %70 : vector<4x4x4xf32> to vector<1x1x4x4x4xf32>
    tpu.vector_store %arg4[%c0_77, %c1_78, %c0_79, %c0_80, %c16_81], %73 {strides = array<i32>} : memref<1x8x4x4x32xf32, #tpu.memory_space<vmem>>, vector<1x1x4x4x4xf32>,
    %c0_82 = arith.constant 0 : index
    %74 = arith.index_cast %48 : i32 to index
    %c10_83 = arith.constant 10 : index
    %75 = vector.load %arg5[%c0_82, %74, %c10_83] : memref<4x18x18xf32, #tpu.memory_space<vmem>>, vector<4x4x4xf32>
    %c0_84 = arith.constant 0 : index
    %c1_85 = arith.constant 1 : index
    %c0_86 = arith.constant 0 : index
    %c0_87 = arith.constant 0 : index
    %c20_88 = arith.constant 20 : index
    %76 = vector.load %arg4[%c0_84, %c1_85, %c0_86, %c0_87, %c20_88] : memref<1x8x4x4x32xf32, #tpu.memory_space<vmem>>, vector<1x1x4x4x4xf32>
    %77 = vector.shape_cast %76 : vector<1x1x4x4x4xf32> to vector<4x4x4xf32>
    %78 = vector.shape_cast %75 : vector<4x4x4xf32> to vector<1x1x4x4x4xf32>
    tpu.vector_store %arg4[%c0_84, %c1_85, %c0_86, %c0_87, %c20_88], %78 {strides = array<i32>} : memref<1x8x4x4x32xf32, #tpu.memory_space<vmem>>, vector<1x1x4x4x4xf32>,
    %c0_89 = arith.constant 0 : index
    %79 = arith.index_cast %48 : i32 to index
    %c12_90 = arith.constant 12 : index
    %80 = vector.load %arg5[%c0_89, %79, %c12_90] : memref<4x18x18xf32, #tpu.memory_space<vmem>>, vector<4x4x4xf32>
    %c0_91 = arith.constant 0 : index
    %c1_92 = arith.constant 1 : index
    %c0_93 = arith.constant 0 : index
    %c0_94 = arith.constant 0 : index
    %c24_95 = arith.constant 24 : index
    %81 = vector.load %arg4[%c0_91, %c1_92, %c0_93, %c0_94, %c24_95] : memref<1x8x4x4x32xf32, #tpu.memory_space<vmem>>, vector<1x1x4x4x4xf32>
    %82 = vector.shape_cast %81 : vector<1x1x4x4x4xf32> to vector<4x4x4xf32>
    %83 = vector.shape_cast %80 : vector<4x4x4xf32> to vector<1x1x4x4x4xf32>
    tpu.vector_store %arg4[%c0_91, %c1_92, %c0_93, %c0_94, %c24_95], %83 {strides = array<i32>} : memref<1x8x4x4x32xf32, #tpu.memory_space<vmem>>, vector<1x1x4x4x4xf32>,
    %c0_96 = arith.constant 0 : index
    %84 = arith.index_cast %48 : i32 to index
    %c14_97 = arith.constant 14 : index
    %85 = vector.load %arg5[%c0_96, %84, %c14_97] : memref<4x18x18xf32, #tpu.memory_space<vmem>>, vector<4x4x4xf32>
    %c0_98 = arith.constant 0 : index
    %c1_99 = arith.constant 1 : index
    %c0_100 = arith.constant 0 : index
    %c0_101 = arith.constant 0 : index
    %c28_102 = arith.constant 28 : index
    %86 = vector.load %arg4[%c0_98, %c1_99, %c0_100, %c0_101, %c28_102] : memref<1x8x4x4x32xf32, #tpu.memory_space<vmem>>, vector<1x1x4x4x4xf32>
    %87 = vector.shape_cast %86 : vector<1x1x4x4x4xf32> to vector<4x4x4xf32>
    %88 = vector.shape_cast %85 : vector<4x4x4xf32> to vector<1x1x4x4x4xf32>
    tpu.vector_store %arg4[%c0_98, %c1_99, %c0_100, %c0_101, %c28_102], %88 {strides = array<i32>} : memref<1x8x4x4x32xf32, #tpu.memory_space<vmem>>, vector<1x1x4x4x4xf32>,
    %c8_i32_103 = arith.constant 8 : i32
    %89 = arith.muli %arg2, %c8_i32_103 : i32
    %c2_i32_104 = arith.constant 2 : i32
    %90 = arith.addi %89, %c2_i32_104 : i32
    %c2_i32_105 = arith.constant 2 : i32
    %91 = arith.muli %90, %c2_i32_105 : i32
    %c0_106 = arith.constant 0 : index
    %92 = arith.index_cast %91 : i32 to index
    %c0_107 = arith.constant 0 : index
    %93 = vector.load %arg5[%c0_106, %92, %c0_107] : memref<4x18x18xf32, #tpu.memory_space<vmem>>, vector<4x4x4xf32>
    %c0_108 = arith.constant 0 : index
    %c2_109 = arith.constant 2 : index
    %c0_110 = arith.constant 0 : index
    %c0_111 = arith.constant 0 : index
    %c0_112 = arith.constant 0 : index
    %94 = vector.load %arg4[%c0_108, %c2_109, %c0_110, %c0_111, %c0_112] : memref<1x8x4x4x32xf32, #tpu.memory_space<vmem>>, vector<1x1x4x4x4xf32>
    %95 = vector.shape_cast %94 : vector<1x1x4x4x4xf32> to vector<4x4x4xf32>
    %96 = vector.shape_cast %93 : vector<4x4x4xf32> to vector<1x1x4x4x4xf32>
    tpu.vector_store %arg4[%c0_108, %c2_109, %c0_110, %c0_111, %c0_112], %96 {strides = array<i32>} : memref<1x8x4x4x32xf32, #tpu.memory_space<vmem>>, vector<1x1x4x4x4xf32>,
    %c0_113 = arith.constant 0 : index
    %97 = arith.index_cast %91 : i32 to index
    %c2_114 = arith.constant 2 : index
    %98 = vector.load %arg5[%c0_113, %97, %c2_114] : memref<4x18x18xf32, #tpu.memory_space<vmem>>, vector<4x4x4xf32>
    %c0_115 = arith.constant 0 : index
    %c2_116 = arith.constant 2 : index
    %c0_117 = arith.constant 0 : index
    %c0_118 = arith.constant 0 : index
    %c4_119 = arith.constant 4 : index
    %99 = vector.load %arg4[%c0_115, %c2_116, %c0_117, %c0_118, %c4_119] : memref<1x8x4x4x32xf32, #tpu.memory_space<vmem>>, vector<1x1x4x4x4xf32>
    %100 = vector.shape_cast %99 : vector<1x1x4x4x4xf32> to vector<4x4x4xf32>
    %101 = vector.shape_cast %98 : vector<4x4x4xf32> to vector<1x1x4x4x4xf32>
    tpu.vector_store %arg4[%c0_115, %c2_116, %c0_117, %c0_118, %c4_119], %101 {strides = array<i32>} : memref<1x8x4x4x32xf32, #tpu.memory_space<vmem>>, vector<1x1x4x4x4xf32>,
    %c0_120 = arith.constant 0 : index
    %102 = arith.index_cast %91 : i32 to index
    %c4_121 = arith.constant 4 : index
    %103 = vector.load %arg5[%c0_120, %102, %c4_121] : memref<4x18x18xf32, #tpu.memory_space<vmem>>, vector<4x4x4xf32>
    %c0_122 = arith.constant 0 : index
    %c2_123 = arith.constant 2 : index
    %c0_124 = arith.constant 0 : index
    %c0_125 = arith.constant 0 : index
    %c8_126 = arith.constant 8 : index
    %104 = vector.load %arg4[%c0_122, %c2_123, %c0_124, %c0_125, %c8_126] : memref<1x8x4x4x32xf32, #tpu.memory_space<vmem>>, vector<1x1x4x4x4xf32>
    %105 = vector.shape_cast %104 : vector<1x1x4x4x4xf32> to vector<4x4x4xf32>
    %106 = vector.shape_cast %103 : vector<4x4x4xf32> to vector<1x1x4x4x4xf32>
    tpu.vector_store %arg4[%c0_122, %c2_123, %c0_124, %c0_125, %c8_126], %106 {strides = array<i32>} : memref<1x8x4x4x32xf32, #tpu.memory_space<vmem>>, vector<1x1x4x4x4xf32>,
    %c0_127 = arith.constant 0 : index
    %107 = arith.index_cast %91 : i32 to index
    %c6_128 = arith.constant 6 : index
    %108 = vector.load %arg5[%c0_127, %107, %c6_128] : memref<4x18x18xf32, #tpu.memory_space<vmem>>, vector<4x4x4xf32>
    %c0_129 = arith.constant 0 : index
    %c2_130 = arith.constant 2 : index
    %c0_131 = arith.constant 0 : index
    %c0_132 = arith.constant 0 : index
    %c12_133 = arith.constant 12 : index
    %109 = vector.load %arg4[%c0_129, %c2_130, %c0_131, %c0_132, %c12_133] : memref<1x8x4x4x32xf32, #tpu.memory_space<vmem>>, vector<1x1x4x4x4xf32>
    %110 = vector.shape_cast %109 : vector<1x1x4x4x4xf32> to vector<4x4x4xf32>
    %111 = vector.shape_cast %108 : vector<4x4x4xf32> to vector<1x1x4x4x4xf32>
    tpu.vector_store %arg4[%c0_129, %c2_130, %c0_131, %c0_132, %c12_133], %111 {strides = array<i32>} : memref<1x8x4x4x32xf32, #tpu.memory_space<vmem>>, vector<1x1x4x4x4xf32>,
    %c0_134 = arith.constant 0 : index
    %112 = arith.index_cast %91 : i32 to index
    %c8_135 = arith.constant 8 : index
    %113 = vector.load %arg5[%c0_134, %112, %c8_135] : memref<4x18x18xf32, #tpu.memory_space<vmem>>, vector<4x4x4xf32>
    %c0_136 = arith.constant 0 : index
    %c2_137 = arith.constant 2 : index
    %c0_138 = arith.constant 0 : index
    %c0_139 = arith.constant 0 : index
    %c16_140 = arith.constant 16 : index
    %114 = vector.load %arg4[%c0_136, %c2_137, %c0_138, %c0_139, %c16_140] : memref<1x8x4x4x32xf32, #tpu.memory_space<vmem>>, vector<1x1x4x4x4xf32>
    %115 = vector.shape_cast %114 : vector<1x1x4x4x4xf32> to vector<4x4x4xf32>
    %116 = vector.shape_cast %113 : vector<4x4x4xf32> to vector<1x1x4x4x4xf32>
    tpu.vector_store %arg4[%c0_136, %c2_137, %c0_138, %c0_139, %c16_140], %116 {strides = array<i32>} : memref<1x8x4x4x32xf32, #tpu.memory_space<vmem>>, vector<1x1x4x4x4xf32>,
    %c0_141 = arith.constant 0 : index
    %117 = arith.index_cast %91 : i32 to index
    %c10_142 = arith.constant 10 : index
    %118 = vector.load %arg5[%c0_141, %117, %c10_142] : memref<4x18x18xf32, #tpu.memory_space<vmem>>, vector<4x4x4xf32>
    %c0_143 = arith.constant 0 : index
    %c2_144 = arith.constant 2 : index
    %c0_145 = arith.constant 0 : index
    %c0_146 = arith.constant 0 : index
    %c20_147 = arith.constant 20 : index
    %119 = vector.load %arg4[%c0_143, %c2_144, %c0_145, %c0_146, %c20_147] : memref<1x8x4x4x32xf32, #tpu.memory_space<vmem>>, vector<1x1x4x4x4xf32>
    %120 = vector.shape_cast %119 : vector<1x1x4x4x4xf32> to vector<4x4x4xf32>
    %121 = vector.shape_cast %118 : vector<4x4x4xf32> to vector<1x1x4x4x4xf32>
    tpu.vector_store %arg4[%c0_143, %c2_144, %c0_145, %c0_146, %c20_147], %121 {strides = array<i32>} : memref<1x8x4x4x32xf32, #tpu.memory_space<vmem>>, vector<1x1x4x4x4xf32>,
    %c0_148 = arith.constant 0 : index
    %122 = arith.index_cast %91 : i32 to index
    %c12_149 = arith.constant 12 : index
    %123 = vector.load %arg5[%c0_148, %122, %c12_149] : memref<4x18x18xf32, #tpu.memory_space<vmem>>, vector<4x4x4xf32>
    %c0_150 = arith.constant 0 : index
    %c2_151 = arith.constant 2 : index
    %c0_152 = arith.constant 0 : index
    %c0_153 = arith.constant 0 : index
    %c24_154 = arith.constant 24 : index
    %124 = vector.load %arg4[%c0_150, %c2_151, %c0_152, %c0_153, %c24_154] : memref<1x8x4x4x32xf32, #tpu.memory_space<vmem>>, vector<1x1x4x4x4xf32>
    %125 = vector.shape_cast %124 : vector<1x1x4x4x4xf32> to vector<4x4x4xf32>
    %126 = vector.shape_cast %123 : vector<4x4x4xf32> to vector<1x1x4x4x4xf32>
    tpu.vector_store %arg4[%c0_150, %c2_151, %c0_152, %c0_153, %c24_154], %126 {strides = array<i32>} : memref<1x8x4x4x32xf32, #tpu.memory_space<vmem>>, vector<1x1x4x4x4xf32>,
    %c0_155 = arith.constant 0 : index
    %127 = arith.index_cast %91 : i32 to index
    %c14_156 = arith.constant 14 : index
    %128 = vector.load %arg5[%c0_155, %127, %c14_156] : memref<4x18x18xf32, #tpu.memory_space<vmem>>, vector<4x4x4xf32>
    %c0_157 = arith.constant 0 : index
    %c2_158 = arith.constant 2 : index
    %c0_159 = arith.constant 0 : index
    %c0_160 = arith.constant 0 : index
    %c28_161 = arith.constant 28 : index
    %129 = vector.load %arg4[%c0_157, %c2_158, %c0_159, %c0_160, %c28_161] : memref<1x8x4x4x32xf32, #tpu.memory_space<vmem>>, vector<1x1x4x4x4xf32>
    %130 = vector.shape_cast %129 : vector<1x1x4x4x4xf32> to vector<4x4x4xf32>
    %131 = vector.shape_cast %128 : vector<4x4x4xf32> to vector<1x1x4x4x4xf32>
    tpu.vector_store %arg4[%c0_157, %c2_158, %c0_159, %c0_160, %c28_161], %131 {strides = array<i32>} : memref<1x8x4x4x32xf32, #tpu.memory_space<vmem>>, vector<1x1x4x4x4xf32>,
    %c8_i32_162 = arith.constant 8 : i32
    %132 = arith.muli %arg2, %c8_i32_162 : i32
    %c3_i32 = arith.constant 3 : i32
    %133 = arith.addi %132, %c3_i32 : i32
    %c2_i32_163 = arith.constant 2 : i32
    %134 = arith.muli %133, %c2_i32_163 : i32
    %c0_164 = arith.constant 0 : index
    %135 = arith.index_cast %134 : i32 to index
    %c0_165 = arith.constant 0 : index
    %136 = vector.load %arg5[%c0_164, %135, %c0_165] : memref<4x18x18xf32, #tpu.memory_space<vmem>>, vector<4x4x4xf32>
    %c0_166 = arith.constant 0 : index
    %c3 = arith.constant 3 : index
    %c0_167 = arith.constant 0 : index
    %c0_168 = arith.constant 0 : index
    %c0_169 = arith.constant 0 : index
    %137 = vector.load %arg4[%c0_166, %c3, %c0_167, %c0_168, %c0_169] : memref<1x8x4x4x32xf32, #tpu.memory_space<vmem>>, vector<1x1x4x4x4xf32>
    %138 = vector.shape_cast %137 : vector<1x1x4x4x4xf32> to vector<4x4x4xf32>
    %139 = vector.shape_cast %136 : vector<4x4x4xf32> to vector<1x1x4x4x4xf32>
    tpu.vector_store %arg4[%c0_166, %c3, %c0_167, %c0_168, %c0_169], %139 {strides = array<i32>} : memref<1x8x4x4x32xf32, #tpu.memory_space<vmem>>, vector<1x1x4x4x4xf32>,
    %c0_170 = arith.constant 0 : index
    %140 = arith.index_cast %134 : i32 to index
    %c2_171 = arith.constant 2 : index
    %141 = vector.load %arg5[%c0_170, %140, %c2_171] : memref<4x18x18xf32, #tpu.memory_space<vmem>>, vector<4x4x4xf32>
    %c0_172 = arith.constant 0 : index
    %c3_173 = arith.constant 3 : index
    %c0_174 = arith.constant 0 : index
    %c0_175 = arith.constant 0 : index
    %c4_176 = arith.constant 4 : index
    %142 = vector.load %arg4[%c0_172, %c3_173, %c0_174, %c0_175, %c4_176] : memref<1x8x4x4x32xf32, #tpu.memory_space<vmem>>, vector<1x1x4x4x4xf32>
    %143 = vector.shape_cast %142 : vector<1x1x4x4x4xf32> to vector<4x4x4xf32>
    %144 = vector.shape_cast %141 : vector<4x4x4xf32> to vector<1x1x4x4x4xf32>
    tpu.vector_store %arg4[%c0_172, %c3_173, %c0_174, %c0_175, %c4_176], %144 {strides = array<i32>} : memref<1x8x4x4x32xf32, #tpu.memory_space<vmem>>, vector<1x1x4x4x4xf32>,
    %c0_177 = arith.constant 0 : index
    %145 = arith.index_cast %134 : i32 to index
    %c4_178 = arith.constant 4 : index
    %146 = vector.load %arg5[%c0_177, %145, %c4_178] : memref<4x18x18xf32, #tpu.memory_space<vmem>>, vector<4x4x4xf32>
    %c0_179 = arith.constant 0 : index
    %c3_180 = arith.constant 3 : index
    %c0_181 = arith.constant 0 : index
    %c0_182 = arith.constant 0 : index
    %c8_183 = arith.constant 8 : index
    %147 = vector.load %arg4[%c0_179, %c3_180, %c0_181, %c0_182, %c8_183] : memref<1x8x4x4x32xf32, #tpu.memory_space<vmem>>, vector<1x1x4x4x4xf32>
    %148 = vector.shape_cast %147 : vector<1x1x4x4x4xf32> to vector<4x4x4xf32>
    %149 = vector.shape_cast %146 : vector<4x4x4xf32> to vector<1x1x4x4x4xf32>
    tpu.vector_store %arg4[%c0_179, %c3_180, %c0_181, %c0_182, %c8_183], %149 {strides = array<i32>} : memref<1x8x4x4x32xf32, #tpu.memory_space<vmem>>, vector<1x1x4x4x4xf32>,
    %c0_184 = arith.constant 0 : index
    %150 = arith.index_cast %134 : i32 to index
    %c6_185 = arith.constant 6 : index
    %151 = vector.load %arg5[%c0_184, %150, %c6_185] : memref<4x18x18xf32, #tpu.memory_space<vmem>>, vector<4x4x4xf32>
    %c0_186 = arith.constant 0 : index
    %c3_187 = arith.constant 3 : index
    %c0_188 = arith.constant 0 : index
    %c0_189 = arith.constant 0 : index
    %c12_190 = arith.constant 12 : index
    %152 = vector.load %arg4[%c0_186, %c3_187, %c0_188, %c0_189, %c12_190] : memref<1x8x4x4x32xf32, #tpu.memory_space<vmem>>, vector<1x1x4x4x4xf32>
    %153 = vector.shape_cast %152 : vector<1x1x4x4x4xf32> to vector<4x4x4xf32>
    %154 = vector.shape_cast %151 : vector<4x4x4xf32> to vector<1x1x4x4x4xf32>
    tpu.vector_store %arg4[%c0_186, %c3_187, %c0_188, %c0_189, %c12_190], %154 {strides = array<i32>} : memref<1x8x4x4x32xf32, #tpu.memory_space<vmem>>, vector<1x1x4x4x4xf32>,
    %c0_191 = arith.constant 0 : index
    %155 = arith.index_cast %134 : i32 to index
    %c8_192 = arith.constant 8 : index
    %156 = vector.load %arg5[%c0_191, %155, %c8_192] : memref<4x18x18xf32, #tpu.memory_space<vmem>>, vector<4x4x4xf32>
    %c0_193 = arith.constant 0 : index
    %c3_194 = arith.constant 3 : index
    %c0_195 = arith.constant 0 : index
    %c0_196 = arith.constant 0 : index
    %c16_197 = arith.constant 16 : index
    %157 = vector.load %arg4[%c0_193, %c3_194, %c0_195, %c0_196, %c16_197] : memref<1x8x4x4x32xf32, #tpu.memory_space<vmem>>, vector<1x1x4x4x4xf32>
    %158 = vector.shape_cast %157 : vector<1x1x4x4x4xf32> to vector<4x4x4xf32>
    %159 = vector.shape_cast %156 : vector<4x4x4xf32> to vector<1x1x4x4x4xf32>
    tpu.vector_store %arg4[%c0_193, %c3_194, %c0_195, %c0_196, %c16_197], %159 {strides = array<i32>} : memref<1x8x4x4x32xf32, #tpu.memory_space<vmem>>, vector<1x1x4x4x4xf32>,
    %c0_198 = arith.constant 0 : index
    %160 = arith.index_cast %134 : i32 to index
    %c10_199 = arith.constant 10 : index
    %161 = vector.load %arg5[%c0_198, %160, %c10_199] : memref<4x18x18xf32, #tpu.memory_space<vmem>>, vector<4x4x4xf32>
    %c0_200 = arith.constant 0 : index
    %c3_201 = arith.constant 3 : index
    %c0_202 = arith.constant 0 : index
    %c0_203 = arith.constant 0 : index
    %c20_204 = arith.constant 20 : index
    %162 = vector.load %arg4[%c0_200, %c3_201, %c0_202, %c0_203, %c20_204] : memref<1x8x4x4x32xf32, #tpu.memory_space<vmem>>, vector<1x1x4x4x4xf32>
    %163 = vector.shape_cast %162 : vector<1x1x4x4x4xf32> to vector<4x4x4xf32>
    %164 = vector.shape_cast %161 : vector<4x4x4xf32> to vector<1x1x4x4x4xf32>
    tpu.vector_store %arg4[%c0_200, %c3_201, %c0_202, %c0_203, %c20_204], %164 {strides = array<i32>} : memref<1x8x4x4x32xf32, #tpu.memory_space<vmem>>, vector<1x1x4x4x4xf32>,
    %c0_205 = arith.constant 0 : index
    %165 = arith.index_cast %134 : i32 to index
    %c12_206 = arith.constant 12 : index
    %166 = vector.load %arg5[%c0_205, %165, %c12_206] : memref<4x18x18xf32, #tpu.memory_space<vmem>>, vector<4x4x4xf32>
    %c0_207 = arith.constant 0 : index
    %c3_208 = arith.constant 3 : index
    %c0_209 = arith.constant 0 : index
    %c0_210 = arith.constant 0 : index
    %c24_211 = arith.constant 24 : index
    %167 = vector.load %arg4[%c0_207, %c3_208, %c0_209, %c0_210, %c24_211] : memref<1x8x4x4x32xf32, #tpu.memory_space<vmem>>, vector<1x1x4x4x4xf32>
    %168 = vector.shape_cast %167 : vector<1x1x4x4x4xf32> to vector<4x4x4xf32>
    %169 = vector.shape_cast %166 : vector<4x4x4xf32> to vector<1x1x4x4x4xf32>
    tpu.vector_store %arg4[%c0_207, %c3_208, %c0_209, %c0_210, %c24_211], %169 {strides = array<i32>} : memref<1x8x4x4x32xf32, #tpu.memory_space<vmem>>, vector<1x1x4x4x4xf32>,
    %c0_212 = arith.constant 0 : index
    %170 = arith.index_cast %134 : i32 to index
    %c14_213 = arith.constant 14 : index
    %171 = vector.load %arg5[%c0_212, %170, %c14_213] : memref<4x18x18xf32, #tpu.memory_space<vmem>>, vector<4x4x4xf32>
    %c0_214 = arith.constant 0 : index
    %c3_215 = arith.constant 3 : index
    %c0_216 = arith.constant 0 : index
    %c0_217 = arith.constant 0 : index
    %c28_218 = arith.constant 28 : index
    %172 = vector.load %arg4[%c0_214, %c3_215, %c0_216, %c0_217, %c28_218] : memref<1x8x4x4x32xf32, #tpu.memory_space<vmem>>, vector<1x1x4x4x4xf32>
    %173 = vector.shape_cast %172 : vector<1x1x4x4x4xf32> to vector<4x4x4xf32>
    %174 = vector.shape_cast %171 : vector<4x4x4xf32> to vector<1x1x4x4x4xf32>
    tpu.vector_store %arg4[%c0_214, %c3_215, %c0_216, %c0_217, %c28_218], %174 {strides = array<i32>} : memref<1x8x4x4x32xf32, #tpu.memory_space<vmem>>, vector<1x1x4x4x4xf32>,
    %c8_i32_219 = arith.constant 8 : i32
    %175 = arith.muli %arg2, %c8_i32_219 : i32
    %c4_i32 = arith.constant 4 : i32
    %176 = arith.addi %175, %c4_i32 : i32
    %c2_i32_220 = arith.constant 2 : i32
    %177 = arith.muli %176, %c2_i32_220 : i32
    %c0_221 = arith.constant 0 : index
    %178 = arith.index_cast %177 : i32 to index
    %c0_222 = arith.constant 0 : index
    %179 = vector.load %arg5[%c0_221, %178, %c0_222] : memref<4x18x18xf32, #tpu.memory_space<vmem>>, vector<4x4x4xf32>
    %c0_223 = arith.constant 0 : index
    %c4_224 = arith.constant 4 : index
    %c0_225 = arith.constant 0 : index
    %c0_226 = arith.constant 0 : index
    %c0_227 = arith.constant 0 : index
    %180 = vector.load %arg4[%c0_223, %c4_224, %c0_225, %c0_226, %c0_227] : memref<1x8x4x4x32xf32, #tpu.memory_space<vmem>>, vector<1x1x4x4x4xf32>
    %181 = vector.shape_cast %180 : vector<1x1x4x4x4xf32> to vector<4x4x4xf32>
    %182 = vector.shape_cast %179 : vector<4x4x4xf32> to vector<1x1x4x4x4xf32>
    tpu.vector_store %arg4[%c0_223, %c4_224, %c0_225, %c0_226, %c0_227], %182 {strides = array<i32>} : memref<1x8x4x4x32xf32, #tpu.memory_space<vmem>>, vector<1x1x4x4x4xf32>,
    %c0_228 = arith.constant 0 : index
    %183 = arith.index_cast %177 : i32 to index
    %c2_229 = arith.constant 2 : index
    %184 = vector.load %arg5[%c0_228, %183, %c2_229] : memref<4x18x18xf32, #tpu.memory_space<vmem>>, vector<4x4x4xf32>
    %c0_230 = arith.constant 0 : index
    %c4_231 = arith.constant 4 : index
    %c0_232 = arith.constant 0 : index
    %c0_233 = arith.constant 0 : index
    %c4_234 = arith.constant 4 : index
    %185 = vector.load %arg4[%c0_230, %c4_231, %c0_232, %c0_233, %c4_234] : memref<1x8x4x4x32xf32, #tpu.memory_space<vmem>>, vector<1x1x4x4x4xf32>
    %186 = vector.shape_cast %185 : vector<1x1x4x4x4xf32> to vector<4x4x4xf32>
    %187 = vector.shape_cast %184 : vector<4x4x4xf32> to vector<1x1x4x4x4xf32>
    tpu.vector_store %arg4[%c0_230, %c4_231, %c0_232, %c0_233, %c4_234], %187 {strides = array<i32>} : memref<1x8x4x4x32xf32, #tpu.memory_space<vmem>>, vector<1x1x4x4x4xf32>,
    %c0_235 = arith.constant 0 : index
    %188 = arith.index_cast %177 : i32 to index
    %c4_236 = arith.constant 4 : index
    %189 = vector.load %arg5[%c0_235, %188, %c4_236] : memref<4x18x18xf32, #tpu.memory_space<vmem>>, vector<4x4x4xf32>
    %c0_237 = arith.constant 0 : index
    %c4_238 = arith.constant 4 : index
    %c0_239 = arith.constant 0 : index
    %c0_240 = arith.constant 0 : index
    %c8_241 = arith.constant 8 : index
    %190 = vector.load %arg4[%c0_237, %c4_238, %c0_239, %c0_240, %c8_241] : memref<1x8x4x4x32xf32, #tpu.memory_space<vmem>>, vector<1x1x4x4x4xf32>
    %191 = vector.shape_cast %190 : vector<1x1x4x4x4xf32> to vector<4x4x4xf32>
    %192 = vector.shape_cast %189 : vector<4x4x4xf32> to vector<1x1x4x4x4xf32>
    tpu.vector_store %arg4[%c0_237, %c4_238, %c0_239, %c0_240, %c8_241], %192 {strides = array<i32>} : memref<1x8x4x4x32xf32, #tpu.memory_space<vmem>>, vector<1x1x4x4x4xf32>,
    %c0_242 = arith.constant 0 : index
    %193 = arith.index_cast %177 : i32 to index
    %c6_243 = arith.constant 6 : index
    %194 = vector.load %arg5[%c0_242, %193, %c6_243] : memref<4x18x18xf32, #tpu.memory_space<vmem>>, vector<4x4x4xf32>
    %c0_244 = arith.constant 0 : index
    %c4_245 = arith.constant 4 : index
    %c0_246 = arith.constant 0 : index
    %c0_247 = arith.constant 0 : index
    %c12_248 = arith.constant 12 : index
    %195 = vector.load %arg4[%c0_244, %c4_245, %c0_246, %c0_247, %c12_248] : memref<1x8x4x4x32xf32, #tpu.memory_space<vmem>>, vector<1x1x4x4x4xf32>
    %196 = vector.shape_cast %195 : vector<1x1x4x4x4xf32> to vector<4x4x4xf32>
    %197 = vector.shape_cast %194 : vector<4x4x4xf32> to vector<1x1x4x4x4xf32>
    tpu.vector_store %arg4[%c0_244, %c4_245, %c0_246, %c0_247, %c12_248], %197 {strides = array<i32>} : memref<1x8x4x4x32xf32, #tpu.memory_space<vmem>>, vector<1x1x4x4x4xf32>,
    %c0_249 = arith.constant 0 : index
    %198 = arith.index_cast %177 : i32 to index
    %c8_250 = arith.constant 8 : index
    %199 = vector.load %arg5[%c0_249, %198, %c8_250] : memref<4x18x18xf32, #tpu.memory_space<vmem>>, vector<4x4x4xf32>
    %c0_251 = arith.constant 0 : index
    %c4_252 = arith.constant 4 : index
    %c0_253 = arith.constant 0 : index
    %c0_254 = arith.constant 0 : index
    %c16_255 = arith.constant 16 : index
    %200 = vector.load %arg4[%c0_251, %c4_252, %c0_253, %c0_254, %c16_255] : memref<1x8x4x4x32xf32, #tpu.memory_space<vmem>>, vector<1x1x4x4x4xf32>
    %201 = vector.shape_cast %200 : vector<1x1x4x4x4xf32> to vector<4x4x4xf32>
    %202 = vector.shape_cast %199 : vector<4x4x4xf32> to vector<1x1x4x4x4xf32>
    tpu.vector_store %arg4[%c0_251, %c4_252, %c0_253, %c0_254, %c16_255], %202 {strides = array<i32>} : memref<1x8x4x4x32xf32, #tpu.memory_space<vmem>>, vector<1x1x4x4x4xf32>,
    %c0_256 = arith.constant 0 : index
    %203 = arith.index_cast %177 : i32 to index
    %c10_257 = arith.constant 10 : index
    %204 = vector.load %arg5[%c0_256, %203, %c10_257] : memref<4x18x18xf32, #tpu.memory_space<vmem>>, vector<4x4x4xf32>
    %c0_258 = arith.constant 0 : index
    %c4_259 = arith.constant 4 : index
    %c0_260 = arith.constant 0 : index
    %c0_261 = arith.constant 0 : index
    %c20_262 = arith.constant 20 : index
    %205 = vector.load %arg4[%c0_258, %c4_259, %c0_260, %c0_261, %c20_262] : memref<1x8x4x4x32xf32, #tpu.memory_space<vmem>>, vector<1x1x4x4x4xf32>
    %206 = vector.shape_cast %205 : vector<1x1x4x4x4xf32> to vector<4x4x4xf32>
    %207 = vector.shape_cast %204 : vector<4x4x4xf32> to vector<1x1x4x4x4xf32>
    tpu.vector_store %arg4[%c0_258, %c4_259, %c0_260, %c0_261, %c20_262], %207 {strides = array<i32>} : memref<1x8x4x4x32xf32, #tpu.memory_space<vmem>>, vector<1x1x4x4x4xf32>,
    %c0_263 = arith.constant 0 : index
    %208 = arith.index_cast %177 : i32 to index
    %c12_264 = arith.constant 12 : index
    %209 = vector.load %arg5[%c0_263, %208, %c12_264] : memref<4x18x18xf32, #tpu.memory_space<vmem>>, vector<4x4x4xf32>
    %c0_265 = arith.constant 0 : index
    %c4_266 = arith.constant 4 : index
    %c0_267 = arith.constant 0 : index
    %c0_268 = arith.constant 0 : index
    %c24_269 = arith.constant 24 : index
    %210 = vector.load %arg4[%c0_265, %c4_266, %c0_267, %c0_268, %c24_269] : memref<1x8x4x4x32xf32, #tpu.memory_space<vmem>>, vector<1x1x4x4x4xf32>
    %211 = vector.shape_cast %210 : vector<1x1x4x4x4xf32> to vector<4x4x4xf32>
    %212 = vector.shape_cast %209 : vector<4x4x4xf32> to vector<1x1x4x4x4xf32>
    tpu.vector_store %arg4[%c0_265, %c4_266, %c0_267, %c0_268, %c24_269], %212 {strides = array<i32>} : memref<1x8x4x4x32xf32, #tpu.memory_space<vmem>>, vector<1x1x4x4x4xf32>,
    %c0_270 = arith.constant 0 : index
    %213 = arith.index_cast %177 : i32 to index
    %c14_271 = arith.constant 14 : index
    %214 = vector.load %arg5[%c0_270, %213, %c14_271] : memref<4x18x18xf32, #tpu.memory_space<vmem>>, vector<4x4x4xf32>
    %c0_272 = arith.constant 0 : index
    %c4_273 = arith.constant 4 : index
    %c0_274 = arith.constant 0 : index
    %c0_275 = arith.constant 0 : index
    %c28_276 = arith.constant 28 : index
    %215 = vector.load %arg4[%c0_272, %c4_273, %c0_274, %c0_275, %c28_276] : memref<1x8x4x4x32xf32, #tpu.memory_space<vmem>>, vector<1x1x4x4x4xf32>
    %216 = vector.shape_cast %215 : vector<1x1x4x4x4xf32> to vector<4x4x4xf32>
    %217 = vector.shape_cast %214 : vector<4x4x4xf32> to vector<1x1x4x4x4xf32>
    tpu.vector_store %arg4[%c0_272, %c4_273, %c0_274, %c0_275, %c28_276], %217 {strides = array<i32>} : memref<1x8x4x4x32xf32, #tpu.memory_space<vmem>>, vector<1x1x4x4x4xf32>,
    %c8_i32_277 = arith.constant 8 : i32
    %218 = arith.muli %arg2, %c8_i32_277 : i32
    %c5_i32 = arith.constant 5 : i32
    %219 = arith.addi %218, %c5_i32 : i32
    %c2_i32_278 = arith.constant 2 : i32
    %220 = arith.muli %219, %c2_i32_278 : i32
    %c0_279 = arith.constant 0 : index
    %221 = arith.index_cast %220 : i32 to index
    %c0_280 = arith.constant 0 : index
    %222 = vector.load %arg5[%c0_279, %221, %c0_280] : memref<4x18x18xf32, #tpu.memory_space<vmem>>, vector<4x4x4xf32>
    %c0_281 = arith.constant 0 : index
    %c5 = arith.constant 5 : index
    %c0_282 = arith.constant 0 : index
    %c0_283 = arith.constant 0 : index
    %c0_284 = arith.constant 0 : index
    %223 = vector.load %arg4[%c0_281, %c5, %c0_282, %c0_283, %c0_284] : memref<1x8x4x4x32xf32, #tpu.memory_space<vmem>>, vector<1x1x4x4x4xf32>
    %224 = vector.shape_cast %223 : vector<1x1x4x4x4xf32> to vector<4x4x4xf32>
    %225 = vector.shape_cast %222 : vector<4x4x4xf32> to vector<1x1x4x4x4xf32>
    tpu.vector_store %arg4[%c0_281, %c5, %c0_282, %c0_283, %c0_284], %225 {strides = array<i32>} : memref<1x8x4x4x32xf32, #tpu.memory_space<vmem>>, vector<1x1x4x4x4xf32>,
    %c0_285 = arith.constant 0 : index
    %226 = arith.index_cast %220 : i32 to index
    %c2_286 = arith.constant 2 : index
    %227 = vector.load %arg5[%c0_285, %226, %c2_286] : memref<4x18x18xf32, #tpu.memory_space<vmem>>, vector<4x4x4xf32>
    %c0_287 = arith.constant 0 : index
    %c5_288 = arith.constant 5 : index
    %c0_289 = arith.constant 0 : index
    %c0_290 = arith.constant 0 : index
    %c4_291 = arith.constant 4 : index
    %228 = vector.load %arg4[%c0_287, %c5_288, %c0_289, %c0_290, %c4_291] : memref<1x8x4x4x32xf32, #tpu.memory_space<vmem>>, vector<1x1x4x4x4xf32>
    %229 = vector.shape_cast %228 : vector<1x1x4x4x4xf32> to vector<4x4x4xf32>
    %230 = vector.shape_cast %227 : vector<4x4x4xf32> to vector<1x1x4x4x4xf32>
    tpu.vector_store %arg4[%c0_287, %c5_288, %c0_289, %c0_290, %c4_291], %230 {strides = array<i32>} : memref<1x8x4x4x32xf32, #tpu.memory_space<vmem>>, vector<1x1x4x4x4xf32>,
    %c0_292 = arith.constant 0 : index
    %231 = arith.index_cast %220 : i32 to index
    %c4_293 = arith.constant 4 : index
    %232 = vector.load %arg5[%c0_292, %231, %c4_293] : memref<4x18x18xf32, #tpu.memory_space<vmem>>, vector<4x4x4xf32>
    %c0_294 = arith.constant 0 : index
    %c5_295 = arith.constant 5 : index
    %c0_296 = arith.constant 0 : index
    %c0_297 = arith.constant 0 : index
    %c8_298 = arith.constant 8 : index
    %233 = vector.load %arg4[%c0_294, %c5_295, %c0_296, %c0_297, %c8_298] : memref<1x8x4x4x32xf32, #tpu.memory_space<vmem>>, vector<1x1x4x4x4xf32>
    %234 = vector.shape_cast %233 : vector<1x1x4x4x4xf32> to vector<4x4x4xf32>
    %235 = vector.shape_cast %232 : vector<4x4x4xf32> to vector<1x1x4x4x4xf32>
    tpu.vector_store %arg4[%c0_294, %c5_295, %c0_296, %c0_297, %c8_298], %235 {strides = array<i32>} : memref<1x8x4x4x32xf32, #tpu.memory_space<vmem>>, vector<1x1x4x4x4xf32>,
    %c0_299 = arith.constant 0 : index
    %236 = arith.index_cast %220 : i32 to index
    %c6_300 = arith.constant 6 : index
    %237 = vector.load %arg5[%c0_299, %236, %c6_300] : memref<4x18x18xf32, #tpu.memory_space<vmem>>, vector<4x4x4xf32>
    %c0_301 = arith.constant 0 : index
    %c5_302 = arith.constant 5 : index
    %c0_303 = arith.constant 0 : index
    %c0_304 = arith.constant 0 : index
    %c12_305 = arith.constant 12 : index
    %238 = vector.load %arg4[%c0_301, %c5_302, %c0_303, %c0_304, %c12_305] : memref<1x8x4x4x32xf32, #tpu.memory_space<vmem>>, vector<1x1x4x4x4xf32>
    %239 = vector.shape_cast %238 : vector<1x1x4x4x4xf32> to vector<4x4x4xf32>
    %240 = vector.shape_cast %237 : vector<4x4x4xf32> to vector<1x1x4x4x4xf32>
    tpu.vector_store %arg4[%c0_301, %c5_302, %c0_303, %c0_304, %c12_305], %240 {strides = array<i32>} : memref<1x8x4x4x32xf32, #tpu.memory_space<vmem>>, vector<1x1x4x4x4xf32>,
    %c0_306 = arith.constant 0 : index
    %241 = arith.index_cast %220 : i32 to index
    %c8_307 = arith.constant 8 : index
    %242 = vector.load %arg5[%c0_306, %241, %c8_307] : memref<4x18x18xf32, #tpu.memory_space<vmem>>, vector<4x4x4xf32>
    %c0_308 = arith.constant 0 : index
    %c5_309 = arith.constant 5 : index
    %c0_310 = arith.constant 0 : index
    %c0_311 = arith.constant 0 : index
    %c16_312 = arith.constant 16 : index
    %243 = vector.load %arg4[%c0_308, %c5_309, %c0_310, %c0_311, %c16_312] : memref<1x8x4x4x32xf32, #tpu.memory_space<vmem>>, vector<1x1x4x4x4xf32>
    %244 = vector.shape_cast %243 : vector<1x1x4x4x4xf32> to vector<4x4x4xf32>
    %245 = vector.shape_cast %242 : vector<4x4x4xf32> to vector<1x1x4x4x4xf32>
    tpu.vector_store %arg4[%c0_308, %c5_309, %c0_310, %c0_311, %c16_312], %245 {strides = array<i32>} : memref<1x8x4x4x32xf32, #tpu.memory_space<vmem>>, vector<1x1x4x4x4xf32>,
    %c0_313 = arith.constant 0 : index
    %246 = arith.index_cast %220 : i32 to index
    %c10_314 = arith.constant 10 : index
    %247 = vector.load %arg5[%c0_313, %246, %c10_314] : memref<4x18x18xf32, #tpu.memory_space<vmem>>, vector<4x4x4xf32>
    %c0_315 = arith.constant 0 : index
    %c5_316 = arith.constant 5 : index
    %c0_317 = arith.constant 0 : index
    %c0_318 = arith.constant 0 : index
    %c20_319 = arith.constant 20 : index
    %248 = vector.load %arg4[%c0_315, %c5_316, %c0_317, %c0_318, %c20_319] : memref<1x8x4x4x32xf32, #tpu.memory_space<vmem>>, vector<1x1x4x4x4xf32>
    %249 = vector.shape_cast %248 : vector<1x1x4x4x4xf32> to vector<4x4x4xf32>
    %250 = vector.shape_cast %247 : vector<4x4x4xf32> to vector<1x1x4x4x4xf32>
    tpu.vector_store %arg4[%c0_315, %c5_316, %c0_317, %c0_318, %c20_319], %250 {strides = array<i32>} : memref<1x8x4x4x32xf32, #tpu.memory_space<vmem>>, vector<1x1x4x4x4xf32>,
    %c0_320 = arith.constant 0 : index
    %251 = arith.index_cast %220 : i32 to index
    %c12_321 = arith.constant 12 : index
    %252 = vector.load %arg5[%c0_320, %251, %c12_321] : memref<4x18x18xf32, #tpu.memory_space<vmem>>, vector<4x4x4xf32>
    %c0_322 = arith.constant 0 : index
    %c5_323 = arith.constant 5 : index
    %c0_324 = arith.constant 0 : index
    %c0_325 = arith.constant 0 : index
    %c24_326 = arith.constant 24 : index
    %253 = vector.load %arg4[%c0_322, %c5_323, %c0_324, %c0_325, %c24_326] : memref<1x8x4x4x32xf32, #tpu.memory_space<vmem>>, vector<1x1x4x4x4xf32>
    %254 = vector.shape_cast %253 : vector<1x1x4x4x4xf32> to vector<4x4x4xf32>
    %255 = vector.shape_cast %252 : vector<4x4x4xf32> to vector<1x1x4x4x4xf32>
    tpu.vector_store %arg4[%c0_322, %c5_323, %c0_324, %c0_325, %c24_326], %255 {strides = array<i32>} : memref<1x8x4x4x32xf32, #tpu.memory_space<vmem>>, vector<1x1x4x4x4xf32>,
    %c0_327 = arith.constant 0 : index
    %256 = arith.index_cast %220 : i32 to index
    %c14_328 = arith.constant 14 : index
    %257 = vector.load %arg5[%c0_327, %256, %c14_328] : memref<4x18x18xf32, #tpu.memory_space<vmem>>, vector<4x4x4xf32>
    %c0_329 = arith.constant 0 : index
    %c5_330 = arith.constant 5 : index
    %c0_331 = arith.constant 0 : index
    %c0_332 = arith.constant 0 : index
    %c28_333 = arith.constant 28 : index
    %258 = vector.load %arg4[%c0_329, %c5_330, %c0_331, %c0_332, %c28_333] : memref<1x8x4x4x32xf32, #tpu.memory_space<vmem>>, vector<1x1x4x4x4xf32>
    %259 = vector.shape_cast %258 : vector<1x1x4x4x4xf32> to vector<4x4x4xf32>
    %260 = vector.shape_cast %257 : vector<4x4x4xf32> to vector<1x1x4x4x4xf32>
    tpu.vector_store %arg4[%c0_329, %c5_330, %c0_331, %c0_332, %c28_333], %260 {strides = array<i32>} : memref<1x8x4x4x32xf32, #tpu.memory_space<vmem>>, vector<1x1x4x4x4xf32>,
    %c8_i32_334 = arith.constant 8 : i32
    %261 = arith.muli %arg2, %c8_i32_334 : i32
    %c6_i32 = arith.constant 6 : i32
    %262 = arith.addi %261, %c6_i32 : i32
    %c2_i32_335 = arith.constant 2 : i32
    %263 = arith.muli %262, %c2_i32_335 : i32
    %c0_336 = arith.constant 0 : index
    %264 = arith.index_cast %263 : i32 to index
    %c0_337 = arith.constant 0 : index
    %265 = vector.load %arg5[%c0_336, %264, %c0_337] : memref<4x18x18xf32, #tpu.memory_space<vmem>>, vector<4x4x4xf32>
    %c0_338 = arith.constant 0 : index
    %c6_339 = arith.constant 6 : index
    %c0_340 = arith.constant 0 : index
    %c0_341 = arith.constant 0 : index
    %c0_342 = arith.constant 0 : index
    %266 = vector.load %arg4[%c0_338, %c6_339, %c0_340, %c0_341, %c0_342] : memref<1x8x4x4x32xf32, #tpu.memory_space<vmem>>, vector<1x1x4x4x4xf32>
    %267 = vector.shape_cast %266 : vector<1x1x4x4x4xf32> to vector<4x4x4xf32>
    %268 = vector.shape_cast %265 : vector<4x4x4xf32> to vector<1x1x4x4x4xf32>
    tpu.vector_store %arg4[%c0_338, %c6_339, %c0_340, %c0_341, %c0_342], %268 {strides = array<i32>} : memref<1x8x4x4x32xf32, #tpu.memory_space<vmem>>, vector<1x1x4x4x4xf32>,
    %c0_343 = arith.constant 0 : index
    %269 = arith.index_cast %263 : i32 to index
    %c2_344 = arith.constant 2 : index
    %270 = vector.load %arg5[%c0_343, %269, %c2_344] : memref<4x18x18xf32, #tpu.memory_space<vmem>>, vector<4x4x4xf32>
    %c0_345 = arith.constant 0 : index
    %c6_346 = arith.constant 6 : index
    %c0_347 = arith.constant 0 : index
    %c0_348 = arith.constant 0 : index
    %c4_349 = arith.constant 4 : index
    %271 = vector.load %arg4[%c0_345, %c6_346, %c0_347, %c0_348, %c4_349] : memref<1x8x4x4x32xf32, #tpu.memory_space<vmem>>, vector<1x1x4x4x4xf32>
    %272 = vector.shape_cast %271 : vector<1x1x4x4x4xf32> to vector<4x4x4xf32>
    %273 = vector.shape_cast %270 : vector<4x4x4xf32> to vector<1x1x4x4x4xf32>
    tpu.vector_store %arg4[%c0_345, %c6_346, %c0_347, %c0_348, %c4_349], %273 {strides = array<i32>} : memref<1x8x4x4x32xf32, #tpu.memory_space<vmem>>, vector<1x1x4x4x4xf32>,
    %c0_350 = arith.constant 0 : index
    %274 = arith.index_cast %263 : i32 to index
    %c4_351 = arith.constant 4 : index
    %275 = vector.load %arg5[%c0_350, %274, %c4_351] : memref<4x18x18xf32, #tpu.memory_space<vmem>>, vector<4x4x4xf32>
    %c0_352 = arith.constant 0 : index
    %c6_353 = arith.constant 6 : index
    %c0_354 = arith.constant 0 : index
    %c0_355 = arith.constant 0 : index
    %c8_356 = arith.constant 8 : index
    %276 = vector.load %arg4[%c0_352, %c6_353, %c0_354, %c0_355, %c8_356] : memref<1x8x4x4x32xf32, #tpu.memory_space<vmem>>, vector<1x1x4x4x4xf32>
    %277 = vector.shape_cast %276 : vector<1x1x4x4x4xf32> to vector<4x4x4xf32>
    %278 = vector.shape_cast %275 : vector<4x4x4xf32> to vector<1x1x4x4x4xf32>
    tpu.vector_store %arg4[%c0_352, %c6_353, %c0_354, %c0_355, %c8_356], %278 {strides = array<i32>} : memref<1x8x4x4x32xf32, #tpu.memory_space<vmem>>, vector<1x1x4x4x4xf32>,
    %c0_357 = arith.constant 0 : index
    %279 = arith.index_cast %263 : i32 to index
    %c6_358 = arith.constant 6 : index
    %280 = vector.load %arg5[%c0_357, %279, %c6_358] : memref<4x18x18xf32, #tpu.memory_space<vmem>>, vector<4x4x4xf32>
    %c0_359 = arith.constant 0 : index
    %c6_360 = arith.constant 6 : index
    %c0_361 = arith.constant 0 : index
    %c0_362 = arith.constant 0 : index
    %c12_363 = arith.constant 12 : index
    %281 = vector.load %arg4[%c0_359, %c6_360, %c0_361, %c0_362, %c12_363] : memref<1x8x4x4x32xf32, #tpu.memory_space<vmem>>, vector<1x1x4x4x4xf32>
    %282 = vector.shape_cast %281 : vector<1x1x4x4x4xf32> to vector<4x4x4xf32>
    %283 = vector.shape_cast %280 : vector<4x4x4xf32> to vector<1x1x4x4x4xf32>
    tpu.vector_store %arg4[%c0_359, %c6_360, %c0_361, %c0_362, %c12_363], %283 {strides = array<i32>} : memref<1x8x4x4x32xf32, #tpu.memory_space<vmem>>, vector<1x1x4x4x4xf32>,
    %c0_364 = arith.constant 0 : index
    %284 = arith.index_cast %263 : i32 to index
    %c8_365 = arith.constant 8 : index
    %285 = vector.load %arg5[%c0_364, %284, %c8_365] : memref<4x18x18xf32, #tpu.memory_space<vmem>>, vector<4x4x4xf32>
    %c0_366 = arith.constant 0 : index
    %c6_367 = arith.constant 6 : index
    %c0_368 = arith.constant 0 : index
    %c0_369 = arith.constant 0 : index
    %c16_370 = arith.constant 16 : index
    %286 = vector.load %arg4[%c0_366, %c6_367, %c0_368, %c0_369, %c16_370] : memref<1x8x4x4x32xf32, #tpu.memory_space<vmem>>, vector<1x1x4x4x4xf32>
    %287 = vector.shape_cast %286 : vector<1x1x4x4x4xf32> to vector<4x4x4xf32>
    %288 = vector.shape_cast %285 : vector<4x4x4xf32> to vector<1x1x4x4x4xf32>
    tpu.vector_store %arg4[%c0_366, %c6_367, %c0_368, %c0_369, %c16_370], %288 {strides = array<i32>} : memref<1x8x4x4x32xf32, #tpu.memory_space<vmem>>, vector<1x1x4x4x4xf32>,
    %c0_371 = arith.constant 0 : index
    %289 = arith.index_cast %263 : i32 to index
    %c10_372 = arith.constant 10 : index
    %290 = vector.load %arg5[%c0_371, %289, %c10_372] : memref<4x18x18xf32, #tpu.memory_space<vmem>>, vector<4x4x4xf32>
    %c0_373 = arith.constant 0 : index
    %c6_374 = arith.constant 6 : index
    %c0_375 = arith.constant 0 : index
    %c0_376 = arith.constant 0 : index
    %c20_377 = arith.constant 20 : index
    %291 = vector.load %arg4[%c0_373, %c6_374, %c0_375, %c0_376, %c20_377] : memref<1x8x4x4x32xf32, #tpu.memory_space<vmem>>, vector<1x1x4x4x4xf32>
    %292 = vector.shape_cast %291 : vector<1x1x4x4x4xf32> to vector<4x4x4xf32>
    %293 = vector.shape_cast %290 : vector<4x4x4xf32> to vector<1x1x4x4x4xf32>
    tpu.vector_store %arg4[%c0_373, %c6_374, %c0_375, %c0_376, %c20_377], %293 {strides = array<i32>} : memref<1x8x4x4x32xf32, #tpu.memory_space<vmem>>, vector<1x1x4x4x4xf32>,
    %c0_378 = arith.constant 0 : index
    %294 = arith.index_cast %263 : i32 to index
    %c12_379 = arith.constant 12 : index
    %295 = vector.load %arg5[%c0_378, %294, %c12_379] : memref<4x18x18xf32, #tpu.memory_space<vmem>>, vector<4x4x4xf32>
    %c0_380 = arith.constant 0 : index
    %c6_381 = arith.constant 6 : index
    %c0_382 = arith.constant 0 : index
    %c0_383 = arith.constant 0 : index
    %c24_384 = arith.constant 24 : index
    %296 = vector.load %arg4[%c0_380, %c6_381, %c0_382, %c0_383, %c24_384] : memref<1x8x4x4x32xf32, #tpu.memory_space<vmem>>, vector<1x1x4x4x4xf32>
    %297 = vector.shape_cast %296 : vector<1x1x4x4x4xf32> to vector<4x4x4xf32>
    %298 = vector.shape_cast %295 : vector<4x4x4xf32> to vector<1x1x4x4x4xf32>
    tpu.vector_store %arg4[%c0_380, %c6_381, %c0_382, %c0_383, %c24_384], %298 {strides = array<i32>} : memref<1x8x4x4x32xf32, #tpu.memory_space<vmem>>, vector<1x1x4x4x4xf32>,
    %c0_385 = arith.constant 0 : index
    %299 = arith.index_cast %263 : i32 to index
    %c14_386 = arith.constant 14 : index
    %300 = vector.load %arg5[%c0_385, %299, %c14_386] : memref<4x18x18xf32, #tpu.memory_space<vmem>>, vector<4x4x4xf32>
    %c0_387 = arith.constant 0 : index
    %c6_388 = arith.constant 6 : index
    %c0_389 = arith.constant 0 : index
    %c0_390 = arith.constant 0 : index
    %c28_391 = arith.constant 28 : index
    %301 = vector.load %arg4[%c0_387, %c6_388, %c0_389, %c0_390, %c28_391] : memref<1x8x4x4x32xf32, #tpu.memory_space<vmem>>, vector<1x1x4x4x4xf32>
    %302 = vector.shape_cast %301 : vector<1x1x4x4x4xf32> to vector<4x4x4xf32>
    %303 = vector.shape_cast %300 : vector<4x4x4xf32> to vector<1x1x4x4x4xf32>
    tpu.vector_store %arg4[%c0_387, %c6_388, %c0_389, %c0_390, %c28_391], %303 {strides = array<i32>} : memref<1x8x4x4x32xf32, #tpu.memory_space<vmem>>, vector<1x1x4x4x4xf32>,
    %c8_i32_392 = arith.constant 8 : i32
    %304 = arith.muli %arg2, %c8_i32_392 : i32
    %c7_i32 = arith.constant 7 : i32
    %305 = arith.addi %304, %c7_i32 : i32
    %c2_i32_393 = arith.constant 2 : i32
    %306 = arith.muli %305, %c2_i32_393 : i32
    %c0_394 = arith.constant 0 : index
    %307 = arith.index_cast %306 : i32 to index
    %c0_395 = arith.constant 0 : index
    %308 = vector.load %arg5[%c0_394, %307, %c0_395] : memref<4x18x18xf32, #tpu.memory_space<vmem>>, vector<4x4x4xf32>
    %c0_396 = arith.constant 0 : index
    %c7 = arith.constant 7 : index
    %c0_397 = arith.constant 0 : index
    %c0_398 = arith.constant 0 : index
    %c0_399 = arith.constant 0 : index
    %309 = vector.load %arg4[%c0_396, %c7, %c0_397, %c0_398, %c0_399] : memref<1x8x4x4x32xf32, #tpu.memory_space<vmem>>, vector<1x1x4x4x4xf32>
    %310 = vector.shape_cast %309 : vector<1x1x4x4x4xf32> to vector<4x4x4xf32>
    %311 = vector.shape_cast %308 : vector<4x4x4xf32> to vector<1x1x4x4x4xf32>
    tpu.vector_store %arg4[%c0_396, %c7, %c0_397, %c0_398, %c0_399], %311 {strides = array<i32>} : memref<1x8x4x4x32xf32, #tpu.memory_space<vmem>>, vector<1x1x4x4x4xf32>,
    %c0_400 = arith.constant 0 : index
    %312 = arith.index_cast %306 : i32 to index
    %c2_401 = arith.constant 2 : index
    %313 = vector.load %arg5[%c0_400, %312, %c2_401] : memref<4x18x18xf32, #tpu.memory_space<vmem>>, vector<4x4x4xf32>
    %c0_402 = arith.constant 0 : index
    %c7_403 = arith.constant 7 : index
    %c0_404 = arith.constant 0 : index
    %c0_405 = arith.constant 0 : index
    %c4_406 = arith.constant 4 : index
    %314 = vector.load %arg4[%c0_402, %c7_403, %c0_404, %c0_405, %c4_406] : memref<1x8x4x4x32xf32, #tpu.memory_space<vmem>>, vector<1x1x4x4x4xf32>
    %315 = vector.shape_cast %314 : vector<1x1x4x4x4xf32> to vector<4x4x4xf32>
    %316 = vector.shape_cast %313 : vector<4x4x4xf32> to vector<1x1x4x4x4xf32>
    tpu.vector_store %arg4[%c0_402, %c7_403, %c0_404, %c0_405, %c4_406], %316 {strides = array<i32>} : memref<1x8x4x4x32xf32, #tpu.memory_space<vmem>>, vector<1x1x4x4x4xf32>,
    %c0_407 = arith.constant 0 : index
    %317 = arith.index_cast %306 : i32 to index
    %c4_408 = arith.constant 4 : index
    %318 = vector.load %arg5[%c0_407, %317, %c4_408] : memref<4x18x18xf32, #tpu.memory_space<vmem>>, vector<4x4x4xf32>
    %c0_409 = arith.constant 0 : index
    %c7_410 = arith.constant 7 : index
    %c0_411 = arith.constant 0 : index
    %c0_412 = arith.constant 0 : index
    %c8_413 = arith.constant 8 : index
    %319 = vector.load %arg4[%c0_409, %c7_410, %c0_411, %c0_412, %c8_413] : memref<1x8x4x4x32xf32, #tpu.memory_space<vmem>>, vector<1x1x4x4x4xf32>
    %320 = vector.shape_cast %319 : vector<1x1x4x4x4xf32> to vector<4x4x4xf32>
    %321 = vector.shape_cast %318 : vector<4x4x4xf32> to vector<1x1x4x4x4xf32>
    tpu.vector_store %arg4[%c0_409, %c7_410, %c0_411, %c0_412, %c8_413], %321 {strides = array<i32>} : memref<1x8x4x4x32xf32, #tpu.memory_space<vmem>>, vector<1x1x4x4x4xf32>,
    %c0_414 = arith.constant 0 : index
    %322 = arith.index_cast %306 : i32 to index
    %c6_415 = arith.constant 6 : index
    %323 = vector.load %arg5[%c0_414, %322, %c6_415] : memref<4x18x18xf32, #tpu.memory_space<vmem>>, vector<4x4x4xf32>
    %c0_416 = arith.constant 0 : index
    %c7_417 = arith.constant 7 : index
    %c0_418 = arith.constant 0 : index
    %c0_419 = arith.constant 0 : index
    %c12_420 = arith.constant 12 : index
    %324 = vector.load %arg4[%c0_416, %c7_417, %c0_418, %c0_419, %c12_420] : memref<1x8x4x4x32xf32, #tpu.memory_space<vmem>>, vector<1x1x4x4x4xf32>
    %325 = vector.shape_cast %324 : vector<1x1x4x4x4xf32> to vector<4x4x4xf32>
    %326 = vector.shape_cast %323 : vector<4x4x4xf32> to vector<1x1x4x4x4xf32>
    tpu.vector_store %arg4[%c0_416, %c7_417, %c0_418, %c0_419, %c12_420], %326 {strides = array<i32>} : memref<1x8x4x4x32xf32, #tpu.memory_space<vmem>>, vector<1x1x4x4x4xf32>,
    %c0_421 = arith.constant 0 : index
    %327 = arith.index_cast %306 : i32 to index
    %c8_422 = arith.constant 8 : index
    %328 = vector.load %arg5[%c0_421, %327, %c8_422] : memref<4x18x18xf32, #tpu.memory_space<vmem>>, vector<4x4x4xf32>
    %c0_423 = arith.constant 0 : index
    %c7_424 = arith.constant 7 : index
    %c0_425 = arith.constant 0 : index
    %c0_426 = arith.constant 0 : index
    %c16_427 = arith.constant 16 : index
    %329 = vector.load %arg4[%c0_423, %c7_424, %c0_425, %c0_426, %c16_427] : memref<1x8x4x4x32xf32, #tpu.memory_space<vmem>>, vector<1x1x4x4x4xf32>
    %330 = vector.shape_cast %329 : vector<1x1x4x4x4xf32> to vector<4x4x4xf32>
    %331 = vector.shape_cast %328 : vector<4x4x4xf32> to vector<1x1x4x4x4xf32>
    tpu.vector_store %arg4[%c0_423, %c7_424, %c0_425, %c0_426, %c16_427], %331 {strides = array<i32>} : memref<1x8x4x4x32xf32, #tpu.memory_space<vmem>>, vector<1x1x4x4x4xf32>,
    %c0_428 = arith.constant 0 : index
    %332 = arith.index_cast %306 : i32 to index
    %c10_429 = arith.constant 10 : index
    %333 = vector.load %arg5[%c0_428, %332, %c10_429] : memref<4x18x18xf32, #tpu.memory_space<vmem>>, vector<4x4x4xf32>
    %c0_430 = arith.constant 0 : index
    %c7_431 = arith.constant 7 : index
    %c0_432 = arith.constant 0 : index
    %c0_433 = arith.constant 0 : index
    %c20_434 = arith.constant 20 : index
    %334 = vector.load %arg4[%c0_430, %c7_431, %c0_432, %c0_433, %c20_434] : memref<1x8x4x4x32xf32, #tpu.memory_space<vmem>>, vector<1x1x4x4x4xf32>
    %335 = vector.shape_cast %334 : vector<1x1x4x4x4xf32> to vector<4x4x4xf32>
    %336 = vector.shape_cast %333 : vector<4x4x4xf32> to vector<1x1x4x4x4xf32>
    tpu.vector_store %arg4[%c0_430, %c7_431, %c0_432, %c0_433, %c20_434], %336 {strides = array<i32>} : memref<1x8x4x4x32xf32, #tpu.memory_space<vmem>>, vector<1x1x4x4x4xf32>,
    %c0_435 = arith.constant 0 : index
    %337 = arith.index_cast %306 : i32 to index
    %c12_436 = arith.constant 12 : index
    %338 = vector.load %arg5[%c0_435, %337, %c12_436] : memref<4x18x18xf32, #tpu.memory_space<vmem>>, vector<4x4x4xf32>
    %c0_437 = arith.constant 0 : index
    %c7_438 = arith.constant 7 : index
    %c0_439 = arith.constant 0 : index
    %c0_440 = arith.constant 0 : index
    %c24_441 = arith.constant 24 : index
    %339 = vector.load %arg4[%c0_437, %c7_438, %c0_439, %c0_440, %c24_441] : memref<1x8x4x4x32xf32, #tpu.memory_space<vmem>>, vector<1x1x4x4x4xf32>
    %340 = vector.shape_cast %339 : vector<1x1x4x4x4xf32> to vector<4x4x4xf32>
    %341 = vector.shape_cast %338 : vector<4x4x4xf32> to vector<1x1x4x4x4xf32>
    tpu.vector_store %arg4[%c0_437, %c7_438, %c0_439, %c0_440, %c24_441], %341 {strides = array<i32>} : memref<1x8x4x4x32xf32, #tpu.memory_space<vmem>>, vector<1x1x4x4x4xf32>,
    %c0_442 = arith.constant 0 : index
    %342 = arith.index_cast %306 : i32 to index
    %c14_443 = arith.constant 14 : index
    %343 = vector.load %arg5[%c0_442, %342, %c14_443] : memref<4x18x18xf32, #tpu.memory_space<vmem>>, vector<4x4x4xf32>
    %c0_444 = arith.constant 0 : index
    %c7_445 = arith.constant 7 : index
    %c0_446 = arith.constant 0 : index
    %c0_447 = arith.constant 0 : index
    %c28_448 = arith.constant 28 : index
    %344 = vector.load %arg4[%c0_444, %c7_445, %c0_446, %c0_447, %c28_448] : memref<1x8x4x4x32xf32, #tpu.memory_space<vmem>>, vector<1x1x4x4x4xf32>
    %345 = vector.shape_cast %344 : vector<1x1x4x4x4xf32> to vector<4x4x4xf32>
    %346 = vector.shape_cast %343 : vector<4x4x4xf32> to vector<1x1x4x4x4xf32>
    tpu.vector_store %arg4[%c0_444, %c7_445, %c0_446, %c0_447, %c28_448], %346 {strides = array<i32>} : memref<1x8x4x4x32xf32, #tpu.memory_space<vmem>>, vector<1x1x4x4x4xf32>,
    return
  }
  func.func @transform_0(%arg0: i32, %arg1: i32, %arg2: i32) -> (i32, i32, i32, i32) {
    %c0_i32 = arith.constant 0 : i32
    %c0_i32_0 = arith.constant 0 : i32
    %c0_i32_1 = arith.constant 0 : i32
    return %arg0, %arg1, %c0_i32, %c0_i32_0 : i32, i32, i32, i32
  }
  func.func @transform_1(%arg0: i32, %arg1: i32, %arg2: i32) -> (i32, i32, i32, i32, i32) {
    %c0_i32 = arith.constant 0 : i32
    %c0_i32_0 = arith.constant 0 : i32
    %c0_i32_1 = arith.constant 0 : i32
    return %arg0, %arg2, %arg1, %c0_i32, %c0_i32_0 : i32, i32, i32, i32, i32
  }
}

</mosaic_0001>

<llo_original>
// kernel: tpu_custom_call.1
$region0: #{tpu_custom_call.1}
  #allocation0 [shape = 'u32[]', space=smem, size = 0x4, offset = 0x4, fixed_abs, tag = 'smem constant byte address 0x4 - core index']
  #allocation1 [shape = 'u32[144,128]{1,0:T(1,128)}', space=vmem, size = 0x12000, scoped, tag = 'internal scratch']
  #allocation2 [shape = 'f32[4,18,18]{2,1,0:T(8,128)}', space=vmem, size = 0xc000, scoped, tag = 'scratch operand']
  %s0 = inlined_call_operand.hbm [shape: f32[2,4,16,16], index: 0, kind: input, shape index: {}]
  %s1 = inlined_call_operand.hbm [shape: f32[2,8,4,4,32], index: 1, kind: output, shape index: {}]
  %s2 = sld [smem:[#allocation0]]
  $region45: #{tpu_custom_call.1} parent=0
    _
  %s4 = ssub.s32 1, %s2
  %s5 = scalar_select 0, %s4, %s2
  $region1: #{tpu_custom_call.1} parent=0
    #allocation3 [shape = 'u8[65536]{0}', space=vmem, size = 0x10000, scoped, tag = 'input window, operand 0']
    #allocation4 [shape = 's32[2]{0}', space=sflag, size = 0x8, scoped, tag = 'scoped memory for tpu_custom_call.1']
    #allocation5 [shape = 's32[2]{0}', space=sflag, size = 0x8, scoped, tag = 'scoped memory for tpu_custom_call.1']
    #allocation6 [shape = 'u8[131072]{0}', space=vmem, size = 0x20000, scoped, tag = 'output window, operand 0']
    %6 = vsyncpa [#allocation4], 0
    %s7 = scalar_lea.sflag [#allocation4], 1
    %8 = vsyncpa %s7, 0
    %9 = vsyncpa [#allocation5], 0
    %s10 = scalar_lea.sflag [#allocation5], 1
    %11 = vsyncpa %s10, 0
    loop: start=0, step=1, limit=4
    $region2: #{tpu_custom_call.1} parent=1 // loop_pre_header
      _
    $region3: #{tpu_custom_call.1} parent=1 // loop_header
      %s13 = sphi 0, %s17
      %p14 = scmp.ge.s32.totalorder %s13, 4
      %s20 = sphi 0, %s39
      %s21 = sphi 0, %s35
      %s22 = sphi 0, %s31
      %s23 = sphi 0, %s20
      %s24 = sphi 0, %s21
      %s25 = sphi 0, %s22
      %s26 = sphi 0, %s23
      %s27 = sphi 0, %s24
      %s28 = sphi 0, %s25
      %s44 = sphi 0, %s46
      %s47 = sphi 0, %s44
      %s48 = sphi 0, %s47
      %s64 = sphi 0, %s48
      %s74 = sphi 0, %s76
      %s77 = sphi 0, %s74
      %s78 = sphi 0, %s77
      %s94 = sphi 0, %s78
    $region4: #{tpu_custom_call.1} parent=1 // loop_header_branch
      %16 = sbr.rel (%p14) target = $region8
    $region5: #{tpu_custom_call.1} parent=1 // loop_body
      %s18 = ssub.s32 %s13, 1
      %s19 = ssub.s32 %s13, 2
      %s29 = sadd.s32 1, %s22
      %p30 = scmp.ge.s32.totalorder %s29, 1
      %s31 = scalar_select %p30, 0, %s29
      %s32 = sadd.s32 1, %s21
      %s33 = scalar_select %p30, %s32, %s21
      %p34 = scmp.ge.s32.totalorder %s33, 1
      %s35 = scalar_select %p34, 0, %s33
      %s36 = sadd.s32 1, %s20
      %s37 = scalar_select %p34, %s36, %s20
      %p38 = scmp.ge.s32.totalorder %s37, 2
      %s39 = scalar_select %p38, 0, %s37
      %s40 = ssub.s32 %s20, %s39
      %s41 = ssub.s32 %s21, %s35
      %s42 = sor.u32 %s40, %s41
      %p43 = scmp.eq.s32.totalorder %s42, 0
      %s45 = sadd.s32 %s44, 1
      %s46 = scalar_select %p43, %s44, %s45
      %p49 = pneg %p43
      %p50 = scmp.eq.s32.totalorder %s13, 1
      %p51 = por %p49, %p50
      %p52 = scmp.ne.s32.totalorder %s44, %s47
      %p53 = scmp.eq.s32.totalorder %s13, 0
      %p54 = por %p52, %p53
      %p55 = scmp.ne.s32.totalorder %s44, %s47
      %p56 = scmp.eq.s32.totalorder %s18, 1
      %p57 = por %p55, %p56
      %p58 = scmp.ne.s32.totalorder %s47, %s48
      %p59 = scmp.eq.s32.totalorder %s18, 0
      %p60 = por %p58, %p59
      %p61 = scmp.ne.s32.totalorder %s47, %s48
      %p62 = scmp.eq.s32.totalorder %s19, 1
      %p63 = por %p61, %p62
      %p65 = scmp.ne.s32.totalorder %s48, %s64
      %p66 = scmp.eq.s32.totalorder %s19, 0
      %p67 = por %p65, %p66
      %s68 = ssub.s32 %s20, %s39
      %s69 = ssub.s32 %s22, %s31
      %s70 = sor.u32 %s68, %s69
      %s71 = ssub.s32 %s21, %s35
      %s72 = sor.u32 %s70, %s71
      %p73 = scmp.eq.s32.totalorder %s72, 0
      %s75 = sadd.s32 %s74, 1
      %s76 = scalar_select %p73, %s74, %s75
      %p79 = pneg %p73
      %p80 = scmp.eq.s32.totalorder %s13, 1
      %p81 = por %p79, %p80
      %p82 = scmp.ne.s32.totalorder %s74, %s77
      %p83 = scmp.eq.s32.totalorder %s13, 0
      %p84 = por %p82, %p83
      %p85 = scmp.ne.s32.totalorder %s74, %s77
      %p86 = scmp.eq.s32.totalorder %s18, 1
      %p87 = por %p85, %p86
      %p88 = scmp.ne.s32.totalorder %s77, %s78
      %p89 = scmp.eq.s32.totalorder %s18, 0
      %p90 = por %p88, %p89
      %p91 = scmp.ne.s32.totalorder %s77, %s78
      %p92 = scmp.eq.s32.totalorder %s19, 1
      %p93 = por %p91, %p92
      %p95 = scmp.ne.s32.totalorder %s78, %s94
      %p96 = scmp.eq.s32.totalorder %s19, 0
      %p97 = por %p95, %p96
      %p98 = scmp.le.s32.totalorder 1, %s13
      %p99 = scmp.lt.s32.totalorder %s13, 3
      %p100 = pnand %p98, %p99
      %p101 = pneg %p100
      // Predicated region
      $region9: #{tpu_custom_call.1} parent=5 // pred_check
        _
      $region10: #{tpu_custom_call.1} parent=5 // pred_check_branch
        %103 = sbr.rel (%p100) target = $region12
      $region11: #{tpu_custom_call.1} parent=5 // pred_region
        %s104 = ssub.s32 %s13, 1
      $region12: #{tpu_custom_call.1} parent=5 // pred_fallthru
        _
      %p105 = scmp.lt.s32.totalorder %s13, 2
      // Predicated region
      $region13: #{tpu_custom_call.1} parent=5 // pred_check
        %p106 = pneg %p105
      $region14: #{tpu_custom_call.1} parent=5 // pred_check_branch
        %108 = sbr.rel (%p106) target = $region16
      $region15: #{tpu_custom_call.1} parent=5 // pred_region
        // Predicated region
        $region17: #{tpu_custom_call.1} parent=15 // pred_check
          %p109 = pneg %p54
        $region18: #{tpu_custom_call.1} parent=15 // pred_check_branch
          %111 = sbr.rel (%p109) target = $region20
        $region19: #{tpu_custom_call.1} parent=15 // pred_region
          %s112 = sand.u32 %s44, 1
          %s113 = scalar_lea.sflag [#allocation4], %s112
          %s114 = sand.u32 %s44, 1
          %s115 = smul.addr %s114, 64
          %s116 = scalar_lea.vmem [#allocation3], %s115
          %s117 = smul.u32 4, %s21
          %s119 = ssub.s32 1024, 1024
          %120 = vsyncadd %s113, %s119
          %s121 = smul.addr %s117, 2
          %s122 = smul.addr %s20, 8
          %s123 = sadd.s32 %s121, %s122
          %s124 = smul.addr %s123, 128
          %s125 = scalar_lea.hbm %s0, %s124
          %s126 = sshll.u32 %s116, 4
          %s127 = int_to_ptr.vmem [resolvable:$true] %s126
          %132 = dma.hbm_to_vmem [thread:$0]  %s125, 1024, %s127, %s113, 128, 128, 8
        $region20: #{tpu_custom_call.1} parent=15 // pred_fallthru
          _
      $region16: #{tpu_custom_call.1} parent=5 // pred_fallthru
        _
      %p133 = scmp.le.s32.totalorder 1, %s13
      %p134 = scmp.lt.s32.totalorder %s13, 3
      %p135 = pnand %p133, %p134
      %p136 = pneg %p135
      // Predicated region
      $region21: #{tpu_custom_call.1} parent=5 // pred_check
        _
      $region22: #{tpu_custom_call.1} parent=5 // pred_check_branch
        %138 = sbr.rel (%p135) target = $region24
      $region23: #{tpu_custom_call.1} parent=5 // pred_region
        %s139 = ssub.s32 %s13, 1
        %s140 = sand.u32 %s47, 1
        %s141 = scalar_lea.sflag [#allocation4], %s140
        %s142 = sand.u32 %s47, 1
        %s143 = smul.addr %s142, 64
        %s144 = scalar_lea.vmem [#allocation3], %s143
        // Predicated region
        $region25: #{tpu_custom_call.1} parent=23 // pred_check
          %p145 = pneg %p60
        $region26: #{tpu_custom_call.1} parent=23 // pred_check_branch
          %147 = sbr.rel (%p145) target = $region28
        $region27: #{tpu_custom_call.1} parent=23 // pred_region
          %148 = dma.done %s141, 1024
        $region28: #{tpu_custom_call.1} parent=23 // pred_fallthru
          _
        %s149 = sand.u32 %s47, 1
        %s150 = scalar_lea.sflag [#allocation4], %s149
        %s151 = sand.u32 %s47, 1
        %s152 = smul.addr %s151, 64
        %s153 = scalar_lea.vmem [#allocation3], %s152
        %p154 = pneg %p60
        %p155 = pneg %p57
        %p156 = pneg %p90
        %p157 = pneg %p87
        %s158 = sand.u32 %s77, 1
        %s159 = scalar_lea.sflag [#allocation5], %s158
        %s160 = sand.u32 %s77, 1
        %s161 = smul.addr %s160, 128
        %s162 = scalar_lea.vmem [#allocation6], %s161
        %s163 = smul.u32 4, %s24
        %s164 = smul.u32 8, %s25
        %s165 = smul.u32 4, %s24
        %p166 = scmp.eq.s32.totalorder %s25, 0
        // Predicated region
        $region29: #{tpu_custom_call.1} parent=23 // pred_check
          %p167 = pneg %p166
        $region30: #{tpu_custom_call.1} parent=23 // pred_check_branch
          %169 = sbr.rel (%p167) target = $region32
        $region31: #{tpu_custom_call.1} parent=23 // pred_region
          %vm170 = vcmask 139264
          %171 = vst.msk [vmem:[#allocation2] sm:$0x1] %vm170, 0.0
          %172 = vst.msk [vmem:[#allocation2 + $0x18] sm:$0x1] %vm170, 0.0
          %173 = vst.msk [vmem:[#allocation2 + $0x30] sm:$0x1] %vm170, 0.0
          %174 = vst.msk [vmem:[#allocation2 + $0x48] sm:$0x1] %vm170, 0.0
          %175 = vst.msk [vmem:[#allocation2 + $0x11] sm:$0x1] %vm170, 0.0
          %176 = vst.msk [vmem:[#allocation2 + $0x29] sm:$0x1] %vm170, 0.0
          %177 = vst.msk [vmem:[#allocation2 + $0x41] sm:$0x1] %vm170, 0.0
          %178 = vst.msk [vmem:[#allocation2 + $0x59] sm:$0x1] %vm170, 0.0
          %vm179 = vcmask 7168
          %180 = vst.msk [vmem:[#allocation2] sm:$0xff] %vm179, 0.0
          %181 = vst.msk [vmem:[#allocation2 + $0x8] sm:$0xff] %vm179, 0.0
          %vm182 = vcmask 1024
          %183 = vst.msk [vmem:[#allocation2 + $0x10] sm:$0x3] %vm182, 0.0
          %184 = vst.msk [vmem:[#allocation2 + $0x18] sm:$0xff] %vm179, 0.0
          %185 = vst.msk [vmem:[#allocation2 + $0x20] sm:$0xff] %vm179, 0.0
          %186 = vst.msk [vmem:[#allocation2 + $0x28] sm:$0x3] %vm182, 0.0
          %187 = vst.msk [vmem:[#allocation2 + $0x30] sm:$0xff] %vm179, 0.0
          %188 = vst.msk [vmem:[#allocation2 + $0x38] sm:$0xff] %vm179, 0.0
          %189 = vst.msk [vmem:[#allocation2 + $0x40] sm:$0x3] %vm182, 0.0
          %190 = vst.msk [vmem:[#allocation2 + $0x48] sm:$0xff] %vm179, 0.0
          %191 = vst.msk [vmem:[#allocation2 + $0x50] sm:$0xff] %vm179, 0.0
          %192 = vst.msk [vmem:[#allocation2 + $0x58] sm:$0x3] %vm182, 0.0
          %vm193 = vcmask 146568
          %194 = vst.msk [vmem:[#allocation2] sm:$0xff] %vm193, 0.0
          %195 = vst.msk [vmem:[#allocation2 + $0x8] sm:$0xff] %vm193, 0.0
          %vm196 = vcmask 140424
          %197 = vst.msk [vmem:[#allocation2 + $0x10] sm:$0x3] %vm196, 0.0
          %198 = vst.msk [vmem:[#allocation2 + $0x18] sm:$0xff] %vm193, 0.0
          %199 = vst.msk [vmem:[#allocation2 + $0x20] sm:$0xff] %vm193, 0.0
          %200 = vst.msk [vmem:[#allocation2 + $0x28] sm:$0x3] %vm196, 0.0
          %201 = vst.msk [vmem:[#allocation2 + $0x30] sm:$0xff] %vm193, 0.0
          %202 = vst.msk [vmem:[#allocation2 + $0x38] sm:$0xff] %vm193, 0.0
          %203 = vst.msk [vmem:[#allocation2 + $0x40] sm:$0x3] %vm196, 0.0
          %204 = vst.msk [vmem:[#allocation2 + $0x48] sm:$0xff] %vm193, 0.0
          %205 = vst.msk [vmem:[#allocation2 + $0x50] sm:$0xff] %vm193, 0.0
          %206 = vst.msk [vmem:[#allocation2 + $0x58] sm:$0x3] %vm196, 0.0
          %v207 = vld [vmem:[%s144] sm:$0xff]
          %v208 = vld [vmem:[%s144 + $0x8] sm:$0xff]
          %v209 = vld [vmem:[%s144 + $0x10] sm:$0xff]
          %v210 = vld [vmem:[%s144 + $0x18] sm:$0xff]
          %v211 = vld [vmem:[%s144 + $0x20] sm:$0xff]
          %v212 = vld [vmem:[%s144 + $0x28] sm:$0xff]
          %v213 = vld [vmem:[%s144 + $0x30] sm:$0xff]
          %v214 = vld [vmem:[%s144 + $0x38] sm:$0xff]
          %223 = vrot.lane.b32.xlu0 %v207, 1
          %v224 = vpop.permute.xlu0 %223
          %225 = vrot.lane.b32.xlu0 %v208, 1
          %v226 = vpop.permute.xlu0 %225
          %227 = vrot.lane.b32.xlu0 %v209, 1
          %v228 = vpop.permute.xlu0 %227
          %229 = vrot.lane.b32.xlu0 %v210, 1
          %v230 = vpop.permute.xlu0 %229
          %231 = vrot.lane.b32.xlu0 %v211, 1
          %v232 = vpop.permute.xlu0 %231
          %233 = vrot.lane.b32.xlu0 %v212, 1
          %v234 = vpop.permute.xlu0 %233
          %235 = vrot.lane.b32.xlu0 %v213, 1
          %v236 = vpop.permute.xlu0 %235
          %237 = vrot.lane.b32.xlu0 %v214, 1
          %v238 = vpop.permute.xlu0 %237
          %vm247 = vcmask 138248
          %248 = vst.msk [vmem:[#allocation2 + $0x1] sm:$0xff] %vm247, %v224
          %249 = vst.msk [vmem:[#allocation2 + $0x9] sm:$0xff] %vm247, %v226
          %250 = vst.msk [vmem:[#allocation2 + $0x19] sm:$0xff] %vm247, %v228
          %251 = vst.msk [vmem:[#allocation2 + $0x21] sm:$0xff] %vm247, %v230
          %252 = vst.msk [vmem:[#allocation2 + $0x31] sm:$0xff] %vm247, %v232
          %253 = vst.msk [vmem:[#allocation2 + $0x39] sm:$0xff] %vm247, %v234
          %254 = vst.msk [vmem:[#allocation2 + $0x49] sm:$0xff] %vm247, %v236
          %255 = vst.msk [vmem:[#allocation2 + $0x51] sm:$0xff] %vm247, %v238
        $region32: #{tpu_custom_call.1} parent=23 // pred_fallthru
          _
        %s256 = smul.u32 %s25, 16
        %s257 = scalar_lea.vmem [#allocation2], %s256
        %v258 = vld [vmem:[%s257] sm:$0xf]
        %v259 = vld [vmem:[%s257 + $0x18] sm:$0xf]
        %v260 = vld [vmem:[%s257 + $0x30] sm:$0xf]
        %v261 = vld [vmem:[%s257 + $0x48] sm:$0xf]
        %266 = vrot.lane.b32.xlu0 %v258, 2
        %v267 = vpop.permute.xlu0 %266
        %268 = vrot.lane.b32.xlu0 %v259, 2
        %v269 = vpop.permute.xlu0 %268
        %270 = vrot.lane.b32.xlu0 %v260, 2
        %v271 = vpop.permute.xlu0 %270
        %272 = vrot.lane.b32.xlu0 %v261, 2
        %v273 = vpop.permute.xlu0 %272
        %278 = vrot.lane.b32.xlu0 %v258, 4
        %v279 = vpop.permute.xlu0 %278
        %280 = vrot.lane.b32.xlu0 %v259, 4
        %v281 = vpop.permute.xlu0 %280
        %282 = vrot.lane.b32.xlu0 %v260, 4
        %v283 = vpop.permute.xlu0 %282
        %284 = vrot.lane.b32.xlu0 %v261, 4
        %v285 = vpop.permute.xlu0 %284
        %290 = vrot.lane.b32.xlu0 %v258, 6
        %v291 = vpop.permute.xlu0 %290
        %292 = vrot.lane.b32.xlu0 %v259, 6
        %v293 = vpop.permute.xlu0 %292
        %294 = vrot.lane.b32.xlu0 %v260, 6
        %v295 = vpop.permute.xlu0 %294
        %296 = vrot.lane.b32.xlu0 %v261, 6
        %v297 = vpop.permute.xlu0 %296
        %302 = vrot.lane.b32.xlu0 %v258, 8
        %v303 = vpop.permute.xlu0 %302
        %304 = vrot.lane.b32.xlu0 %v259, 8
        %v305 = vpop.permute.xlu0 %304
        %306 = vrot.lane.b32.xlu0 %v260, 8
        %v307 = vpop.permute.xlu0 %306
        %308 = vrot.lane.b32.xlu0 %v261, 8
        %v309 = vpop.permute.xlu0 %308
        %314 = vrot.lane.b32.xlu0 %v258, 10
        %v315 = vpop.permute.xlu0 %314
        %316 = vrot.lane.b32.xlu0 %v259, 10
        %v317 = vpop.permute.xlu0 %316
        %318 = vrot.lane.b32.xlu0 %v260, 10
        %v319 = vpop.permute.xlu0 %318
        %320 = vrot.lane.b32.xlu0 %v261, 10
        %v321 = vpop.permute.xlu0 %320
        %326 = vrot.lane.b32.xlu0 %v258, 12
        %v327 = vpop.permute.xlu0 %326
        %328 = vrot.lane.b32.xlu0 %v259, 12
        %v329 = vpop.permute.xlu0 %328
        %330 = vrot.lane.b32.xlu0 %v260, 12
        %v331 = vpop.permute.xlu0 %330
        %332 = vrot.lane.b32.xlu0 %v261, 12
        %v333 = vpop.permute.xlu0 %332
        %338 = vrot.lane.b32.xlu0 %v258, 14
        %v339 = vpop.permute.xlu0 %338
        %340 = vrot.lane.b32.xlu0 %v259, 14
        %v341 = vpop.permute.xlu0 %340
        %342 = vrot.lane.b32.xlu0 %v260, 14
        %v343 = vpop.permute.xlu0 %342
        %344 = vrot.lane.b32.xlu0 %v261, 14
        %v345 = vpop.permute.xlu0 %344
        %vm350 = vcmask 31744
        %v351 = vsel %vm350, %v258, %v267
        %v352 = vsel %vm350, %v259, %v269
        %v353 = vsel %vm350, %v260, %v271
        %v354 = vsel %vm350, %v261, %v273
        %vm355 = vcmask 64512
        %v356 = vsel %vm355, %v351, %v279
        %v357 = vsel %vm355, %v352, %v281
        %v358 = vsel %vm355, %v353, %v283
        %v359 = vsel %vm355, %v354, %v285
        %vm360 = vcmask 97280
        %v361 = vsel %vm360, %v356, %v291
        %v362 = vsel %vm360, %v357, %v293
        %v363 = vsel %vm360, %v358, %v295
        %v364 = vsel %vm360, %v359, %v297
        %vm365 = vcmask 130048
        %v366 = vsel %vm365, %v361, %v303
        %v367 = vsel %vm365, %v362, %v305
        %v368 = vsel %vm365, %v363, %v307
        %v369 = vsel %vm365, %v364, %v309
        %vm370 = vcmask 162816
        %v371 = vsel %vm370, %v366, %v315
        %v372 = vsel %vm370, %v367, %v317
        %v373 = vsel %vm370, %v368, %v319
        %v374 = vsel %vm370, %v369, %v321
        %vm375 = vcmask 195584
        %v376 = vsel %vm375, %v371, %v327
        %v377 = vsel %vm375, %v372, %v329
        %v378 = vsel %vm375, %v373, %v331
        %v379 = vsel %vm375, %v374, %v333
        %vm380 = vcmask 228352
        %v381 = vsel %vm380, %v376, %v339
        %v382 = vsel %vm380, %v377, %v341
        %v383 = vsel %vm380, %v378, %v343
        %v384 = vsel %vm380, %v379, %v345
        %vm385 = vcmask 257024
        %386 = vst.msk [vmem:[%s162] sm:$0xf] %vm385, %v381
        %387 = vst.msk [vmem:[%s162 + $0x4] sm:$0xf] %vm385, %v382
        %388 = vst.msk [vmem:[%s162 + $0x8] sm:$0xf] %vm385, %v383
        %389 = vst.msk [vmem:[%s162 + $0xc] sm:$0xf] %vm385, %v384
        %s390 = smul.u32 %s25, 8
        %s391 = sadd.s32 %s390, 1
        %s392 = smul.u32 %s391, 2
        %s393 = scalar_lea.vmem [#allocation2], %s392
        %v394 = vld [vmem:[%s393] sm:$0xf]
        %v395 = vld [vmem:[%s393 + $0x18] sm:$0xf]
        %v396 = vld [vmem:[%s393 + $0x30] sm:$0xf]
        %v397 = vld [vmem:[%s393 + $0x48] sm:$0xf]
        %402 = vrot.lane.b32.xlu0 %v394, 2
        %v403 = vpop.permute.xlu0 %402
        %404 = vrot.lane.b32.xlu0 %v395, 2
        %v405 = vpop.permute.xlu0 %404
        %406 = vrot.lane.b32.xlu0 %v396, 2
        %v407 = vpop.permute.xlu0 %406
        %408 = vrot.lane.b32.xlu0 %v397, 2
        %v409 = vpop.permute.xlu0 %408
        %414 = vrot.lane.b32.xlu0 %v394, 4
        %v415 = vpop.permute.xlu0 %414
        %416 = vrot.lane.b32.xlu0 %v395, 4
        %v417 = vpop.permute.xlu0 %416
        %418 = vrot.lane.b32.xlu0 %v396, 4
        %v419 = vpop.permute.xlu0 %418
        %420 = vrot.lane.b32.xlu0 %v397, 4
        %v421 = vpop.permute.xlu0 %420
        %426 = vrot.lane.b32.xlu0 %v394, 6
        %v427 = vpop.permute.xlu0 %426
        %428 = vrot.lane.b32.xlu0 %v395, 6
        %v429 = vpop.permute.xlu0 %428
        %430 = vrot.lane.b32.xlu0 %v396, 6
        %v431 = vpop.permute.xlu0 %430
        %432 = vrot.lane.b32.xlu0 %v397, 6
        %v433 = vpop.permute.xlu0 %432
        %438 = vrot.lane.b32.xlu0 %v394, 8
        %v439 = vpop.permute.xlu0 %438
        %440 = vrot.lane.b32.xlu0 %v395, 8
        %v441 = vpop.permute.xlu0 %440
        %442 = vrot.lane.b32.xlu0 %v396, 8
        %v443 = vpop.permute.xlu0 %442
        %444 = vrot.lane.b32.xlu0 %v397, 8
        %v445 = vpop.permute.xlu0 %444
        %450 = vrot.lane.b32.xlu0 %v394, 10
        %v451 = vpop.permute.xlu0 %450
        %452 = vrot.lane.b32.xlu0 %v395, 10
        %v453 = vpop.permute.xlu0 %452
        %454 = vrot.lane.b32.xlu0 %v396, 10
        %v455 = vpop.permute.xlu0 %454
        %456 = vrot.lane.b32.xlu0 %v397, 10
        %v457 = vpop.permute.xlu0 %456
        %462 = vrot.lane.b32.xlu0 %v394, 12
        %v463 = vpop.permute.xlu0 %462
        %464 = vrot.lane.b32.xlu0 %v395, 12
        %v465 = vpop.permute.xlu0 %464
        %466 = vrot.lane.b32.xlu0 %v396, 12
        %v467 = vpop.permute.xlu0 %466
        %468 = vrot.lane.b32.xlu0 %v397, 12
        %v469 = vpop.permute.xlu0 %468
        %474 = vrot.lane.b32.xlu0 %v394, 14
        %v475 = vpop.permute.xlu0 %474
        %476 = vrot.lane.b32.xlu0 %v395, 14
        %v477 = vpop.permute.xlu0 %476
        %478 = vrot.lane.b32.xlu0 %v396, 14
        %v479 = vpop.permute.xlu0 %478
        %480 = vrot.lane.b32.xlu0 %v397, 14
        %v481 = vpop.permute.xlu0 %480
        %v486 = vsel %vm350, %v394, %v403
        %v487 = vsel %vm350, %v395, %v405
        %v488 = vsel %vm350, %v396, %v407
        %v489 = vsel %vm350, %v397, %v409
        %v490 = vsel %vm355, %v486, %v415
        %v491 = vsel %vm355, %v487, %v417
        %v492 = vsel %vm355, %v488, %v419
        %v493 = vsel %vm355, %v489, %v421
        %v494 = vsel %vm360, %v490, %v427
        %v495 = vsel %vm360, %v491, %v429
        %v496 = vsel %vm360, %v492, %v431
        %v497 = vsel %vm360, %v493, %v433
        %v498 = vsel %vm365, %v494, %v439
        %v499 = vsel %vm365, %v495, %v441
        %v500 = vsel %vm365, %v496, %v443
        %v501 = vsel %vm365, %v497, %v445
        %v502 = vsel %vm370, %v498, %v451
        %v503 = vsel %vm370, %v499, %v453
        %v504 = vsel %vm370, %v500, %v455
        %v505 = vsel %vm370, %v501, %v457
        %v506 = vsel %vm375, %v502, %v463
        %v507 = vsel %vm375, %v503, %v465
        %v508 = vsel %vm375, %v504, %v467
        %v509 = vsel %vm375, %v505, %v469
        %v510 = vsel %vm380, %v506, %v475
        %v511 = vsel %vm380, %v507, %v477
        %v512 = vsel %vm380, %v508, %v479
        %v513 = vsel %vm380, %v509, %v481
        %s514 = scalar_lea.vmem %s162, 16 [#allocation6]
        %515 = vst.msk [vmem:[%s514] sm:$0xf] %vm385, %v510
        %516 = vst.msk [vmem:[%s514 + $0x4] sm:$0xf] %vm385, %v511
        %517 = vst.msk [vmem:[%s514 + $0x8] sm:$0xf] %vm385, %v512
        %518 = vst.msk [vmem:[%s514 + $0xc] sm:$0xf] %vm385, %v513
        %s519 = sadd.s32 %s390, 2
        %s520 = smul.u32 %s519, 2
        %s521 = scalar_lea.vmem [#allocation2], %s520
        %v522 = vld [vmem:[%s521] sm:$0xf]
        %v523 = vld [vmem:[%s521 + $0x18] sm:$0xf]
        %v524 = vld [vmem:[%s521 + $0x30] sm:$0xf]
        %v525 = vld [vmem:[%s521 + $0x48] sm:$0xf]
        %530 = vrot.lane.b32.xlu0 %v522, 2
        %v531 = vpop.permute.xlu0 %530
        %532 = vrot.lane.b32.xlu0 %v523, 2
        %v533 = vpop.permute.xlu0 %532
        %534 = vrot.lane.b32.xlu0 %v524, 2
        %v535 = vpop.permute.xlu0 %534
        %536 = vrot.lane.b32.xlu0 %v525, 2
        %v537 = vpop.permute.xlu0 %536
        %542 = vrot.lane.b32.xlu0 %v522, 4
        %v543 = vpop.permute.xlu0 %542
        %544 = vrot.lane.b32.xlu0 %v523, 4
        %v545 = vpop.permute.xlu0 %544
        %546 = vrot.lane.b32.xlu0 %v524, 4
        %v547 = vpop.permute.xlu0 %546
        %548 = vrot.lane.b32.xlu0 %v525, 4
        %v549 = vpop.permute.xlu0 %548
        %554 = vrot.lane.b32.xlu0 %v522, 6
        %v555 = vpop.permute.xlu0 %554
        %556 = vrot.lane.b32.xlu0 %v523, 6
        %v557 = vpop.permute.xlu0 %556
        %558 = vrot.lane.b32.xlu0 %v524, 6
        %v559 = vpop.permute.xlu0 %558
        %560 = vrot.lane.b32.xlu0 %v525, 6
        %v561 = vpop.permute.xlu0 %560
        %566 = vrot.lane.b32.xlu0 %v522, 8
        %v567 = vpop.permute.xlu0 %566
        %568 = vrot.lane.b32.xlu0 %v523, 8
        %v569 = vpop.permute.xlu0 %568
        %570 = vrot.lane.b32.xlu0 %v524, 8
        %v571 = vpop.permute.xlu0 %570
        %572 = vrot.lane.b32.xlu0 %v525, 8
        %v573 = vpop.permute.xlu0 %572
        %578 = vrot.lane.b32.xlu0 %v522, 10
        %v579 = vpop.permute.xlu0 %578
        %580 = vrot.lane.b32.xlu0 %v523, 10
        %v581 = vpop.permute.xlu0 %580
        %582 = vrot.lane.b32.xlu0 %v524, 10
        %v583 = vpop.permute.xlu0 %582
        %584 = vrot.lane.b32.xlu0 %v525, 10
        %v585 = vpop.permute.xlu0 %584
        %590 = vrot.lane.b32.xlu0 %v522, 12
        %v591 = vpop.permute.xlu0 %590
        %592 = vrot.lane.b32.xlu0 %v523, 12
        %v593 = vpop.permute.xlu0 %592
        %594 = vrot.lane.b32.xlu0 %v524, 12
        %v595 = vpop.permute.xlu0 %594
        %596 = vrot.lane.b32.xlu0 %v525, 12
        %v597 = vpop.permute.xlu0 %596
        %602 = vrot.lane.b32.xlu0 %v522, 14
        %v603 = vpop.permute.xlu0 %602
        %604 = vrot.lane.b32.xlu0 %v523, 14
        %v605 = vpop.permute.xlu0 %604
        %606 = vrot.lane.b32.xlu0 %v524, 14
        %v607 = vpop.permute.xlu0 %606
        %608 = vrot.lane.b32.xlu0 %v525, 14
        %v609 = vpop.permute.xlu0 %608
        %v614 = vsel %vm350, %v522, %v531
        %v615 = vsel %vm350, %v523, %v533
        %v616 = vsel %vm350, %v524, %v535
        %v617 = vsel %vm350, %v525, %v537
        %v618 = vsel %vm355, %v614, %v543
        %v619 = vsel %vm355, %v615, %v545
        %v620 = vsel %vm355, %v616, %v547
        %v621 = vsel %vm355, %v617, %v549
        %v622 = vsel %vm360, %v618, %v555
        %v623 = vsel %vm360, %v619, %v557
        %v624 = vsel %vm360, %v620, %v559
        %v625 = vsel %vm360, %v621, %v561
        %v626 = vsel %vm365, %v622, %v567
        %v627 = vsel %vm365, %v623, %v569
        %v628 = vsel %vm365, %v624, %v571
        %v629 = vsel %vm365, %v625, %v573
        %v630 = vsel %vm370, %v626, %v579
        %v631 = vsel %vm370, %v627, %v581
        %v632 = vsel %vm370, %v628, %v583
        %v633 = vsel %vm370, %v629, %v585
        %v634 = vsel %vm375, %v630, %v591
        %v635 = vsel %vm375, %v631, %v593
        %v636 = vsel %vm375, %v632, %v595
        %v637 = vsel %vm375, %v633, %v597
        %v638 = vsel %vm380, %v634, %v603
        %v639 = vsel %vm380, %v635, %v605
        %v640 = vsel %vm380, %v636, %v607
        %v641 = vsel %vm380, %v637, %v609
        %s642 = scalar_lea.vmem %s162, 32 [#allocation6]
        %643 = vst.msk [vmem:[%s642] sm:$0xf] %vm385, %v638
        %644 = vst.msk [vmem:[%s642 + $0x4] sm:$0xf] %vm385, %v639
        %645 = vst.msk [vmem:[%s642 + $0x8] sm:$0xf] %vm385, %v640
        %646 = vst.msk [vmem:[%s642 + $0xc] sm:$0xf] %vm385, %v641
        %s647 = sadd.s32 %s390, 3
        %s648 = smul.u32 %s647, 2
        %s649 = scalar_lea.vmem [#allocation2], %s648
        %v650 = vld [vmem:[%s649] sm:$0xf]
        %v651 = vld [vmem:[%s649 + $0x18] sm:$0xf]
        %v652 = vld [vmem:[%s649 + $0x30] sm:$0xf]
        %v653 = vld [vmem:[%s649 + $0x48] sm:$0xf]
        %658 = vrot.lane.b32.xlu0 %v650, 2
        %v659 = vpop.permute.xlu0 %658
        %660 = vrot.lane.b32.xlu0 %v651, 2
        %v661 = vpop.permute.xlu0 %660
        %662 = vrot.lane.b32.xlu0 %v652, 2
        %v663 = vpop.permute.xlu0 %662
        %664 = vrot.lane.b32.xlu0 %v653, 2
        %v665 = vpop.permute.xlu0 %664
        %670 = vrot.lane.b32.xlu0 %v650, 4
        %v671 = vpop.permute.xlu0 %670
        %672 = vrot.lane.b32.xlu0 %v651, 4
        %v673 = vpop.permute.xlu0 %672
        %674 = vrot.lane.b32.xlu0 %v652, 4
        %v675 = vpop.permute.xlu0 %674
        %676 = vrot.lane.b32.xlu0 %v653, 4
        %v677 = vpop.permute.xlu0 %676
        %682 = vrot.lane.b32.xlu0 %v650, 6
        %v683 = vpop.permute.xlu0 %682
        %684 = vrot.lane.b32.xlu0 %v651, 6
        %v685 = vpop.permute.xlu0 %684
        %686 = vrot.lane.b32.xlu0 %v652, 6
        %v687 = vpop.permute.xlu0 %686
        %688 = vrot.lane.b32.xlu0 %v653, 6
        %v689 = vpop.permute.xlu0 %688
        %694 = vrot.lane.b32.xlu0 %v650, 8
        %v695 = vpop.permute.xlu0 %694
        %696 = vrot.lane.b32.xlu0 %v651, 8
        %v697 = vpop.permute.xlu0 %696
        %698 = vrot.lane.b32.xlu0 %v652, 8
        %v699 = vpop.permute.xlu0 %698
        %700 = vrot.lane.b32.xlu0 %v653, 8
        %v701 = vpop.permute.xlu0 %700
        %706 = vrot.lane.b32.xlu0 %v650, 10
        %v707 = vpop.permute.xlu0 %706
        %708 = vrot.lane.b32.xlu0 %v651, 10
        %v709 = vpop.permute.xlu0 %708
        %710 = vrot.lane.b32.xlu0 %v652, 10
        %v711 = vpop.permute.xlu0 %710
        %712 = vrot.lane.b32.xlu0 %v653, 10
        %v713 = vpop.permute.xlu0 %712
        %718 = vrot.lane.b32.xlu0 %v650, 12
        %v719 = vpop.permute.xlu0 %718
        %720 = vrot.lane.b32.xlu0 %v651, 12
        %v721 = vpop.permute.xlu0 %720
        %722 = vrot.lane.b32.xlu0 %v652, 12
        %v723 = vpop.permute.xlu0 %722
        %724 = vrot.lane.b32.xlu0 %v653, 12
        %v725 = vpop.permute.xlu0 %724
        %730 = vrot.lane.b32.xlu0 %v650, 14
        %v731 = vpop.permute.xlu0 %730
        %732 = vrot.lane.b32.xlu0 %v651, 14
        %v733 = vpop.permute.xlu0 %732
        %734 = vrot.lane.b32.xlu0 %v652, 14
        %v735 = vpop.permute.xlu0 %734
        %736 = vrot.lane.b32.xlu0 %v653, 14
        %v737 = vpop.permute.xlu0 %736
        %v742 = vsel %vm350, %v650, %v659
        %v743 = vsel %vm350, %v651, %v661
        %v744 = vsel %vm350, %v652, %v663
        %v745 = vsel %vm350, %v653, %v665
        %v746 = vsel %vm355, %v742, %v671
        %v747 = vsel %vm355, %v743, %v673
        %v748 = vsel %vm355, %v744, %v675
        %v749 = vsel %vm355, %v745, %v677
        %v750 = vsel %vm360, %v746, %v683
        %v751 = vsel %vm360, %v747, %v685
        %v752 = vsel %vm360, %v748, %v687
        %v753 = vsel %vm360, %v749, %v689
        %v754 = vsel %vm365, %v750, %v695
        %v755 = vsel %vm365, %v751, %v697
        %v756 = vsel %vm365, %v752, %v699
        %v757 = vsel %vm365, %v753, %v701
        %v758 = vsel %vm370, %v754, %v707
        %v759 = vsel %vm370, %v755, %v709
        %v760 = vsel %vm370, %v756, %v711
        %v761 = vsel %vm370, %v757, %v713
        %v762 = vsel %vm375, %v758, %v719
        %v763 = vsel %vm375, %v759, %v721
        %v764 = vsel %vm375, %v760, %v723
        %v765 = vsel %vm375, %v761, %v725
        %v766 = vsel %vm380, %v762, %v731
        %v767 = vsel %vm380, %v763, %v733
        %v768 = vsel %vm380, %v764, %v735
        %v769 = vsel %vm380, %v765, %v737
        %s770 = scalar_lea.vmem %s162, 48 [#allocation6]
        %771 = vst.msk [vmem:[%s770] sm:$0xf] %vm385, %v766
        %772 = vst.msk [vmem:[%s770 + $0x4] sm:$0xf] %vm385, %v767
        %773 = vst.msk [vmem:[%s770 + $0x8] sm:$0xf] %vm385, %v768
        %774 = vst.msk [vmem:[%s770 + $0xc] sm:$0xf] %vm385, %v769
        %s775 = sadd.s32 %s390, 4
        %s776 = smul.u32 %s775, 2
        %s777 = scalar_lea.vmem [#allocation2], %s776
        %v778 = vld [vmem:[%s777] sm:$0xf]
        %v779 = vld [vmem:[%s777 + $0x18] sm:$0xf]
        %v780 = vld [vmem:[%s777 + $0x30] sm:$0xf]
        %v781 = vld [vmem:[%s777 + $0x48] sm:$0xf]
        %786 = vrot.lane.b32.xlu0 %v778, 2
        %v787 = vpop.permute.xlu0 %786
        %788 = vrot.lane.b32.xlu0 %v779, 2
        %v789 = vpop.permute.xlu0 %788
        %790 = vrot.lane.b32.xlu0 %v780, 2
        %v791 = vpop.permute.xlu0 %790
        %792 = vrot.lane.b32.xlu0 %v781, 2
        %v793 = vpop.permute.xlu0 %792
        %798 = vrot.lane.b32.xlu0 %v778, 4
        %v799 = vpop.permute.xlu0 %798
        %800 = vrot.lane.b32.xlu0 %v779, 4
        %v801 = vpop.permute.xlu0 %800
        %802 = vrot.lane.b32.xlu0 %v780, 4
        %v803 = vpop.permute.xlu0 %802
        %804 = vrot.lane.b32.xlu0 %v781, 4
        %v805 = vpop.permute.xlu0 %804
        %810 = vrot.lane.b32.xlu0 %v778, 6
        %v811 = vpop.permute.xlu0 %810
        %812 = vrot.lane.b32.xlu0 %v779, 6
        %v813 = vpop.permute.xlu0 %812
        %814 = vrot.lane.b32.xlu0 %v780, 6
        %v815 = vpop.permute.xlu0 %814
        %816 = vrot.lane.b32.xlu0 %v781, 6
        %v817 = vpop.permute.xlu0 %816
        %822 = vrot.lane.b32.xlu0 %v778, 8
        %v823 = vpop.permute.xlu0 %822
        %824 = vrot.lane.b32.xlu0 %v779, 8
        %v825 = vpop.permute.xlu0 %824
        %826 = vrot.lane.b32.xlu0 %v780, 8
        %v827 = vpop.permute.xlu0 %826
        %828 = vrot.lane.b32.xlu0 %v781, 8
        %v829 = vpop.permute.xlu0 %828
        %834 = vrot.lane.b32.xlu0 %v778, 10
        %v835 = vpop.permute.xlu0 %834
        %836 = vrot.lane.b32.xlu0 %v779, 10
        %v837 = vpop.permute.xlu0 %836
        %838 = vrot.lane.b32.xlu0 %v780, 10
        %v839 = vpop.permute.xlu0 %838
        %840 = vrot.lane.b32.xlu0 %v781, 10
        %v841 = vpop.permute.xlu0 %840
        %846 = vrot.lane.b32.xlu0 %v778, 12
        %v847 = vpop.permute.xlu0 %846
        %848 = vrot.lane.b32.xlu0 %v779, 12
        %v849 = vpop.permute.xlu0 %848
        %850 = vrot.lane.b32.xlu0 %v780, 12
        %v851 = vpop.permute.xlu0 %850
        %852 = vrot.lane.b32.xlu0 %v781, 12
        %v853 = vpop.permute.xlu0 %852
        %858 = vrot.lane.b32.xlu0 %v778, 14
        %v859 = vpop.permute.xlu0 %858
        %860 = vrot.lane.b32.xlu0 %v779, 14
        %v861 = vpop.permute.xlu0 %860
        %862 = vrot.lane.b32.xlu0 %v780, 14
        %v863 = vpop.permute.xlu0 %862
        %864 = vrot.lane.b32.xlu0 %v781, 14
        %v865 = vpop.permute.xlu0 %864
        %v870 = vsel %vm350, %v778, %v787
        %v871 = vsel %vm350, %v779, %v789
        %v872 = vsel %vm350, %v780, %v791
        %v873 = vsel %vm350, %v781, %v793
        %v874 = vsel %vm355, %v870, %v799
        %v875 = vsel %vm355, %v871, %v801
        %v876 = vsel %vm355, %v872, %v803
        %v877 = vsel %vm355, %v873, %v805
        %v878 = vsel %vm360, %v874, %v811
        %v879 = vsel %vm360, %v875, %v813
        %v880 = vsel %vm360, %v876, %v815
        %v881 = vsel %vm360, %v877, %v817
        %v882 = vsel %vm365, %v878, %v823
        %v883 = vsel %vm365, %v879, %v825
        %v884 = vsel %vm365, %v880, %v827
        %v885 = vsel %vm365, %v881, %v829
        %v886 = vsel %vm370, %v882, %v835
        %v887 = vsel %vm370, %v883, %v837
        %v888 = vsel %vm370, %v884, %v839
        %v889 = vsel %vm370, %v885, %v841
        %v890 = vsel %vm375, %v886, %v847
        %v891 = vsel %vm375, %v887, %v849
        %v892 = vsel %vm375, %v888, %v851
        %v893 = vsel %vm375, %v889, %v853
        %v894 = vsel %vm380, %v890, %v859
        %v895 = vsel %vm380, %v891, %v861
        %v896 = vsel %vm380, %v892, %v863
        %v897 = vsel %vm380, %v893, %v865
        %s898 = scalar_lea.vmem %s162, 64 [#allocation6]
        %899 = vst.msk [vmem:[%s898] sm:$0xf] %vm385, %v894
        %900 = vst.msk [vmem:[%s898 + $0x4] sm:$0xf] %vm385, %v895
        %901 = vst.msk [vmem:[%s898 + $0x8] sm:$0xf] %vm385, %v896
        %902 = vst.msk [vmem:[%s898 + $0xc] sm:$0xf] %vm385, %v897
        %s903 = sadd.s32 %s390, 5
        %s904 = smul.u32 %s903, 2
        %s905 = scalar_lea.vmem [#allocation2], %s904
        %v906 = vld [vmem:[%s905] sm:$0xf]
        %v907 = vld [vmem:[%s905 + $0x18] sm:$0xf]
        %v908 = vld [vmem:[%s905 + $0x30] sm:$0xf]
        %v909 = vld [vmem:[%s905 + $0x48] sm:$0xf]
        %914 = vrot.lane.b32.xlu0 %v906, 2
        %v915 = vpop.permute.xlu0 %914
        %916 = vrot.lane.b32.xlu0 %v907, 2
        %v917 = vpop.permute.xlu0 %916
        %918 = vrot.lane.b32.xlu0 %v908, 2
        %v919 = vpop.permute.xlu0 %918
        %920 = vrot.lane.b32.xlu0 %v909, 2
        %v921 = vpop.permute.xlu0 %920
        %926 = vrot.lane.b32.xlu0 %v906, 4
        %v927 = vpop.permute.xlu0 %926
        %928 = vrot.lane.b32.xlu0 %v907, 4
        %v929 = vpop.permute.xlu0 %928
        %930 = vrot.lane.b32.xlu0 %v908, 4
        %v931 = vpop.permute.xlu0 %930
        %932 = vrot.lane.b32.xlu0 %v909, 4
        %v933 = vpop.permute.xlu0 %932
        %938 = vrot.lane.b32.xlu0 %v906, 6
        %v939 = vpop.permute.xlu0 %938
        %940 = vrot.lane.b32.xlu0 %v907, 6
        %v941 = vpop.permute.xlu0 %940
        %942 = vrot.lane.b32.xlu0 %v908, 6
        %v943 = vpop.permute.xlu0 %942
        %944 = vrot.lane.b32.xlu0 %v909, 6
        %v945 = vpop.permute.xlu0 %944
        %950 = vrot.lane.b32.xlu0 %v906, 8
        %v951 = vpop.permute.xlu0 %950
        %952 = vrot.lane.b32.xlu0 %v907, 8
        %v953 = vpop.permute.xlu0 %952
        %954 = vrot.lane.b32.xlu0 %v908, 8
        %v955 = vpop.permute.xlu0 %954
        %956 = vrot.lane.b32.xlu0 %v909, 8
        %v957 = vpop.permute.xlu0 %956
        %962 = vrot.lane.b32.xlu0 %v906, 10
        %v963 = vpop.permute.xlu0 %962
        %964 = vrot.lane.b32.xlu0 %v907, 10
        %v965 = vpop.permute.xlu0 %964
        %966 = vrot.lane.b32.xlu0 %v908, 10
        %v967 = vpop.permute.xlu0 %966
        %968 = vrot.lane.b32.xlu0 %v909, 10
        %v969 = vpop.permute.xlu0 %968
        %974 = vrot.lane.b32.xlu0 %v906, 12
        %v975 = vpop.permute.xlu0 %974
        %976 = vrot.lane.b32.xlu0 %v907, 12
        %v977 = vpop.permute.xlu0 %976
        %978 = vrot.lane.b32.xlu0 %v908, 12
        %v979 = vpop.permute.xlu0 %978
        %980 = vrot.lane.b32.xlu0 %v909, 12
        %v981 = vpop.permute.xlu0 %980
        %986 = vrot.lane.b32.xlu0 %v906, 14
        %v987 = vpop.permute.xlu0 %986
        %988 = vrot.lane.b32.xlu0 %v907, 14
        %v989 = vpop.permute.xlu0 %988
        %990 = vrot.lane.b32.xlu0 %v908, 14
        %v991 = vpop.permute.xlu0 %990
        %992 = vrot.lane.b32.xlu0 %v909, 14
        %v993 = vpop.permute.xlu0 %992
        %v998 = vsel %vm350, %v906, %v915
        %v999 = vsel %vm350, %v907, %v917
        %v1000 = vsel %vm350, %v908, %v919
        %v1001 = vsel %vm350, %v909, %v921
        %v1002 = vsel %vm355, %v998, %v927
        %v1003 = vsel %vm355, %v999, %v929
        %v1004 = vsel %vm355, %v1000, %v931
        %v1005 = vsel %vm355, %v1001, %v933
        %v1006 = vsel %vm360, %v1002, %v939
        %v1007 = vsel %vm360, %v1003, %v941
        %v1008 = vsel %vm360, %v1004, %v943
        %v1009 = vsel %vm360, %v1005, %v945
        %v1010 = vsel %vm365, %v1006, %v951
        %v1011 = vsel %vm365, %v1007, %v953
        %v1012 = vsel %vm365, %v1008, %v955
        %v1013 = vsel %vm365, %v1009, %v957
        %v1014 = vsel %vm370, %v1010, %v963
        %v1015 = vsel %vm370, %v1011, %v965
        %v1016 = vsel %vm370, %v1012, %v967
        %v1017 = vsel %vm370, %v1013, %v969
        %v1018 = vsel %vm375, %v1014, %v975
        %v1019 = vsel %vm375, %v1015, %v977
        %v1020 = vsel %vm375, %v1016, %v979
        %v1021 = vsel %vm375, %v1017, %v981
        %v1022 = vsel %vm380, %v1018, %v987
        %v1023 = vsel %vm380, %v1019, %v989
        %v1024 = vsel %vm380, %v1020, %v991
        %v1025 = vsel %vm380, %v1021, %v993
        %s1026 = scalar_lea.vmem %s162, 80 [#allocation6]
        %1027 = vst.msk [vmem:[%s1026] sm:$0xf] %vm385, %v1022
        %1028 = vst.msk [vmem:[%s1026 + $0x4] sm:$0xf] %vm385, %v1023
        %1029 = vst.msk [vmem:[%s1026 + $0x8] sm:$0xf] %vm385, %v1024
        %1030 = vst.msk [vmem:[%s1026 + $0xc] sm:$0xf] %vm385, %v1025
        %s1031 = sadd.s32 %s390, 6
        %s1032 = smul.u32 %s1031, 2
        %s1033 = scalar_lea.vmem [#allocation2], %s1032
        %v1034 = vld [vmem:[%s1033] sm:$0xf]
        %v1035 = vld [vmem:[%s1033 + $0x18] sm:$0xf]
        %v1036 = vld [vmem:[%s1033 + $0x30] sm:$0xf]
        %v1037 = vld [vmem:[%s1033 + $0x48] sm:$0xf]
        %1042 = vrot.lane.b32.xlu0 %v1034, 2
        %v1043 = vpop.permute.xlu0 %1042
        %1044 = vrot.lane.b32.xlu0 %v1035, 2
        %v1045 = vpop.permute.xlu0 %1044
        %1046 = vrot.lane.b32.xlu0 %v1036, 2
        %v1047 = vpop.permute.xlu0 %1046
        %1048 = vrot.lane.b32.xlu0 %v1037, 2
        %v1049 = vpop.permute.xlu0 %1048
        %1054 = vrot.lane.b32.xlu0 %v1034, 4
        %v1055 = vpop.permute.xlu0 %1054
        %1056 = vrot.lane.b32.xlu0 %v1035, 4
        %v1057 = vpop.permute.xlu0 %1056
        %1058 = vrot.lane.b32.xlu0 %v1036, 4
        %v1059 = vpop.permute.xlu0 %1058
        %1060 = vrot.lane.b32.xlu0 %v1037, 4
        %v1061 = vpop.permute.xlu0 %1060
        %1066 = vrot.lane.b32.xlu0 %v1034, 6
        %v1067 = vpop.permute.xlu0 %1066
        %1068 = vrot.lane.b32.xlu0 %v1035, 6
        %v1069 = vpop.permute.xlu0 %1068
        %1070 = vrot.lane.b32.xlu0 %v1036, 6
        %v1071 = vpop.permute.xlu0 %1070
        %1072 = vrot.lane.b32.xlu0 %v1037, 6
        %v1073 = vpop.permute.xlu0 %1072
        %1078 = vrot.lane.b32.xlu0 %v1034, 8
        %v1079 = vpop.permute.xlu0 %1078
        %1080 = vrot.lane.b32.xlu0 %v1035, 8
        %v1081 = vpop.permute.xlu0 %1080
        %1082 = vrot.lane.b32.xlu0 %v1036, 8
        %v1083 = vpop.permute.xlu0 %1082
        %1084 = vrot.lane.b32.xlu0 %v1037, 8
        %v1085 = vpop.permute.xlu0 %1084
        %1090 = vrot.lane.b32.xlu0 %v1034, 10
        %v1091 = vpop.permute.xlu0 %1090
        %1092 = vrot.lane.b32.xlu0 %v1035, 10
        %v1093 = vpop.permute.xlu0 %1092
        %1094 = vrot.lane.b32.xlu0 %v1036, 10
        %v1095 = vpop.permute.xlu0 %1094
        %1096 = vrot.lane.b32.xlu0 %v1037, 10
        %v1097 = vpop.permute.xlu0 %1096
        %1102 = vrot.lane.b32.xlu0 %v1034, 12
        %v1103 = vpop.permute.xlu0 %1102
        %1104 = vrot.lane.b32.xlu0 %v1035, 12
        %v1105 = vpop.permute.xlu0 %1104
        %1106 = vrot.lane.b32.xlu0 %v1036, 12
        %v1107 = vpop.permute.xlu0 %1106
        %1108 = vrot.lane.b32.xlu0 %v1037, 12
        %v1109 = vpop.permute.xlu0 %1108
        %1114 = vrot.lane.b32.xlu0 %v1034, 14
        %v1115 = vpop.permute.xlu0 %1114
        %1116 = vrot.lane.b32.xlu0 %v1035, 14
        %v1117 = vpop.permute.xlu0 %1116
        %1118 = vrot.lane.b32.xlu0 %v1036, 14
        %v1119 = vpop.permute.xlu0 %1118
        %1120 = vrot.lane.b32.xlu0 %v1037, 14
        %v1121 = vpop.permute.xlu0 %1120
        %v1126 = vsel %vm350, %v1034, %v1043
        %v1127 = vsel %vm350, %v1035, %v1045
        %v1128 = vsel %vm350, %v1036, %v1047
        %v1129 = vsel %vm350, %v1037, %v1049
        %v1130 = vsel %vm355, %v1126, %v1055
        %v1131 = vsel %vm355, %v1127, %v1057
        %v1132 = vsel %vm355, %v1128, %v1059
        %v1133 = vsel %vm355, %v1129, %v1061
        %v1134 = vsel %vm360, %v1130, %v1067
        %v1135 = vsel %vm360, %v1131, %v1069
        %v1136 = vsel %vm360, %v1132, %v1071
        %v1137 = vsel %vm360, %v1133, %v1073
        %v1138 = vsel %vm365, %v1134, %v1079
        %v1139 = vsel %vm365, %v1135, %v1081
        %v1140 = vsel %vm365, %v1136, %v1083
        %v1141 = vsel %vm365, %v1137, %v1085
        %v1142 = vsel %vm370, %v1138, %v1091
        %v1143 = vsel %vm370, %v1139, %v1093
        %v1144 = vsel %vm370, %v1140, %v1095
        %v1145 = vsel %vm370, %v1141, %v1097
        %v1146 = vsel %vm375, %v1142, %v1103
        %v1147 = vsel %vm375, %v1143, %v1105
        %v1148 = vsel %vm375, %v1144, %v1107
        %v1149 = vsel %vm375, %v1145, %v1109
        %v1150 = vsel %vm380, %v1146, %v1115
        %v1151 = vsel %vm380, %v1147, %v1117
        %v1152 = vsel %vm380, %v1148, %v1119
        %v1153 = vsel %vm380, %v1149, %v1121
        %s1154 = scalar_lea.vmem %s162, 96 [#allocation6]
        %1155 = vst.msk [vmem:[%s1154] sm:$0xf] %vm385, %v1150
        %1156 = vst.msk [vmem:[%s1154 + $0x4] sm:$0xf] %vm385, %v1151
        %1157 = vst.msk [vmem:[%s1154 + $0x8] sm:$0xf] %vm385, %v1152
        %1158 = vst.msk [vmem:[%s1154 + $0xc] sm:$0xf] %vm385, %v1153
        %s1159 = sadd.s32 %s390, 7
        %s1160 = smul.u32 %s1159, 2
        %s1161 = scalar_lea.vmem [#allocation2], %s1160
        %v1162 = vld [vmem:[%s1161] sm:$0xf]
        %v1163 = vld [vmem:[%s1161 + $0x18] sm:$0xf]
        %v1164 = vld [vmem:[%s1161 + $0x30] sm:$0xf]
        %v1165 = vld [vmem:[%s1161 + $0x48] sm:$0xf]
        %1170 = vrot.lane.b32.xlu0 %v1162, 2
        %v1171 = vpop.permute.xlu0 %1170
        %1172 = vrot.lane.b32.xlu0 %v1163, 2
        %v1173 = vpop.permute.xlu0 %1172
        %1174 = vrot.lane.b32.xlu0 %v1164, 2
        %v1175 = vpop.permute.xlu0 %1174
        %1176 = vrot.lane.b32.xlu0 %v1165, 2
        %v1177 = vpop.permute.xlu0 %1176
        %1182 = vrot.lane.b32.xlu0 %v1162, 4
        %v1183 = vpop.permute.xlu0 %1182
        %1184 = vrot.lane.b32.xlu0 %v1163, 4
        %v1185 = vpop.permute.xlu0 %1184
        %1186 = vrot.lane.b32.xlu0 %v1164, 4
        %v1187 = vpop.permute.xlu0 %1186
        %1188 = vrot.lane.b32.xlu0 %v1165, 4
        %v1189 = vpop.permute.xlu0 %1188
        %1194 = vrot.lane.b32.xlu0 %v1162, 6
        %v1195 = vpop.permute.xlu0 %1194
        %1196 = vrot.lane.b32.xlu0 %v1163, 6
        %v1197 = vpop.permute.xlu0 %1196
        %1198 = vrot.lane.b32.xlu0 %v1164, 6
        %v1199 = vpop.permute.xlu0 %1198
        %1200 = vrot.lane.b32.xlu0 %v1165, 6
        %v1201 = vpop.permute.xlu0 %1200
        %1206 = vrot.lane.b32.xlu0 %v1162, 8
        %v1207 = vpop.permute.xlu0 %1206
        %1208 = vrot.lane.b32.xlu0 %v1163, 8
        %v1209 = vpop.permute.xlu0 %1208
        %1210 = vrot.lane.b32.xlu0 %v1164, 8
        %v1211 = vpop.permute.xlu0 %1210
        %1212 = vrot.lane.b32.xlu0 %v1165, 8
        %v1213 = vpop.permute.xlu0 %1212
        %1218 = vrot.lane.b32.xlu0 %v1162, 10
        %v1219 = vpop.permute.xlu0 %1218
        %1220 = vrot.lane.b32.xlu0 %v1163, 10
        %v1221 = vpop.permute.xlu0 %1220
        %1222 = vrot.lane.b32.xlu0 %v1164, 10
        %v1223 = vpop.permute.xlu0 %1222
        %1224 = vrot.lane.b32.xlu0 %v1165, 10
        %v1225 = vpop.permute.xlu0 %1224
        %1230 = vrot.lane.b32.xlu0 %v1162, 12
        %v1231 = vpop.permute.xlu0 %1230
        %1232 = vrot.lane.b32.xlu0 %v1163, 12
        %v1233 = vpop.permute.xlu0 %1232
        %1234 = vrot.lane.b32.xlu0 %v1164, 12
        %v1235 = vpop.permute.xlu0 %1234
        %1236 = vrot.lane.b32.xlu0 %v1165, 12
        %v1237 = vpop.permute.xlu0 %1236
        %1242 = vrot.lane.b32.xlu0 %v1162, 14
        %v1243 = vpop.permute.xlu0 %1242
        %1244 = vrot.lane.b32.xlu0 %v1163, 14
        %v1245 = vpop.permute.xlu0 %1244
        %1246 = vrot.lane.b32.xlu0 %v1164, 14
        %v1247 = vpop.permute.xlu0 %1246
        %1248 = vrot.lane.b32.xlu0 %v1165, 14
        %v1249 = vpop.permute.xlu0 %1248
        %v1254 = vsel %vm350, %v1162, %v1171
        %v1255 = vsel %vm350, %v1163, %v1173
        %v1256 = vsel %vm350, %v1164, %v1175
        %v1257 = vsel %vm350, %v1165, %v1177
        %v1258 = vsel %vm355, %v1254, %v1183
        %v1259 = vsel %vm355, %v1255, %v1185
        %v1260 = vsel %vm355, %v1256, %v1187
        %v1261 = vsel %vm355, %v1257, %v1189
        %v1262 = vsel %vm360, %v1258, %v1195
        %v1263 = vsel %vm360, %v1259, %v1197
        %v1264 = vsel %vm360, %v1260, %v1199
        %v1265 = vsel %vm360, %v1261, %v1201
        %v1266 = vsel %vm365, %v1262, %v1207
        %v1267 = vsel %vm365, %v1263, %v1209
        %v1268 = vsel %vm365, %v1264, %v1211
        %v1269 = vsel %vm365, %v1265, %v1213
        %v1270 = vsel %vm370, %v1266, %v1219
        %v1271 = vsel %vm370, %v1267, %v1221
        %v1272 = vsel %vm370, %v1268, %v1223
        %v1273 = vsel %vm370, %v1269, %v1225
        %v1274 = vsel %vm375, %v1270, %v1231
        %v1275 = vsel %vm375, %v1271, %v1233
        %v1276 = vsel %vm375, %v1272, %v1235
        %v1277 = vsel %vm375, %v1273, %v1237
        %v1278 = vsel %vm380, %v1274, %v1243
        %v1279 = vsel %vm380, %v1275, %v1245
        %v1280 = vsel %vm380, %v1276, %v1247
        %v1281 = vsel %vm380, %v1277, %v1249
        %s1282 = scalar_lea.vmem %s162, 112 [#allocation6]
        %1283 = vst.msk [vmem:[%s1282] sm:$0xf] %vm385, %v1278
        %1284 = vst.msk [vmem:[%s1282 + $0x4] sm:$0xf] %vm385, %v1279
        %1285 = vst.msk [vmem:[%s1282 + $0x8] sm:$0xf] %vm385, %v1280
        %1286 = vst.msk [vmem:[%s1282 + $0xc] sm:$0xf] %vm385, %v1281
        %s1287 = sand.u32 %s77, 1
        %s1288 = scalar_lea.sflag [#allocation5], %s1287
        %s1289 = sand.u32 %s77, 1
        %s1290 = smul.addr %s1289, 128
        %s1291 = scalar_lea.vmem [#allocation6], %s1290
        // Predicated region
        $region33: #{tpu_custom_call.1} parent=23 // pred_check
          %p1292 = pneg %p87
        $region34: #{tpu_custom_call.1} parent=23 // pred_check_branch
          %1294 = sbr.rel (%p1292) target = $region36
        $region35: #{tpu_custom_call.1} parent=23 // pred_region
          %s1295 = smul.u32 8, %s25
          %s1296 = smul.u32 4, %s24
          %s1298 = ssub.s32 2048, 2048
          %1299 = vsyncadd %s1288, %s1298
          %s1300 = smul.addr %s1295, 4
          %s1301 = sadd.s32 %s1296, %s1300
          %s1302 = smul.addr %s23, 32
          %s1303 = sadd.s32 %s1301, %s1302
          %s1304 = smul.addr %s1303, 64
          %s1305 = scalar_lea.hbm %s1, %s1304
          %s1306 = sshll.u32 %s1291, 4
          %s1307 = int_to_ptr.vmem [resolvable:$true] %s1306
          %1312 = dma.vmem_to_hbm [thread:$0]  %s1307, 2048, %s1305, %s1288, 64, 64, 4
        $region36: #{tpu_custom_call.1} parent=23 // pred_fallthru
          _
      $region24: #{tpu_custom_call.1} parent=5 // pred_fallthru
        _
      %p1313 = scmp.le.s32.totalorder 2, %s13
      // Predicated region
      $region37: #{tpu_custom_call.1} parent=5 // pred_check
        %p1314 = pneg %p1313
      $region38: #{tpu_custom_call.1} parent=5 // pred_check_branch
        %1316 = sbr.rel (%p1314) target = $region40
      $region39: #{tpu_custom_call.1} parent=5 // pred_region
        %s1317 = ssub.s32 %s13, 2
        // Predicated region
        $region41: #{tpu_custom_call.1} parent=39 // pred_check
          %p1318 = pneg %p93
        $region42: #{tpu_custom_call.1} parent=39 // pred_check_branch
          %1320 = sbr.rel (%p1318) target = $region44
        $region43: #{tpu_custom_call.1} parent=39 // pred_region
          %s1321 = sand.u32 %s78, 1
          %s1322 = scalar_lea.sflag [#allocation5], %s1321
          %s1323 = sand.u32 %s78, 1
          %s1324 = smul.addr %s1323, 128
          %s1325 = scalar_lea.vmem [#allocation6], %s1324
          %1326 = dma.done %s1322, 2048
        $region44: #{tpu_custom_call.1} parent=39 // pred_fallthru
          _
      $region40: #{tpu_custom_call.1} parent=5 // pred_fallthru
        _
    $region6: #{tpu_custom_call.1} parent=1 // loop_footer
      %s17 = sadd.s32 1, %s13
    $region7: #{tpu_custom_call.1} parent=1 // loop_footer_branch
      %12 = sbr.rel target = $region3
    $region8: #{tpu_custom_call.1} parent=1 // loop_exit
      _
    %1327 = vsyncpa [#allocation4], 1
    %s1328 = scalar_lea.sflag [#allocation4], 1
    %1329 = vsyncpa %s1328, 1
    %1330 = vsyncpa [#allocation5], 1
    %s1331 = scalar_lea.sflag [#allocation5], 1
    %1332 = vsyncpa %s1331, 1

// kernel: tpu_custom_call.1
$region0: #{tpu_custom_call.1}
  #allocation0 [shape = 'u32[]', space=smem, size = 0x4, offset = 0x4, fixed_abs, tag = 'smem constant byte address 0x4 - core index']
  #allocation1 [shape = 'u32[144,128]{1,0:T(1,128)}', space=vmem, size = 0x12000, scoped, tag = 'internal scratch']
  #allocation2 [shape = 'f32[4,18,18]{2,1,0:T(8,128)}', space=vmem, size = 0xc000, scoped, tag = 'scratch operand']
  %s0 = inlined_call_operand.hbm [shape: f32[2,4,16,16], index: 0, kind: input, shape index: {}]
  %s1 = inlined_call_operand.hbm [shape: f32[2,8,4,4,32], index: 1, kind: output, shape index: {}]
  %s2 = sld [smem:[#allocation0]]
  $region45: #{tpu_custom_call.1} parent=0
    _
  %s4 = ssub.s32 1, %s2
  %s5 = scalar_select 0, %s4, %s2
  $region1: #{tpu_custom_call.1} parent=0
    #allocation3 [shape = 'u8[65536]{0}', space=vmem, size = 0x10000, scoped, tag = 'input window, operand 0']
    #allocation4 [shape = 's32[2]{0}', space=sflag, size = 0x8, scoped, tag = 'scoped memory for tpu_custom_call.1']
    #allocation5 [shape = 's32[2]{0}', space=sflag, size = 0x8, scoped, tag = 'scoped memory for tpu_custom_call.1']
    #allocation6 [shape = 'u8[131072]{0}', space=vmem, size = 0x20000, scoped, tag = 'output window, operand 0']
    %6 = vsyncpa [#allocation4], 0
    %s7 = scalar_lea.sflag [#allocation4], 1
    %8 = vsyncpa %s7, 0
    %9 = vsyncpa [#allocation5], 0
    %s10 = scalar_lea.sflag [#allocation5], 1
    %11 = vsyncpa %s10, 0
    loop: start=0, step=1, limit=4
    $region2: #{tpu_custom_call.1} parent=1 // loop_pre_header
      _
    $region3: #{tpu_custom_call.1} parent=1 // loop_header
      %s13 = sphi 0, %s17
      %p14 = scmp.ge.s32.totalorder %s13, 4
      %s20 = sphi 0, %s39
      %s21 = sphi 0, %s35
      %s22 = sphi 0, %s31
      %s23 = sphi 0, %s20
      %s24 = sphi 0, %s21
      %s25 = sphi 0, %s22
      %s26 = sphi 0, %s23
      %s27 = sphi 0, %s24
      %s28 = sphi 0, %s25
      %s44 = sphi 0, %s46
      %s47 = sphi 0, %s44
      %s48 = sphi 0, %s47
      %s64 = sphi 0, %s48
      %s74 = sphi 0, %s76
      %s77 = sphi 0, %s74
      %s78 = sphi 0, %s77
      %s94 = sphi 0, %s78
    $region4: #{tpu_custom_call.1} parent=1 // loop_header_branch
      %16 = sbr.rel (%p14) target = $region8
    $region5: #{tpu_custom_call.1} parent=1 // loop_body
      %s18 = ssub.s32 %s13, 1
      %s19 = ssub.s32 %s13, 2
      %s29 = sadd.s32 1, %s22
      %p30 = scmp.ge.s32.totalorder %s29, 1
      %s31 = scalar_select %p30, 0, %s29
      %s32 = sadd.s32 1, %s21
      %s33 = scalar_select %p30, %s32, %s21
      %p34 = scmp.ge.s32.totalorder %s33, 1
      %s35 = scalar_select %p34, 0, %s33
      %s36 = sadd.s32 1, %s20
      %s37 = scalar_select %p34, %s36, %s20
      %p38 = scmp.ge.s32.totalorder %s37, 2
      %s39 = scalar_select %p38, 0, %s37
      %s40 = ssub.s32 %s20, %s39
      %s41 = ssub.s32 %s21, %s35
      %s42 = sor.u32 %s40, %s41
      %p43 = scmp.eq.s32.totalorder %s42, 0
      %s45 = sadd.s32 %s44, 1
      %s46 = scalar_select %p43, %s44, %s45
      %p49 = pneg %p43
      %p50 = scmp.eq.s32.totalorder %s13, 1
      %p51 = por %p49, %p50
      %p52 = scmp.ne.s32.totalorder %s44, %s47
      %p53 = scmp.eq.s32.totalorder %s13, 0
      %p54 = por %p52, %p53
      %p55 = scmp.ne.s32.totalorder %s44, %s47
      %p56 = scmp.eq.s32.totalorder %s18, 1
      %p57 = por %p55, %p56
      %p58 = scmp.ne.s32.totalorder %s47, %s48
      %p59 = scmp.eq.s32.totalorder %s18, 0
      %p60 = por %p58, %p59
      %p61 = scmp.ne.s32.totalorder %s47, %s48
      %p62 = scmp.eq.s32.totalorder %s19, 1
      %p63 = por %p61, %p62
      %p65 = scmp.ne.s32.totalorder %s48, %s64
      %p66 = scmp.eq.s32.totalorder %s19, 0
      %p67 = por %p65, %p66
      %s68 = ssub.s32 %s20, %s39
      %s69 = ssub.s32 %s22, %s31
      %s70 = sor.u32 %s68, %s69
      %s71 = ssub.s32 %s21, %s35
      %s72 = sor.u32 %s70, %s71
      %p73 = scmp.eq.s32.totalorder %s72, 0
      %s75 = sadd.s32 %s74, 1
      %s76 = scalar_select %p73, %s74, %s75
      %p79 = pneg %p73
      %p80 = scmp.eq.s32.totalorder %s13, 1
      %p81 = por %p79, %p80
      %p82 = scmp.ne.s32.totalorder %s74, %s77
      %p83 = scmp.eq.s32.totalorder %s13, 0
      %p84 = por %p82, %p83
      %p85 = scmp.ne.s32.totalorder %s74, %s77
      %p86 = scmp.eq.s32.totalorder %s18, 1
      %p87 = por %p85, %p86
      %p88 = scmp.ne.s32.totalorder %s77, %s78
      %p89 = scmp.eq.s32.totalorder %s18, 0
      %p90 = por %p88, %p89
      %p91 = scmp.ne.s32.totalorder %s77, %s78
      %p92 = scmp.eq.s32.totalorder %s19, 1
      %p93 = por %p91, %p92
      %p95 = scmp.ne.s32.totalorder %s78, %s94
      %p96 = scmp.eq.s32.totalorder %s19, 0
      %p97 = por %p95, %p96
      %p98 = scmp.le.s32.totalorder 1, %s13
      %p99 = scmp.lt.s32.totalorder %s13, 3
      %p100 = pnand %p98, %p99
      %p101 = pneg %p100
      // Predicated region
      $region9: #{tpu_custom_call.1} parent=5 // pred_check
        _
      $region10: #{tpu_custom_call.1} parent=5 // pred_check_branch
        %103 = sbr.rel (%p100) target = $region12
      $region11: #{tpu_custom_call.1} parent=5 // pred_region
        %s104 = ssub.s32 %s13, 1
      $region12: #{tpu_custom_call.1} parent=5 // pred_fallthru
        _
      %p105 = scmp.lt.s32.totalorder %s13, 2
      // Predicated region
      $region13: #{tpu_custom_call.1} parent=5 // pred_check
        %p106 = pneg %p105
      $region14: #{tpu_custom_call.1} parent=5 // pred_check_branch
        %108 = sbr.rel (%p106) target = $region16
      $region15: #{tpu_custom_call.1} parent=5 // pred_region
        // Predicated region
        $region17: #{tpu_custom_call.1} parent=15 // pred_check
          %p109 = pneg %p54
        $region18: #{tpu_custom_call.1} parent=15 // pred_check_branch
          %111 = sbr.rel (%p109) target = $region20
        $region19: #{tpu_custom_call.1} parent=15 // pred_region
          %s112 = sand.u32 %s44, 1
          %s113 = scalar_lea.sflag [#allocation4], %s112
          %s114 = sand.u32 %s44, 1
          %s115 = smul.addr %s114, 64
          %s116 = scalar_lea.vmem [#allocation3], %s115
          %s117 = smul.u32 4, %s21
          %s119 = ssub.s32 1024, 1024
          %120 = vsyncadd %s113, %s119
          %s121 = smul.addr %s117, 2
          %s122 = smul.addr %s20, 8
          %s123 = sadd.s32 %s121, %s122
          %s124 = smul.addr %s123, 128
          %s125 = scalar_lea.hbm %s0, %s124
          %s126 = sshll.u32 %s116, 4
          %s127 = int_to_ptr.vmem [resolvable:$true] %s126
          %132 = dma.hbm_to_vmem [thread:$0]  %s125, 1024, %s127, %s113, 128, 128, 8
        $region20: #{tpu_custom_call.1} parent=15 // pred_fallthru
          _
      $region16: #{tpu_custom_call.1} parent=5 // pred_fallthru
        _
      %p133 = scmp.le.s32.totalorder 1, %s13
      %p134 = scmp.lt.s32.totalorder %s13, 3
      %p135 = pnand %p133, %p134
      %p136 = pneg %p135
      // Predicated region
      $region21: #{tpu_custom_call.1} parent=5 // pred_check
        _
      $region22: #{tpu_custom_call.1} parent=5 // pred_check_branch
        %138 = sbr.rel (%p135) target = $region24
      $region23: #{tpu_custom_call.1} parent=5 // pred_region
        %s139 = ssub.s32 %s13, 1
        %s140 = sand.u32 %s47, 1
        %s141 = scalar_lea.sflag [#allocation4], %s140
        %s142 = sand.u32 %s47, 1
        %s143 = smul.addr %s142, 64
        %s144 = scalar_lea.vmem [#allocation3], %s143
        // Predicated region
        $region25: #{tpu_custom_call.1} parent=23 // pred_check
          %p145 = pneg %p60
        $region26: #{tpu_custom_call.1} parent=23 // pred_check_branch
          %147 = sbr.rel (%p145) target = $region28
        $region27: #{tpu_custom_call.1} parent=23 // pred_region
          %148 = dma.done %s141, 1024
        $region28: #{tpu_custom_call.1} parent=23 // pred_fallthru
          _
        %s149 = sand.u32 %s47, 1
        %s150 = scalar_lea.sflag [#allocation4], %s149
        %s151 = sand.u32 %s47, 1
        %s152 = smul.addr %s151, 64
        %s153 = scalar_lea.vmem [#allocation3], %s152
        %p154 = pneg %p60
        %p155 = pneg %p57
        %p156 = pneg %p90
        %p157 = pneg %p87
        %s158 = sand.u32 %s77, 1
        %s159 = scalar_lea.sflag [#allocation5], %s158
        %s160 = sand.u32 %s77, 1
        %s161 = smul.addr %s160, 128
        %s162 = scalar_lea.vmem [#allocation6], %s161
        %s163 = smul.u32 4, %s24
        %s164 = smul.u32 8, %s25
        %s165 = smul.u32 4, %s24
        %p166 = scmp.eq.s32.totalorder %s25, 0
        // Predicated region
        $region29: #{tpu_custom_call.1} parent=23 // pred_check
          %p167 = pneg %p166
        $region30: #{tpu_custom_call.1} parent=23 // pred_check_branch
          %169 = sbr.rel (%p167) target = $region32
        $region31: #{tpu_custom_call.1} parent=23 // pred_region
          %vm170 = vcmask 139264
          %171 = vst.msk [vmem:[#allocation2] sm:$0x1] %vm170, 0.0
          %172 = vst.msk [vmem:[#allocation2 + $0x18] sm:$0x1] %vm170, 0.0
          %173 = vst.msk [vmem:[#allocation2 + $0x30] sm:$0x1] %vm170, 0.0
          %174 = vst.msk [vmem:[#allocation2 + $0x48] sm:$0x1] %vm170, 0.0
          %175 = vst.msk [vmem:[#allocation2 + $0x11] sm:$0x1] %vm170, 0.0
          %176 = vst.msk [vmem:[#allocation2 + $0x29] sm:$0x1] %vm170, 0.0
          %177 = vst.msk [vmem:[#allocation2 + $0x41] sm:$0x1] %vm170, 0.0
          %178 = vst.msk [vmem:[#allocation2 + $0x59] sm:$0x1] %vm170, 0.0
          %vm179 = vcmask 7168
          %180 = vst.msk [vmem:[#allocation2] sm:$0xff] %vm179, 0.0
          %181 = vst.msk [vmem:[#allocation2 + $0x8] sm:$0xff] %vm179, 0.0
          %vm182 = vcmask 1024
          %183 = vst.msk [vmem:[#allocation2 + $0x10] sm:$0x3] %vm182, 0.0
          %184 = vst.msk [vmem:[#allocation2 + $0x18] sm:$0xff] %vm179, 0.0
          %185 = vst.msk [vmem:[#allocation2 + $0x20] sm:$0xff] %vm179, 0.0
          %186 = vst.msk [vmem:[#allocation2 + $0x28] sm:$0x3] %vm182, 0.0
          %187 = vst.msk [vmem:[#allocation2 + $0x30] sm:$0xff] %vm179, 0.0
          %188 = vst.msk [vmem:[#allocation2 + $0x38] sm:$0xff] %vm179, 0.0
          %189 = vst.msk [vmem:[#allocation2 + $0x40] sm:$0x3] %vm182, 0.0
          %190 = vst.msk [vmem:[#allocation2 + $0x48] sm:$0xff] %vm179, 0.0
          %191 = vst.msk [vmem:[#allocation2 + $0x50] sm:$0xff] %vm179, 0.0
          %192 = vst.msk [vmem:[#allocation2 + $0x58] sm:$0x3] %vm182, 0.0
          %vm193 = vcmask 146568
          %194 = vst.msk [vmem:[#allocation2] sm:$0xff] %vm193, 0.0
          %195 = vst.msk [vmem:[#allocation2 + $0x8] sm:$0xff] %vm193, 0.0
          %vm196 = vcmask 140424
          %197 = vst.msk [vmem:[#allocation2 + $0x10] sm:$0x3] %vm196, 0.0
          %198 = vst.msk [vmem:[#allocation2 + $0x18] sm:$0xff] %vm193, 0.0
          %199 = vst.msk [vmem:[#allocation2 + $0x20] sm:$0xff] %vm193, 0.0
          %200 = vst.msk [vmem:[#allocation2 + $0x28] sm:$0x3] %vm196, 0.0
          %201 = vst.msk [vmem:[#allocation2 + $0x30] sm:$0xff] %vm193, 0.0
          %202 = vst.msk [vmem:[#allocation2 + $0x38] sm:$0xff] %vm193, 0.0
          %203 = vst.msk [vmem:[#allocation2 + $0x40] sm:$0x3] %vm196, 0.0
          %204 = vst.msk [vmem:[#allocation2 + $0x48] sm:$0xff] %vm193, 0.0
          %205 = vst.msk [vmem:[#allocation2 + $0x50] sm:$0xff] %vm193, 0.0
          %206 = vst.msk [vmem:[#allocation2 + $0x58] sm:$0x3] %vm196, 0.0
          %v207 = vld [vmem:[%s144] sm:$0xff]
          %v208 = vld [vmem:[%s144 + $0x8] sm:$0xff]
          %v209 = vld [vmem:[%s144 + $0x10] sm:$0xff]
          %v210 = vld [vmem:[%s144 + $0x18] sm:$0xff]
          %v211 = vld [vmem:[%s144 + $0x20] sm:$0xff]
          %v212 = vld [vmem:[%s144 + $0x28] sm:$0xff]
          %v213 = vld [vmem:[%s144 + $0x30] sm:$0xff]
          %v214 = vld [vmem:[%s144 + $0x38] sm:$0xff]
          %223 = vrot.lane.b32.xlu0 %v207, 1
          %v224 = vpop.permute.xlu0 %223
          %225 = vrot.lane.b32.xlu0 %v208, 1
          %v226 = vpop.permute.xlu0 %225
          %227 = vrot.lane.b32.xlu0 %v209, 1
          %v228 = vpop.permute.xlu0 %227
          %229 = vrot.lane.b32.xlu0 %v210, 1
          %v230 = vpop.permute.xlu0 %229
          %231 = vrot.lane.b32.xlu0 %v211, 1
          %v232 = vpop.permute.xlu0 %231
          %233 = vrot.lane.b32.xlu0 %v212, 1
          %v234 = vpop.permute.xlu0 %233
          %235 = vrot.lane.b32.xlu0 %v213, 1
          %v236 = vpop.permute.xlu0 %235
          %237 = vrot.lane.b32.xlu0 %v214, 1
          %v238 = vpop.permute.xlu0 %237
          %vm247 = vcmask 138248
          %248 = vst.msk [vmem:[#allocation2 + $0x1] sm:$0xff] %vm247, %v224
          %249 = vst.msk [vmem:[#allocation2 + $0x9] sm:$0xff] %vm247, %v226
          %250 = vst.msk [vmem:[#allocation2 + $0x19] sm:$0xff] %vm247, %v228
          %251 = vst.msk [vmem:[#allocation2 + $0x21] sm:$0xff] %vm247, %v230
          %252 = vst.msk [vmem:[#allocation2 + $0x31] sm:$0xff] %vm247, %v232
          %253 = vst.msk [vmem:[#allocation2 + $0x39] sm:$0xff] %vm247, %v234
          %254 = vst.msk [vmem:[#allocation2 + $0x49] sm:$0xff] %vm247, %v236
          %255 = vst.msk [vmem:[#allocation2 + $0x51] sm:$0xff] %vm247, %v238
        $region32: #{tpu_custom_call.1} parent=23 // pred_fallthru
          _
        %s256 = smul.u32 %s25, 16
        %s257 = scalar_lea.vmem [#allocation2], %s256
        %v258 = vld [vmem:[%s257] sm:$0xf]
        %v259 = vld [vmem:[%s257 + $0x18] sm:$0xf]
        %v260 = vld [vmem:[%s257 + $0x30] sm:$0xf]
        %v261 = vld [vmem:[%s257 + $0x48] sm:$0xf]
        %vm262 = vcmask 27648
        %263 = vst.msk [vmem:[%s162] sm:$0xf] %vm262, %v258
        %264 = vst.msk [vmem:[%s162 + $0x4] sm:$0xf] %vm262, %v259
        %265 = vst.msk [vmem:[%s162 + $0x8] sm:$0xf] %vm262, %v260
        %266 = vst.msk [vmem:[%s162 + $0xc] sm:$0xf] %vm262, %v261
        %v267 = vld [vmem:[%s257] sm:$0xf]
        %v268 = vld [vmem:[%s257 + $0x18] sm:$0xf]
        %v269 = vld [vmem:[%s257 + $0x30] sm:$0xf]
        %v270 = vld [vmem:[%s257 + $0x48] sm:$0xf]
        %275 = vrot.lane.b32.xlu0 %v267, 2
        %v276 = vpop.permute.xlu0 %275
        %277 = vrot.lane.b32.xlu0 %v268, 2
        %v278 = vpop.permute.xlu0 %277
        %279 = vrot.lane.b32.xlu0 %v269, 2
        %v280 = vpop.permute.xlu0 %279
        %281 = vrot.lane.b32.xlu0 %v270, 2
        %v282 = vpop.permute.xlu0 %281
        %vm287 = vcmask 60448
        %288 = vst.msk [vmem:[%s162] sm:$0xf] %vm287, %v276
        %289 = vst.msk [vmem:[%s162 + $0x4] sm:$0xf] %vm287, %v278
        %290 = vst.msk [vmem:[%s162 + $0x8] sm:$0xf] %vm287, %v280
        %291 = vst.msk [vmem:[%s162 + $0xc] sm:$0xf] %vm287, %v282
        %v292 = vld [vmem:[%s257] sm:$0xf]
        %v293 = vld [vmem:[%s257 + $0x18] sm:$0xf]
        %v294 = vld [vmem:[%s257 + $0x30] sm:$0xf]
        %v295 = vld [vmem:[%s257 + $0x48] sm:$0xf]
        %300 = vrot.lane.b32.xlu0 %v292, 4
        %v301 = vpop.permute.xlu0 %300
        %302 = vrot.lane.b32.xlu0 %v293, 4
        %v303 = vpop.permute.xlu0 %302
        %304 = vrot.lane.b32.xlu0 %v294, 4
        %v305 = vpop.permute.xlu0 %304
        %306 = vrot.lane.b32.xlu0 %v295, 4
        %v307 = vpop.permute.xlu0 %306
        %vm312 = vcmask 93248
        %313 = vst.msk [vmem:[%s162] sm:$0xf] %vm312, %v301
        %314 = vst.msk [vmem:[%s162 + $0x4] sm:$0xf] %vm312, %v303
        %315 = vst.msk [vmem:[%s162 + $0x8] sm:$0xf] %vm312, %v305
        %316 = vst.msk [vmem:[%s162 + $0xc] sm:$0xf] %vm312, %v307
        %v317 = vld [vmem:[%s257] sm:$0xf]
        %v318 = vld [vmem:[%s257 + $0x18] sm:$0xf]
        %v319 = vld [vmem:[%s257 + $0x30] sm:$0xf]
        %v320 = vld [vmem:[%s257 + $0x48] sm:$0xf]
        %325 = vrot.lane.b32.xlu0 %v317, 6
        %v326 = vpop.permute.xlu0 %325
        %327 = vrot.lane.b32.xlu0 %v318, 6
        %v328 = vpop.permute.xlu0 %327
        %329 = vrot.lane.b32.xlu0 %v319, 6
        %v330 = vpop.permute.xlu0 %329
        %331 = vrot.lane.b32.xlu0 %v320, 6
        %v332 = vpop.permute.xlu0 %331
        %vm337 = vcmask 126048
        %338 = vst.msk [vmem:[%s162] sm:$0xf] %vm337, %v326
        %339 = vst.msk [vmem:[%s162 + $0x4] sm:$0xf] %vm337, %v328
        %340 = vst.msk [vmem:[%s162 + $0x8] sm:$0xf] %vm337, %v330
        %341 = vst.msk [vmem:[%s162 + $0xc] sm:$0xf] %vm337, %v332
        %v342 = vld [vmem:[%s257] sm:$0xf]
        %v343 = vld [vmem:[%s257 + $0x18] sm:$0xf]
        %v344 = vld [vmem:[%s257 + $0x30] sm:$0xf]
        %v345 = vld [vmem:[%s257 + $0x48] sm:$0xf]
        %350 = vrot.lane.b32.xlu0 %v342, 8
        %v351 = vpop.permute.xlu0 %350
        %352 = vrot.lane.b32.xlu0 %v343, 8
        %v353 = vpop.permute.xlu0 %352
        %354 = vrot.lane.b32.xlu0 %v344, 8
        %v355 = vpop.permute.xlu0 %354
        %356 = vrot.lane.b32.xlu0 %v345, 8
        %v357 = vpop.permute.xlu0 %356
        %vm362 = vcmask 158848
        %363 = vst.msk [vmem:[%s162] sm:$0xf] %vm362, %v351
        %364 = vst.msk [vmem:[%s162 + $0x4] sm:$0xf] %vm362, %v353
        %365 = vst.msk [vmem:[%s162 + $0x8] sm:$0xf] %vm362, %v355
        %366 = vst.msk [vmem:[%s162 + $0xc] sm:$0xf] %vm362, %v357
        %v367 = vld [vmem:[%s257] sm:$0xf]
        %v368 = vld [vmem:[%s257 + $0x18] sm:$0xf]
        %v369 = vld [vmem:[%s257 + $0x30] sm:$0xf]
        %v370 = vld [vmem:[%s257 + $0x48] sm:$0xf]
        %375 = vrot.lane.b32.xlu0 %v367, 10
        %v376 = vpop.permute.xlu0 %375
        %377 = vrot.lane.b32.xlu0 %v368, 10
        %v378 = vpop.permute.xlu0 %377
        %379 = vrot.lane.b32.xlu0 %v369, 10
        %v380 = vpop.permute.xlu0 %379
        %381 = vrot.lane.b32.xlu0 %v370, 10
        %v382 = vpop.permute.xlu0 %381
        %vm387 = vcmask 191648
        %388 = vst.msk [vmem:[%s162] sm:$0xf] %vm387, %v376
        %389 = vst.msk [vmem:[%s162 + $0x4] sm:$0xf] %vm387, %v378
        %390 = vst.msk [vmem:[%s162 + $0x8] sm:$0xf] %vm387, %v380
        %391 = vst.msk [vmem:[%s162 + $0xc] sm:$0xf] %vm387, %v382
        %v392 = vld [vmem:[%s257] sm:$0xf]
        %v393 = vld [vmem:[%s257 + $0x18] sm:$0xf]
        %v394 = vld [vmem:[%s257 + $0x30] sm:$0xf]
        %v395 = vld [vmem:[%s257 + $0x48] sm:$0xf]
        %400 = vrot.lane.b32.xlu0 %v392, 12
        %v401 = vpop.permute.xlu0 %400
        %402 = vrot.lane.b32.xlu0 %v393, 12
        %v403 = vpop.permute.xlu0 %402
        %404 = vrot.lane.b32.xlu0 %v394, 12
        %v405 = vpop.permute.xlu0 %404
        %406 = vrot.lane.b32.xlu0 %v395, 12
        %v407 = vpop.permute.xlu0 %406
        %vm412 = vcmask 224448
        %413 = vst.msk [vmem:[%s162] sm:$0xf] %vm412, %v401
        %414 = vst.msk [vmem:[%s162 + $0x4] sm:$0xf] %vm412, %v403
        %415 = vst.msk [vmem:[%s162 + $0x8] sm:$0xf] %vm412, %v405
        %416 = vst.msk [vmem:[%s162 + $0xc] sm:$0xf] %vm412, %v407
        %v417 = vld [vmem:[%s257] sm:$0xf]
        %v418 = vld [vmem:[%s257 + $0x18] sm:$0xf]
        %v419 = vld [vmem:[%s257 + $0x30] sm:$0xf]
        %v420 = vld [vmem:[%s257 + $0x48] sm:$0xf]
        %425 = vrot.lane.b32.xlu0 %v417, 14
        %v426 = vpop.permute.xlu0 %425
        %427 = vrot.lane.b32.xlu0 %v418, 14
        %v428 = vpop.permute.xlu0 %427
        %429 = vrot.lane.b32.xlu0 %v419, 14
        %v430 = vpop.permute.xlu0 %429
        %431 = vrot.lane.b32.xlu0 %v420, 14
        %v432 = vpop.permute.xlu0 %431
        %vm437 = vcmask 257248
        %438 = vst.msk [vmem:[%s162] sm:$0xf] %vm437, %v426
        %439 = vst.msk [vmem:[%s162 + $0x4] sm:$0xf] %vm437, %v428
        %440 = vst.msk [vmem:[%s162 + $0x8] sm:$0xf] %vm437, %v430
        %441 = vst.msk [vmem:[%s162 + $0xc] sm:$0xf] %vm437, %v432
        %s442 = smul.u32 %s25, 8
        %s443 = sadd.s32 %s442, 1
        %s444 = smul.u32 %s443, 2
        %s445 = scalar_lea.vmem [#allocation2], %s444
        %v446 = vld [vmem:[%s445] sm:$0xf]
        %v447 = vld [vmem:[%s445 + $0x18] sm:$0xf]
        %v448 = vld [vmem:[%s445 + $0x30] sm:$0xf]
        %v449 = vld [vmem:[%s445 + $0x48] sm:$0xf]
        %s450 = scalar_lea.vmem %s162, 16 [#allocation6]
        %451 = vst.msk [vmem:[%s450] sm:$0xf] %vm262, %v446
        %452 = vst.msk [vmem:[%s450 + $0x4] sm:$0xf] %vm262, %v447
        %453 = vst.msk [vmem:[%s450 + $0x8] sm:$0xf] %vm262, %v448
        %454 = vst.msk [vmem:[%s450 + $0xc] sm:$0xf] %vm262, %v449
        %v455 = vld [vmem:[%s445] sm:$0xf]
        %v456 = vld [vmem:[%s445 + $0x18] sm:$0xf]
        %v457 = vld [vmem:[%s445 + $0x30] sm:$0xf]
        %v458 = vld [vmem:[%s445 + $0x48] sm:$0xf]
        %463 = vrot.lane.b32.xlu0 %v455, 2
        %v464 = vpop.permute.xlu0 %463
        %465 = vrot.lane.b32.xlu0 %v456, 2
        %v466 = vpop.permute.xlu0 %465
        %467 = vrot.lane.b32.xlu0 %v457, 2
        %v468 = vpop.permute.xlu0 %467
        %469 = vrot.lane.b32.xlu0 %v458, 2
        %v470 = vpop.permute.xlu0 %469
        %475 = vst.msk [vmem:[%s450] sm:$0xf] %vm287, %v464
        %476 = vst.msk [vmem:[%s450 + $0x4] sm:$0xf] %vm287, %v466
        %477 = vst.msk [vmem:[%s450 + $0x8] sm:$0xf] %vm287, %v468
        %478 = vst.msk [vmem:[%s450 + $0xc] sm:$0xf] %vm287, %v470
        %v479 = vld [vmem:[%s445] sm:$0xf]
        %v480 = vld [vmem:[%s445 + $0x18] sm:$0xf]
        %v481 = vld [vmem:[%s445 + $0x30] sm:$0xf]
        %v482 = vld [vmem:[%s445 + $0x48] sm:$0xf]
        %487 = vrot.lane.b32.xlu0 %v479, 4
        %v488 = vpop.permute.xlu0 %487
        %489 = vrot.lane.b32.xlu0 %v480, 4
        %v490 = vpop.permute.xlu0 %489
        %491 = vrot.lane.b32.xlu0 %v481, 4
        %v492 = vpop.permute.xlu0 %491
        %493 = vrot.lane.b32.xlu0 %v482, 4
        %v494 = vpop.permute.xlu0 %493
        %499 = vst.msk [vmem:[%s450] sm:$0xf] %vm312, %v488
        %500 = vst.msk [vmem:[%s450 + $0x4] sm:$0xf] %vm312, %v490
        %501 = vst.msk [vmem:[%s450 + $0x8] sm:$0xf] %vm312, %v492
        %502 = vst.msk [vmem:[%s450 + $0xc] sm:$0xf] %vm312, %v494
        %v503 = vld [vmem:[%s445] sm:$0xf]
        %v504 = vld [vmem:[%s445 + $0x18] sm:$0xf]
        %v505 = vld [vmem:[%s445 + $0x30] sm:$0xf]
        %v506 = vld [vmem:[%s445 + $0x48] sm:$0xf]
        %511 = vrot.lane.b32.xlu0 %v503, 6
        %v512 = vpop.permute.xlu0 %511
        %513 = vrot.lane.b32.xlu0 %v504, 6
        %v514 = vpop.permute.xlu0 %513
        %515 = vrot.lane.b32.xlu0 %v505, 6
        %v516 = vpop.permute.xlu0 %515
        %517 = vrot.lane.b32.xlu0 %v506, 6
        %v518 = vpop.permute.xlu0 %517
        %523 = vst.msk [vmem:[%s450] sm:$0xf] %vm337, %v512
        %524 = vst.msk [vmem:[%s450 + $0x4] sm:$0xf] %vm337, %v514
        %525 = vst.msk [vmem:[%s450 + $0x8] sm:$0xf] %vm337, %v516
        %526 = vst.msk [vmem:[%s450 + $0xc] sm:$0xf] %vm337, %v518
        %v527 = vld [vmem:[%s445] sm:$0xf]
        %v528 = vld [vmem:[%s445 + $0x18] sm:$0xf]
        %v529 = vld [vmem:[%s445 + $0x30] sm:$0xf]
        %v530 = vld [vmem:[%s445 + $0x48] sm:$0xf]
        %535 = vrot.lane.b32.xlu0 %v527, 8
        %v536 = vpop.permute.xlu0 %535
        %537 = vrot.lane.b32.xlu0 %v528, 8
        %v538 = vpop.permute.xlu0 %537
        %539 = vrot.lane.b32.xlu0 %v529, 8
        %v540 = vpop.permute.xlu0 %539
        %541 = vrot.lane.b32.xlu0 %v530, 8
        %v542 = vpop.permute.xlu0 %541
        %547 = vst.msk [vmem:[%s450] sm:$0xf] %vm362, %v536
        %548 = vst.msk [vmem:[%s450 + $0x4] sm:$0xf] %vm362, %v538
        %549 = vst.msk [vmem:[%s450 + $0x8] sm:$0xf] %vm362, %v540
        %550 = vst.msk [vmem:[%s450 + $0xc] sm:$0xf] %vm362, %v542
        %v551 = vld [vmem:[%s445] sm:$0xf]
        %v552 = vld [vmem:[%s445 + $0x18] sm:$0xf]
        %v553 = vld [vmem:[%s445 + $0x30] sm:$0xf]
        %v554 = vld [vmem:[%s445 + $0x48] sm:$0xf]
        %559 = vrot.lane.b32.xlu0 %v551, 10
        %v560 = vpop.permute.xlu0 %559
        %561 = vrot.lane.b32.xlu0 %v552, 10
        %v562 = vpop.permute.xlu0 %561
        %563 = vrot.lane.b32.xlu0 %v553, 10
        %v564 = vpop.permute.xlu0 %563
        %565 = vrot.lane.b32.xlu0 %v554, 10
        %v566 = vpop.permute.xlu0 %565
        %571 = vst.msk [vmem:[%s450] sm:$0xf] %vm387, %v560
        %572 = vst.msk [vmem:[%s450 + $0x4] sm:$0xf] %vm387, %v562
        %573 = vst.msk [vmem:[%s450 + $0x8] sm:$0xf] %vm387, %v564
        %574 = vst.msk [vmem:[%s450 + $0xc] sm:$0xf] %vm387, %v566
        %v575 = vld [vmem:[%s445] sm:$0xf]
        %v576 = vld [vmem:[%s445 + $0x18] sm:$0xf]
        %v577 = vld [vmem:[%s445 + $0x30] sm:$0xf]
        %v578 = vld [vmem:[%s445 + $0x48] sm:$0xf]
        %583 = vrot.lane.b32.xlu0 %v575, 12
        %v584 = vpop.permute.xlu0 %583
        %585 = vrot.lane.b32.xlu0 %v576, 12
        %v586 = vpop.permute.xlu0 %585
        %587 = vrot.lane.b32.xlu0 %v577, 12
        %v588 = vpop.permute.xlu0 %587
        %589 = vrot.lane.b32.xlu0 %v578, 12
        %v590 = vpop.permute.xlu0 %589
        %595 = vst.msk [vmem:[%s450] sm:$0xf] %vm412, %v584
        %596 = vst.msk [vmem:[%s450 + $0x4] sm:$0xf] %vm412, %v586
        %597 = vst.msk [vmem:[%s450 + $0x8] sm:$0xf] %vm412, %v588
        %598 = vst.msk [vmem:[%s450 + $0xc] sm:$0xf] %vm412, %v590
        %v599 = vld [vmem:[%s445] sm:$0xf]
        %v600 = vld [vmem:[%s445 + $0x18] sm:$0xf]
        %v601 = vld [vmem:[%s445 + $0x30] sm:$0xf]
        %v602 = vld [vmem:[%s445 + $0x48] sm:$0xf]
        %607 = vrot.lane.b32.xlu0 %v599, 14
        %v608 = vpop.permute.xlu0 %607
        %609 = vrot.lane.b32.xlu0 %v600, 14
        %v610 = vpop.permute.xlu0 %609
        %611 = vrot.lane.b32.xlu0 %v601, 14
        %v612 = vpop.permute.xlu0 %611
        %613 = vrot.lane.b32.xlu0 %v602, 14
        %v614 = vpop.permute.xlu0 %613
        %619 = vst.msk [vmem:[%s450] sm:$0xf] %vm437, %v608
        %620 = vst.msk [vmem:[%s450 + $0x4] sm:$0xf] %vm437, %v610
        %621 = vst.msk [vmem:[%s450 + $0x8] sm:$0xf] %vm437, %v612
        %622 = vst.msk [vmem:[%s450 + $0xc] sm:$0xf] %vm437, %v614
        %s623 = sadd.s32 %s442, 2
        %s624 = smul.u32 %s623, 2
        %s625 = scalar_lea.vmem [#allocation2], %s624
        %v626 = vld [vmem:[%s625] sm:$0xf]
        %v627 = vld [vmem:[%s625 + $0x18] sm:$0xf]
        %v628 = vld [vmem:[%s625 + $0x30] sm:$0xf]
        %v629 = vld [vmem:[%s625 + $0x48] sm:$0xf]
        %s630 = scalar_lea.vmem %s162, 32 [#allocation6]
        %631 = vst.msk [vmem:[%s630] sm:$0xf] %vm262, %v626
        %632 = vst.msk [vmem:[%s630 + $0x4] sm:$0xf] %vm262, %v627
        %633 = vst.msk [vmem:[%s630 + $0x8] sm:$0xf] %vm262, %v628
        %634 = vst.msk [vmem:[%s630 + $0xc] sm:$0xf] %vm262, %v629
        %v635 = vld [vmem:[%s625] sm:$0xf]
        %v636 = vld [vmem:[%s625 + $0x18] sm:$0xf]
        %v637 = vld [vmem:[%s625 + $0x30] sm:$0xf]
        %v638 = vld [vmem:[%s625 + $0x48] sm:$0xf]
        %643 = vrot.lane.b32.xlu0 %v635, 2
        %v644 = vpop.permute.xlu0 %643
        %645 = vrot.lane.b32.xlu0 %v636, 2
        %v646 = vpop.permute.xlu0 %645
        %647 = vrot.lane.b32.xlu0 %v637, 2
        %v648 = vpop.permute.xlu0 %647
        %649 = vrot.lane.b32.xlu0 %v638, 2
        %v650 = vpop.permute.xlu0 %649
        %655 = vst.msk [vmem:[%s630] sm:$0xf] %vm287, %v644
        %656 = vst.msk [vmem:[%s630 + $0x4] sm:$0xf] %vm287, %v646
        %657 = vst.msk [vmem:[%s630 + $0x8] sm:$0xf] %vm287, %v648
        %658 = vst.msk [vmem:[%s630 + $0xc] sm:$0xf] %vm287, %v650
        %v659 = vld [vmem:[%s625] sm:$0xf]
        %v660 = vld [vmem:[%s625 + $0x18] sm:$0xf]
        %v661 = vld [vmem:[%s625 + $0x30] sm:$0xf]
        %v662 = vld [vmem:[%s625 + $0x48] sm:$0xf]
        %667 = vrot.lane.b32.xlu0 %v659, 4
        %v668 = vpop.permute.xlu0 %667
        %669 = vrot.lane.b32.xlu0 %v660, 4
        %v670 = vpop.permute.xlu0 %669
        %671 = vrot.lane.b32.xlu0 %v661, 4
        %v672 = vpop.permute.xlu0 %671
        %673 = vrot.lane.b32.xlu0 %v662, 4
        %v674 = vpop.permute.xlu0 %673
        %679 = vst.msk [vmem:[%s630] sm:$0xf] %vm312, %v668
        %680 = vst.msk [vmem:[%s630 + $0x4] sm:$0xf] %vm312, %v670
        %681 = vst.msk [vmem:[%s630 + $0x8] sm:$0xf] %vm312, %v672
        %682 = vst.msk [vmem:[%s630 + $0xc] sm:$0xf] %vm312, %v674
        %v683 = vld [vmem:[%s625] sm:$0xf]
        %v684 = vld [vmem:[%s625 + $0x18] sm:$0xf]
        %v685 = vld [vmem:[%s625 + $0x30] sm:$0xf]
        %v686 = vld [vmem:[%s625 + $0x48] sm:$0xf]
        %691 = vrot.lane.b32.xlu0 %v683, 6
        %v692 = vpop.permute.xlu0 %691
        %693 = vrot.lane.b32.xlu0 %v684, 6
        %v694 = vpop.permute.xlu0 %693
        %695 = vrot.lane.b32.xlu0 %v685, 6
        %v696 = vpop.permute.xlu0 %695
        %697 = vrot.lane.b32.xlu0 %v686, 6
        %v698 = vpop.permute.xlu0 %697
        %703 = vst.msk [vmem:[%s630] sm:$0xf] %vm337, %v692
        %704 = vst.msk [vmem:[%s630 + $0x4] sm:$0xf] %vm337, %v694
        %705 = vst.msk [vmem:[%s630 + $0x8] sm:$0xf] %vm337, %v696
        %706 = vst.msk [vmem:[%s630 + $0xc] sm:$0xf] %vm337, %v698
        %v707 = vld [vmem:[%s625] sm:$0xf]
        %v708 = vld [vmem:[%s625 + $0x18] sm:$0xf]
        %v709 = vld [vmem:[%s625 + $0x30] sm:$0xf]
        %v710 = vld [vmem:[%s625 + $0x48] sm:$0xf]
        %715 = vrot.lane.b32.xlu0 %v707, 8
        %v716 = vpop.permute.xlu0 %715
        %717 = vrot.lane.b32.xlu0 %v708, 8
        %v718 = vpop.permute.xlu0 %717
        %719 = vrot.lane.b32.xlu0 %v709, 8
        %v720 = vpop.permute.xlu0 %719
        %721 = vrot.lane.b32.xlu0 %v710, 8
        %v722 = vpop.permute.xlu0 %721
        %727 = vst.msk [vmem:[%s630] sm:$0xf] %vm362, %v716
        %728 = vst.msk [vmem:[%s630 + $0x4] sm:$0xf] %vm362, %v718
        %729 = vst.msk [vmem:[%s630 + $0x8] sm:$0xf] %vm362, %v720
        %730 = vst.msk [vmem:[%s630 + $0xc] sm:$0xf] %vm362, %v722
        %v731 = vld [vmem:[%s625] sm:$0xf]
        %v732 = vld [vmem:[%s625 + $0x18] sm:$0xf]
        %v733 = vld [vmem:[%s625 + $0x30] sm:$0xf]
        %v734 = vld [vmem:[%s625 + $0x48] sm:$0xf]
        %739 = vrot.lane.b32.xlu0 %v731, 10
        %v740 = vpop.permute.xlu0 %739
        %741 = vrot.lane.b32.xlu0 %v732, 10
        %v742 = vpop.permute.xlu0 %741
        %743 = vrot.lane.b32.xlu0 %v733, 10
        %v744 = vpop.permute.xlu0 %743
        %745 = vrot.lane.b32.xlu0 %v734, 10
        %v746 = vpop.permute.xlu0 %745
        %751 = vst.msk [vmem:[%s630] sm:$0xf] %vm387, %v740
        %752 = vst.msk [vmem:[%s630 + $0x4] sm:$0xf] %vm387, %v742
        %753 = vst.msk [vmem:[%s630 + $0x8] sm:$0xf] %vm387, %v744
        %754 = vst.msk [vmem:[%s630 + $0xc] sm:$0xf] %vm387, %v746
        %v755 = vld [vmem:[%s625] sm:$0xf]
        %v756 = vld [vmem:[%s625 + $0x18] sm:$0xf]
        %v757 = vld [vmem:[%s625 + $0x30] sm:$0xf]
        %v758 = vld [vmem:[%s625 + $0x48] sm:$0xf]
        %763 = vrot.lane.b32.xlu0 %v755, 12
        %v764 = vpop.permute.xlu0 %763
        %765 = vrot.lane.b32.xlu0 %v756, 12
        %v766 = vpop.permute.xlu0 %765
        %767 = vrot.lane.b32.xlu0 %v757, 12
        %v768 = vpop.permute.xlu0 %767
        %769 = vrot.lane.b32.xlu0 %v758, 12
        %v770 = vpop.permute.xlu0 %769
        %775 = vst.msk [vmem:[%s630] sm:$0xf] %vm412, %v764
        %776 = vst.msk [vmem:[%s630 + $0x4] sm:$0xf] %vm412, %v766
        %777 = vst.msk [vmem:[%s630 + $0x8] sm:$0xf] %vm412, %v768
        %778 = vst.msk [vmem:[%s630 + $0xc] sm:$0xf] %vm412, %v770
        %v779 = vld [vmem:[%s625] sm:$0xf]
        %v780 = vld [vmem:[%s625 + $0x18] sm:$0xf]
        %v781 = vld [vmem:[%s625 + $0x30] sm:$0xf]
        %v782 = vld [vmem:[%s625 + $0x48] sm:$0xf]
        %787 = vrot.lane.b32.xlu0 %v779, 14
        %v788 = vpop.permute.xlu0 %787
        %789 = vrot.lane.b32.xlu0 %v780, 14
        %v790 = vpop.permute.xlu0 %789
        %791 = vrot.lane.b32.xlu0 %v781, 14
        %v792 = vpop.permute.xlu0 %791
        %793 = vrot.lane.b32.xlu0 %v782, 14
        %v794 = vpop.permute.xlu0 %793
        %799 = vst.msk [vmem:[%s630] sm:$0xf] %vm437, %v788
        %800 = vst.msk [vmem:[%s630 + $0x4] sm:$0xf] %vm437, %v790
        %801 = vst.msk [vmem:[%s630 + $0x8] sm:$0xf] %vm437, %v792
        %802 = vst.msk [vmem:[%s630 + $0xc] sm:$0xf] %vm437, %v794
        %s803 = sadd.s32 %s442, 3
        %s804 = smul.u32 %s803, 2
        %s805 = scalar_lea.vmem [#allocation2], %s804
        %v806 = vld [vmem:[%s805] sm:$0xf]
        %v807 = vld [vmem:[%s805 + $0x18] sm:$0xf]
        %v808 = vld [vmem:[%s805 + $0x30] sm:$0xf]
        %v809 = vld [vmem:[%s805 + $0x48] sm:$0xf]
        %s810 = scalar_lea.vmem %s162, 48 [#allocation6]
        %811 = vst.msk [vmem:[%s810] sm:$0xf] %vm262, %v806
        %812 = vst.msk [vmem:[%s810 + $0x4] sm:$0xf] %vm262, %v807
        %813 = vst.msk [vmem:[%s810 + $0x8] sm:$0xf] %vm262, %v808
        %814 = vst.msk [vmem:[%s810 + $0xc] sm:$0xf] %vm262, %v809
        %v815 = vld [vmem:[%s805] sm:$0xf]
        %v816 = vld [vmem:[%s805 + $0x18] sm:$0xf]
        %v817 = vld [vmem:[%s805 + $0x30] sm:$0xf]
        %v818 = vld [vmem:[%s805 + $0x48] sm:$0xf]
        %823 = vrot.lane.b32.xlu0 %v815, 2
        %v824 = vpop.permute.xlu0 %823
        %825 = vrot.lane.b32.xlu0 %v816, 2
        %v826 = vpop.permute.xlu0 %825
        %827 = vrot.lane.b32.xlu0 %v817, 2
        %v828 = vpop.permute.xlu0 %827
        %829 = vrot.lane.b32.xlu0 %v818, 2
        %v830 = vpop.permute.xlu0 %829
        %835 = vst.msk [vmem:[%s810] sm:$0xf] %vm287, %v824
        %836 = vst.msk [vmem:[%s810 + $0x4] sm:$0xf] %vm287, %v826
        %837 = vst.msk [vmem:[%s810 + $0x8] sm:$0xf] %vm287, %v828
        %838 = vst.msk [vmem:[%s810 + $0xc] sm:$0xf] %vm287, %v830
        %v839 = vld [vmem:[%s805] sm:$0xf]
        %v840 = vld [vmem:[%s805 + $0x18] sm:$0xf]
        %v841 = vld [vmem:[%s805 + $0x30] sm:$0xf]
        %v842 = vld [vmem:[%s805 + $0x48] sm:$0xf]
        %847 = vrot.lane.b32.xlu0 %v839, 4
        %v848 = vpop.permute.xlu0 %847
        %849 = vrot.lane.b32.xlu0 %v840, 4
        %v850 = vpop.permute.xlu0 %849
        %851 = vrot.lane.b32.xlu0 %v841, 4
        %v852 = vpop.permute.xlu0 %851
        %853 = vrot.lane.b32.xlu0 %v842, 4
        %v854 = vpop.permute.xlu0 %853
        %859 = vst.msk [vmem:[%s810] sm:$0xf] %vm312, %v848
        %860 = vst.msk [vmem:[%s810 + $0x4] sm:$0xf] %vm312, %v850
        %861 = vst.msk [vmem:[%s810 + $0x8] sm:$0xf] %vm312, %v852
        %862 = vst.msk [vmem:[%s810 + $0xc] sm:$0xf] %vm312, %v854
        %v863 = vld [vmem:[%s805] sm:$0xf]
        %v864 = vld [vmem:[%s805 + $0x18] sm:$0xf]
        %v865 = vld [vmem:[%s805 + $0x30] sm:$0xf]
        %v866 = vld [vmem:[%s805 + $0x48] sm:$0xf]
        %871 = vrot.lane.b32.xlu0 %v863, 6
        %v872 = vpop.permute.xlu0 %871
        %873 = vrot.lane.b32.xlu0 %v864, 6
        %v874 = vpop.permute.xlu0 %873
        %875 = vrot.lane.b32.xlu0 %v865, 6
        %v876 = vpop.permute.xlu0 %875
        %877 = vrot.lane.b32.xlu0 %v866, 6
        %v878 = vpop.permute.xlu0 %877
        %883 = vst.msk [vmem:[%s810] sm:$0xf] %vm337, %v872
        %884 = vst.msk [vmem:[%s810 + $0x4] sm:$0xf] %vm337, %v874
        %885 = vst.msk [vmem:[%s810 + $0x8] sm:$0xf] %vm337, %v876
        %886 = vst.msk [vmem:[%s810 + $0xc] sm:$0xf] %vm337, %v878
        %v887 = vld [vmem:[%s805] sm:$0xf]
        %v888 = vld [vmem:[%s805 + $0x18] sm:$0xf]
        %v889 = vld [vmem:[%s805 + $0x30] sm:$0xf]
        %v890 = vld [vmem:[%s805 + $0x48] sm:$0xf]
        %895 = vrot.lane.b32.xlu0 %v887, 8
        %v896 = vpop.permute.xlu0 %895
        %897 = vrot.lane.b32.xlu0 %v888, 8
        %v898 = vpop.permute.xlu0 %897
        %899 = vrot.lane.b32.xlu0 %v889, 8
        %v900 = vpop.permute.xlu0 %899
        %901 = vrot.lane.b32.xlu0 %v890, 8
        %v902 = vpop.permute.xlu0 %901
        %907 = vst.msk [vmem:[%s810] sm:$0xf] %vm362, %v896
        %908 = vst.msk [vmem:[%s810 + $0x4] sm:$0xf] %vm362, %v898
        %909 = vst.msk [vmem:[%s810 + $0x8] sm:$0xf] %vm362, %v900
        %910 = vst.msk [vmem:[%s810 + $0xc] sm:$0xf] %vm362, %v902
        %v911 = vld [vmem:[%s805] sm:$0xf]
        %v912 = vld [vmem:[%s805 + $0x18] sm:$0xf]
        %v913 = vld [vmem:[%s805 + $0x30] sm:$0xf]
        %v914 = vld [vmem:[%s805 + $0x48] sm:$0xf]
        %919 = vrot.lane.b32.xlu0 %v911, 10
        %v920 = vpop.permute.xlu0 %919
        %921 = vrot.lane.b32.xlu0 %v912, 10
        %v922 = vpop.permute.xlu0 %921
        %923 = vrot.lane.b32.xlu0 %v913, 10
        %v924 = vpop.permute.xlu0 %923
        %925 = vrot.lane.b32.xlu0 %v914, 10
        %v926 = vpop.permute.xlu0 %925
        %931 = vst.msk [vmem:[%s810] sm:$0xf] %vm387, %v920
        %932 = vst.msk [vmem:[%s810 + $0x4] sm:$0xf] %vm387, %v922
        %933 = vst.msk [vmem:[%s810 + $0x8] sm:$0xf] %vm387, %v924
        %934 = vst.msk [vmem:[%s810 + $0xc] sm:$0xf] %vm387, %v926
        %v935 = vld [vmem:[%s805] sm:$0xf]
        %v936 = vld [vmem:[%s805 + $0x18] sm:$0xf]
        %v937 = vld [vmem:[%s805 + $0x30] sm:$0xf]
        %v938 = vld [vmem:[%s805 + $0x48] sm:$0xf]
        %943 = vrot.lane.b32.xlu0 %v935, 12
        %v944 = vpop.permute.xlu0 %943
        %945 = vrot.lane.b32.xlu0 %v936, 12
        %v946 = vpop.permute.xlu0 %945
        %947 = vrot.lane.b32.xlu0 %v937, 12
        %v948 = vpop.permute.xlu0 %947
        %949 = vrot.lane.b32.xlu0 %v938, 12
        %v950 = vpop.permute.xlu0 %949
        %955 = vst.msk [vmem:[%s810] sm:$0xf] %vm412, %v944
        %956 = vst.msk [vmem:[%s810 + $0x4] sm:$0xf] %vm412, %v946
        %957 = vst.msk [vmem:[%s810 + $0x8] sm:$0xf] %vm412, %v948
        %958 = vst.msk [vmem:[%s810 + $0xc] sm:$0xf] %vm412, %v950
        %v959 = vld [vmem:[%s805] sm:$0xf]
        %v960 = vld [vmem:[%s805 + $0x18] sm:$0xf]
        %v961 = vld [vmem:[%s805 + $0x30] sm:$0xf]
        %v962 = vld [vmem:[%s805 + $0x48] sm:$0xf]
        %967 = vrot.lane.b32.xlu0 %v959, 14
        %v968 = vpop.permute.xlu0 %967
        %969 = vrot.lane.b32.xlu0 %v960, 14
        %v970 = vpop.permute.xlu0 %969
        %971 = vrot.lane.b32.xlu0 %v961, 14
        %v972 = vpop.permute.xlu0 %971
        %973 = vrot.lane.b32.xlu0 %v962, 14
        %v974 = vpop.permute.xlu0 %973
        %979 = vst.msk [vmem:[%s810] sm:$0xf] %vm437, %v968
        %980 = vst.msk [vmem:[%s810 + $0x4] sm:$0xf] %vm437, %v970
        %981 = vst.msk [vmem:[%s810 + $0x8] sm:$0xf] %vm437, %v972
        %982 = vst.msk [vmem:[%s810 + $0xc] sm:$0xf] %vm437, %v974
        %s983 = sadd.s32 %s442, 4
        %s984 = smul.u32 %s983, 2
        %s985 = scalar_lea.vmem [#allocation2], %s984
        %v986 = vld [vmem:[%s985] sm:$0xf]
        %v987 = vld [vmem:[%s985 + $0x18] sm:$0xf]
        %v988 = vld [vmem:[%s985 + $0x30] sm:$0xf]
        %v989 = vld [vmem:[%s985 + $0x48] sm:$0xf]
        %s990 = scalar_lea.vmem %s162, 64 [#allocation6]
        %991 = vst.msk [vmem:[%s990] sm:$0xf] %vm262, %v986
        %992 = vst.msk [vmem:[%s990 + $0x4] sm:$0xf] %vm262, %v987
        %993 = vst.msk [vmem:[%s990 + $0x8] sm:$0xf] %vm262, %v988
        %994 = vst.msk [vmem:[%s990 + $0xc] sm:$0xf] %vm262, %v989
        %v995 = vld [vmem:[%s985] sm:$0xf]
        %v996 = vld [vmem:[%s985 + $0x18] sm:$0xf]
        %v997 = vld [vmem:[%s985 + $0x30] sm:$0xf]
        %v998 = vld [vmem:[%s985 + $0x48] sm:$0xf]
        %1003 = vrot.lane.b32.xlu0 %v995, 2
        %v1004 = vpop.permute.xlu0 %1003
        %1005 = vrot.lane.b32.xlu0 %v996, 2
        %v1006 = vpop.permute.xlu0 %1005
        %1007 = vrot.lane.b32.xlu0 %v997, 2
        %v1008 = vpop.permute.xlu0 %1007
        %1009 = vrot.lane.b32.xlu0 %v998, 2
        %v1010 = vpop.permute.xlu0 %1009
        %1015 = vst.msk [vmem:[%s990] sm:$0xf] %vm287, %v1004
        %1016 = vst.msk [vmem:[%s990 + $0x4] sm:$0xf] %vm287, %v1006
        %1017 = vst.msk [vmem:[%s990 + $0x8] sm:$0xf] %vm287, %v1008
        %1018 = vst.msk [vmem:[%s990 + $0xc] sm:$0xf] %vm287, %v1010
        %v1019 = vld [vmem:[%s985] sm:$0xf]
        %v1020 = vld [vmem:[%s985 + $0x18] sm:$0xf]
        %v1021 = vld [vmem:[%s985 + $0x30] sm:$0xf]
        %v1022 = vld [vmem:[%s985 + $0x48] sm:$0xf]
        %1027 = vrot.lane.b32.xlu0 %v1019, 4
        %v1028 = vpop.permute.xlu0 %1027
        %1029 = vrot.lane.b32.xlu0 %v1020, 4
        %v1030 = vpop.permute.xlu0 %1029
        %1031 = vrot.lane.b32.xlu0 %v1021, 4
        %v1032 = vpop.permute.xlu0 %1031
        %1033 = vrot.lane.b32.xlu0 %v1022, 4
        %v1034 = vpop.permute.xlu0 %1033
        %1039 = vst.msk [vmem:[%s990] sm:$0xf] %vm312, %v1028
        %1040 = vst.msk [vmem:[%s990 + $0x4] sm:$0xf] %vm312, %v1030
        %1041 = vst.msk [vmem:[%s990 + $0x8] sm:$0xf] %vm312, %v1032
        %1042 = vst.msk [vmem:[%s990 + $0xc] sm:$0xf] %vm312, %v1034
        %v1043 = vld [vmem:[%s985] sm:$0xf]
        %v1044 = vld [vmem:[%s985 + $0x18] sm:$0xf]
        %v1045 = vld [vmem:[%s985 + $0x30] sm:$0xf]
        %v1046 = vld [vmem:[%s985 + $0x48] sm:$0xf]
        %1051 = vrot.lane.b32.xlu0 %v1043, 6
        %v1052 = vpop.permute.xlu0 %1051
        %1053 = vrot.lane.b32.xlu0 %v1044, 6
        %v1054 = vpop.permute.xlu0 %1053
        %1055 = vrot.lane.b32.xlu0 %v1045, 6
        %v1056 = vpop.permute.xlu0 %1055
        %1057 = vrot.lane.b32.xlu0 %v1046, 6
        %v1058 = vpop.permute.xlu0 %1057
        %1063 = vst.msk [vmem:[%s990] sm:$0xf] %vm337, %v1052
        %1064 = vst.msk [vmem:[%s990 + $0x4] sm:$0xf] %vm337, %v1054
        %1065 = vst.msk [vmem:[%s990 + $0x8] sm:$0xf] %vm337, %v1056
        %1066 = vst.msk [vmem:[%s990 + $0xc] sm:$0xf] %vm337, %v1058
        %v1067 = vld [vmem:[%s985] sm:$0xf]
        %v1068 = vld [vmem:[%s985 + $0x18] sm:$0xf]
        %v1069 = vld [vmem:[%s985 + $0x30] sm:$0xf]
        %v1070 = vld [vmem:[%s985 + $0x48] sm:$0xf]
        %1075 = vrot.lane.b32.xlu0 %v1067, 8
        %v1076 = vpop.permute.xlu0 %1075
        %1077 = vrot.lane.b32.xlu0 %v1068, 8
        %v1078 = vpop.permute.xlu0 %1077
        %1079 = vrot.lane.b32.xlu0 %v1069, 8
        %v1080 = vpop.permute.xlu0 %1079
        %1081 = vrot.lane.b32.xlu0 %v1070, 8
        %v1082 = vpop.permute.xlu0 %1081
        %1087 = vst.msk [vmem:[%s990] sm:$0xf] %vm362, %v1076
        %1088 = vst.msk [vmem:[%s990 + $0x4] sm:$0xf] %vm362, %v1078
        %1089 = vst.msk [vmem:[%s990 + $0x8] sm:$0xf] %vm362, %v1080
        %1090 = vst.msk [vmem:[%s990 + $0xc] sm:$0xf] %vm362, %v1082
        %v1091 = vld [vmem:[%s985] sm:$0xf]
        %v1092 = vld [vmem:[%s985 + $0x18] sm:$0xf]
        %v1093 = vld [vmem:[%s985 + $0x30] sm:$0xf]
        %v1094 = vld [vmem:[%s985 + $0x48] sm:$0xf]
        %1099 = vrot.lane.b32.xlu0 %v1091, 10
        %v1100 = vpop.permute.xlu0 %1099
        %1101 = vrot.lane.b32.xlu0 %v1092, 10
        %v1102 = vpop.permute.xlu0 %1101
        %1103 = vrot.lane.b32.xlu0 %v1093, 10
        %v1104 = vpop.permute.xlu0 %1103
        %1105 = vrot.lane.b32.xlu0 %v1094, 10
        %v1106 = vpop.permute.xlu0 %1105
        %1111 = vst.msk [vmem:[%s990] sm:$0xf] %vm387, %v1100
        %1112 = vst.msk [vmem:[%s990 + $0x4] sm:$0xf] %vm387, %v1102
        %1113 = vst.msk [vmem:[%s990 + $0x8] sm:$0xf] %vm387, %v1104
        %1114 = vst.msk [vmem:[%s990 + $0xc] sm:$0xf] %vm387, %v1106
        %v1115 = vld [vmem:[%s985] sm:$0xf]
        %v1116 = vld [vmem:[%s985 + $0x18] sm:$0xf]
        %v1117 = vld [vmem:[%s985 + $0x30] sm:$0xf]
        %v1118 = vld [vmem:[%s985 + $0x48] sm:$0xf]
        %1123 = vrot.lane.b32.xlu0 %v1115, 12
        %v1124 = vpop.permute.xlu0 %1123
        %1125 = vrot.lane.b32.xlu0 %v1116, 12
        %v1126 = vpop.permute.xlu0 %1125
        %1127 = vrot.lane.b32.xlu0 %v1117, 12
        %v1128 = vpop.permute.xlu0 %1127
        %1129 = vrot.lane.b32.xlu0 %v1118, 12
        %v1130 = vpop.permute.xlu0 %1129
        %1135 = vst.msk [vmem:[%s990] sm:$0xf] %vm412, %v1124
        %1136 = vst.msk [vmem:[%s990 + $0x4] sm:$0xf] %vm412, %v1126
        %1137 = vst.msk [vmem:[%s990 + $0x8] sm:$0xf] %vm412, %v1128
        %1138 = vst.msk [vmem:[%s990 + $0xc] sm:$0xf] %vm412, %v1130
        %v1139 = vld [vmem:[%s985] sm:$0xf]
        %v1140 = vld [vmem:[%s985 + $0x18] sm:$0xf]
        %v1141 = vld [vmem:[%s985 + $0x30] sm:$0xf]
        %v1142 = vld [vmem:[%s985 + $0x48] sm:$0xf]
        %1147 = vrot.lane.b32.xlu0 %v1139, 14
        %v1148 = vpop.permute.xlu0 %1147
        %1149 = vrot.lane.b32.xlu0 %v1140, 14
        %v1150 = vpop.permute.xlu0 %1149
        %1151 = vrot.lane.b32.xlu0 %v1141, 14
        %v1152 = vpop.permute.xlu0 %1151
        %1153 = vrot.lane.b32.xlu0 %v1142, 14
        %v1154 = vpop.permute.xlu0 %1153
        %1159 = vst.msk [vmem:[%s990] sm:$0xf] %vm437, %v1148
        %1160 = vst.msk [vmem:[%s990 + $0x4] sm:$0xf] %vm437, %v1150
        %1161 = vst.msk [vmem:[%s990 + $0x8] sm:$0xf] %vm437, %v1152
        %1162 = vst.msk [vmem:[%s990 + $0xc] sm:$0xf] %vm437, %v1154
        %s1163 = sadd.s32 %s442, 5
        %s1164 = smul.u32 %s1163, 2
        %s1165 = scalar_lea.vmem [#allocation2], %s1164
        %v1166 = vld [vmem:[%s1165] sm:$0xf]
        %v1167 = vld [vmem:[%s1165 + $0x18] sm:$0xf]
        %v1168 = vld [vmem:[%s1165 + $0x30] sm:$0xf]
        %v1169 = vld [vmem:[%s1165 + $0x48] sm:$0xf]
        %s1170 = scalar_lea.vmem %s162, 80 [#allocation6]
        %1171 = vst.msk [vmem:[%s1170] sm:$0xf] %vm262, %v1166
        %1172 = vst.msk [vmem:[%s1170 + $0x4] sm:$0xf] %vm262, %v1167
        %1173 = vst.msk [vmem:[%s1170 + $0x8] sm:$0xf] %vm262, %v1168
        %1174 = vst.msk [vmem:[%s1170 + $0xc] sm:$0xf] %vm262, %v1169
        %v1175 = vld [vmem:[%s1165] sm:$0xf]
        %v1176 = vld [vmem:[%s1165 + $0x18] sm:$0xf]
        %v1177 = vld [vmem:[%s1165 + $0x30] sm:$0xf]
        %v1178 = vld [vmem:[%s1165 + $0x48] sm:$0xf]
        %1183 = vrot.lane.b32.xlu0 %v1175, 2
        %v1184 = vpop.permute.xlu0 %1183
        %1185 = vrot.lane.b32.xlu0 %v1176, 2
        %v1186 = vpop.permute.xlu0 %1185
        %1187 = vrot.lane.b32.xlu0 %v1177, 2
        %v1188 = vpop.permute.xlu0 %1187
        %1189 = vrot.lane.b32.xlu0 %v1178, 2
        %v1190 = vpop.permute.xlu0 %1189
        %1195 = vst.msk [vmem:[%s1170] sm:$0xf] %vm287, %v1184
        %1196 = vst.msk [vmem:[%s1170 + $0x4] sm:$0xf] %vm287, %v1186
        %1197 = vst.msk [vmem:[%s1170 + $0x8] sm:$0xf] %vm287, %v1188
        %1198 = vst.msk [vmem:[%s1170 + $0xc] sm:$0xf] %vm287, %v1190
        %v1199 = vld [vmem:[%s1165] sm:$0xf]
        %v1200 = vld [vmem:[%s1165 + $0x18] sm:$0xf]
        %v1201 = vld [vmem:[%s1165 + $0x30] sm:$0xf]
        %v1202 = vld [vmem:[%s1165 + $0x48] sm:$0xf]
        %1207 = vrot.lane.b32.xlu0 %v1199, 4
        %v1208 = vpop.permute.xlu0 %1207
        %1209 = vrot.lane.b32.xlu0 %v1200, 4
        %v1210 = vpop.permute.xlu0 %1209
        %1211 = vrot.lane.b32.xlu0 %v1201, 4
        %v1212 = vpop.permute.xlu0 %1211
        %1213 = vrot.lane.b32.xlu0 %v1202, 4
        %v1214 = vpop.permute.xlu0 %1213
        %1219 = vst.msk [vmem:[%s1170] sm:$0xf] %vm312, %v1208
        %1220 = vst.msk [vmem:[%s1170 + $0x4] sm:$0xf] %vm312, %v1210
        %1221 = vst.msk [vmem:[%s1170 + $0x8] sm:$0xf] %vm312, %v1212
        %1222 = vst.msk [vmem:[%s1170 + $0xc] sm:$0xf] %vm312, %v1214
        %v1223 = vld [vmem:[%s1165] sm:$0xf]
        %v1224 = vld [vmem:[%s1165 + $0x18] sm:$0xf]
        %v1225 = vld [vmem:[%s1165 + $0x30] sm:$0xf]
        %v1226 = vld [vmem:[%s1165 + $0x48] sm:$0xf]
        %1231 = vrot.lane.b32.xlu0 %v1223, 6
        %v1232 = vpop.permute.xlu0 %1231
        %1233 = vrot.lane.b32.xlu0 %v1224, 6
        %v1234 = vpop.permute.xlu0 %1233
        %1235 = vrot.lane.b32.xlu0 %v1225, 6
        %v1236 = vpop.permute.xlu0 %1235
        %1237 = vrot.lane.b32.xlu0 %v1226, 6
        %v1238 = vpop.permute.xlu0 %1237
        %1243 = vst.msk [vmem:[%s1170] sm:$0xf] %vm337, %v1232
        %1244 = vst.msk [vmem:[%s1170 + $0x4] sm:$0xf] %vm337, %v1234
        %1245 = vst.msk [vmem:[%s1170 + $0x8] sm:$0xf] %vm337, %v1236
        %1246 = vst.msk [vmem:[%s1170 + $0xc] sm:$0xf] %vm337, %v1238
        %v1247 = vld [vmem:[%s1165] sm:$0xf]
        %v1248 = vld [vmem:[%s1165 + $0x18] sm:$0xf]
        %v1249 = vld [vmem:[%s1165 + $0x30] sm:$0xf]
        %v1250 = vld [vmem:[%s1165 + $0x48] sm:$0xf]
        %1255 = vrot.lane.b32.xlu0 %v1247, 8
        %v1256 = vpop.permute.xlu0 %1255
        %1257 = vrot.lane.b32.xlu0 %v1248, 8
        %v1258 = vpop.permute.xlu0 %1257
        %1259 = vrot.lane.b32.xlu0 %v1249, 8
        %v1260 = vpop.permute.xlu0 %1259
        %1261 = vrot.lane.b32.xlu0 %v1250, 8
        %v1262 = vpop.permute.xlu0 %1261
        %1267 = vst.msk [vmem:[%s1170] sm:$0xf] %vm362, %v1256
        %1268 = vst.msk [vmem:[%s1170 + $0x4] sm:$0xf] %vm362, %v1258
        %1269 = vst.msk [vmem:[%s1170 + $0x8] sm:$0xf] %vm362, %v1260
        %1270 = vst.msk [vmem:[%s1170 + $0xc] sm:$0xf] %vm362, %v1262
        %v1271 = vld [vmem:[%s1165] sm:$0xf]
        %v1272 = vld [vmem:[%s1165 + $0x18] sm:$0xf]
        %v1273 = vld [vmem:[%s1165 + $0x30] sm:$0xf]
        %v1274 = vld [vmem:[%s1165 + $0x48] sm:$0xf]
        %1279 = vrot.lane.b32.xlu0 %v1271, 10
        %v1280 = vpop.permute.xlu0 %1279
        %1281 = vrot.lane.b32.xlu0 %v1272, 10
        %v1282 = vpop.permute.xlu0 %1281
        %1283 = vrot.lane.b32.xlu0 %v1273, 10
        %v1284 = vpop.permute.xlu0 %1283
        %1285 = vrot.lane.b32.xlu0 %v1274, 10
        %v1286 = vpop.permute.xlu0 %1285
        %1291 = vst.msk [vmem:[%s1170] sm:$0xf] %vm387, %v1280
        %1292 = vst.msk [vmem:[%s1170 + $0x4] sm:$0xf] %vm387, %v1282
        %1293 = vst.msk [vmem:[%s1170 + $0x8] sm:$0xf] %vm387, %v1284
        %1294 = vst.msk [vmem:[%s1170 + $0xc] sm:$0xf] %vm387, %v1286
        %v1295 = vld [vmem:[%s1165] sm:$0xf]
        %v1296 = vld [vmem:[%s1165 + $0x18] sm:$0xf]
        %v1297 = vld [vmem:[%s1165 + $0x30] sm:$0xf]
        %v1298 = vld [vmem:[%s1165 + $0x48] sm:$0xf]
        %1303 = vrot.lane.b32.xlu0 %v1295, 12
        %v1304 = vpop.permute.xlu0 %1303
        %1305 = vrot.lane.b32.xlu0 %v1296, 12
        %v1306 = vpop.permute.xlu0 %1305
        %1307 = vrot.lane.b32.xlu0 %v1297, 12
        %v1308 = vpop.permute.xlu0 %1307
        %1309 = vrot.lane.b32.xlu0 %v1298, 12
        %v1310 = vpop.permute.xlu0 %1309
        %1315 = vst.msk [vmem:[%s1170] sm:$0xf] %vm412, %v1304
        %1316 = vst.msk [vmem:[%s1170 + $0x4] sm:$0xf] %vm412, %v1306
        %1317 = vst.msk [vmem:[%s1170 + $0x8] sm:$0xf] %vm412, %v1308
        %1318 = vst.msk [vmem:[%s1170 + $0xc] sm:$0xf] %vm412, %v1310
        %v1319 = vld [vmem:[%s1165] sm:$0xf]
        %v1320 = vld [vmem:[%s1165 + $0x18] sm:$0xf]
        %v1321 = vld [vmem:[%s1165 + $0x30] sm:$0xf]
        %v1322 = vld [vmem:[%s1165 + $0x48] sm:$0xf]
        %1327 = vrot.lane.b32.xlu0 %v1319, 14
        %v1328 = vpop.permute.xlu0 %1327
        %1329 = vrot.lane.b32.xlu0 %v1320, 14
        %v1330 = vpop.permute.xlu0 %1329
        %1331 = vrot.lane.b32.xlu0 %v1321, 14
        %v1332 = vpop.permute.xlu0 %1331
        %1333 = vrot.lane.b32.xlu0 %v1322, 14
        %v1334 = vpop.permute.xlu0 %1333
        %1339 = vst.msk [vmem:[%s1170] sm:$0xf] %vm437, %v1328
        %1340 = vst.msk [vmem:[%s1170 + $0x4] sm:$0xf] %vm437, %v1330
        %1341 = vst.msk [vmem:[%s1170 + $0x8] sm:$0xf] %vm437, %v1332
        %1342 = vst.msk [vmem:[%s1170 + $0xc] sm:$0xf] %vm437, %v1334
        %s1343 = sadd.s32 %s442, 6
        %s1344 = smul.u32 %s1343, 2
        %s1345 = scalar_lea.vmem [#allocation2], %s1344
        %v1346 = vld [vmem:[%s1345] sm:$0xf]
        %v1347 = vld [vmem:[%s1345 + $0x18] sm:$0xf]
        %v1348 = vld [vmem:[%s1345 + $0x30] sm:$0xf]
        %v1349 = vld [vmem:[%s1345 + $0x48] sm:$0xf]
        %s1350 = scalar_lea.vmem %s162, 96 [#allocation6]
        %1351 = vst.msk [vmem:[%s1350] sm:$0xf] %vm262, %v1346
        %1352 = vst.msk [vmem:[%s1350 + $0x4] sm:$0xf] %vm262, %v1347
        %1353 = vst.msk [vmem:[%s1350 + $0x8] sm:$0xf] %vm262, %v1348
        %1354 = vst.msk [vmem:[%s1350 + $0xc] sm:$0xf] %vm262, %v1349
        %v1355 = vld [vmem:[%s1345] sm:$0xf]
        %v1356 = vld [vmem:[%s1345 + $0x18] sm:$0xf]
        %v1357 = vld [vmem:[%s1345 + $0x30] sm:$0xf]
        %v1358 = vld [vmem:[%s1345 + $0x48] sm:$0xf]
        %1363 = vrot.lane.b32.xlu0 %v1355, 2
        %v1364 = vpop.permute.xlu0 %1363
        %1365 = vrot.lane.b32.xlu0 %v1356, 2
        %v1366 = vpop.permute.xlu0 %1365
        %1367 = vrot.lane.b32.xlu0 %v1357, 2
        %v1368 = vpop.permute.xlu0 %1367
        %1369 = vrot.lane.b32.xlu0 %v1358, 2
        %v1370 = vpop.permute.xlu0 %1369
        %1375 = vst.msk [vmem:[%s1350] sm:$0xf] %vm287, %v1364
        %1376 = vst.msk [vmem:[%s1350 + $0x4] sm:$0xf] %vm287, %v1366
        %1377 = vst.msk [vmem:[%s1350 + $0x8] sm:$0xf] %vm287, %v1368
        %1378 = vst.msk [vmem:[%s1350 + $0xc] sm:$0xf] %vm287, %v1370
        %v1379 = vld [vmem:[%s1345] sm:$0xf]
        %v1380 = vld [vmem:[%s1345 + $0x18] sm:$0xf]
        %v1381 = vld [vmem:[%s1345 + $0x30] sm:$0xf]
        %v1382 = vld [vmem:[%s1345 + $0x48] sm:$0xf]
        %1387 = vrot.lane.b32.xlu0 %v1379, 4
        %v1388 = vpop.permute.xlu0 %1387
        %1389 = vrot.lane.b32.xlu0 %v1380, 4
        %v1390 = vpop.permute.xlu0 %1389
        %1391 = vrot.lane.b32.xlu0 %v1381, 4
        %v1392 = vpop.permute.xlu0 %1391
        %1393 = vrot.lane.b32.xlu0 %v1382, 4
        %v1394 = vpop.permute.xlu0 %1393
        %1399 = vst.msk [vmem:[%s1350] sm:$0xf] %vm312, %v1388
        %1400 = vst.msk [vmem:[%s1350 + $0x4] sm:$0xf] %vm312, %v1390
        %1401 = vst.msk [vmem:[%s1350 + $0x8] sm:$0xf] %vm312, %v1392
        %1402 = vst.msk [vmem:[%s1350 + $0xc] sm:$0xf] %vm312, %v1394
        %v1403 = vld [vmem:[%s1345] sm:$0xf]
        %v1404 = vld [vmem:[%s1345 + $0x18] sm:$0xf]
        %v1405 = vld [vmem:[%s1345 + $0x30] sm:$0xf]
        %v1406 = vld [vmem:[%s1345 + $0x48] sm:$0xf]
        %1411 = vrot.lane.b32.xlu0 %v1403, 6
        %v1412 = vpop.permute.xlu0 %1411
        %1413 = vrot.lane.b32.xlu0 %v1404, 6
        %v1414 = vpop.permute.xlu0 %1413
        %1415 = vrot.lane.b32.xlu0 %v1405, 6
        %v1416 = vpop.permute.xlu0 %1415
        %1417 = vrot.lane.b32.xlu0 %v1406, 6
        %v1418 = vpop.permute.xlu0 %1417
        %1423 = vst.msk [vmem:[%s1350] sm:$0xf] %vm337, %v1412
        %1424 = vst.msk [vmem:[%s1350 + $0x4] sm:$0xf] %vm337, %v1414
        %1425 = vst.msk [vmem:[%s1350 + $0x8] sm:$0xf] %vm337, %v1416
        %1426 = vst.msk [vmem:[%s1350 + $0xc] sm:$0xf] %vm337, %v1418
        %v1427 = vld [vmem:[%s1345] sm:$0xf]
        %v1428 = vld [vmem:[%s1345 + $0x18] sm:$0xf]
        %v1429 = vld [vmem:[%s1345 + $0x30] sm:$0xf]
        %v1430 = vld [vmem:[%s1345 + $0x48] sm:$0xf]
        %1435 = vrot.lane.b32.xlu0 %v1427, 8
        %v1436 = vpop.permute.xlu0 %1435
        %1437 = vrot.lane.b32.xlu0 %v1428, 8
        %v1438 = vpop.permute.xlu0 %1437
        %1439 = vrot.lane.b32.xlu0 %v1429, 8
        %v1440 = vpop.permute.xlu0 %1439
        %1441 = vrot.lane.b32.xlu0 %v1430, 8
        %v1442 = vpop.permute.xlu0 %1441
        %1447 = vst.msk [vmem:[%s1350] sm:$0xf] %vm362, %v1436
        %1448 = vst.msk [vmem:[%s1350 + $0x4] sm:$0xf] %vm362, %v1438
        %1449 = vst.msk [vmem:[%s1350 + $0x8] sm:$0xf] %vm362, %v1440
        %1450 = vst.msk [vmem:[%s1350 + $0xc] sm:$0xf] %vm362, %v1442
        %v1451 = vld [vmem:[%s1345] sm:$0xf]
        %v1452 = vld [vmem:[%s1345 + $0x18] sm:$0xf]
        %v1453 = vld [vmem:[%s1345 + $0x30] sm:$0xf]
        %v1454 = vld [vmem:[%s1345 + $0x48] sm:$0xf]
        %1459 = vrot.lane.b32.xlu0 %v1451, 10
        %v1460 = vpop.permute.xlu0 %1459
        %1461 = vrot.lane.b32.xlu0 %v1452, 10
        %v1462 = vpop.permute.xlu0 %1461
        %1463 = vrot.lane.b32.xlu0 %v1453, 10
        %v1464 = vpop.permute.xlu0 %1463
        %1465 = vrot.lane.b32.xlu0 %v1454, 10
        %v1466 = vpop.permute.xlu0 %1465
        %1471 = vst.msk [vmem:[%s1350] sm:$0xf] %vm387, %v1460
        %1472 = vst.msk [vmem:[%s1350 + $0x4] sm:$0xf] %vm387, %v1462
        %1473 = vst.msk [vmem:[%s1350 + $0x8] sm:$0xf] %vm387, %v1464
        %1474 = vst.msk [vmem:[%s1350 + $0xc] sm:$0xf] %vm387, %v1466
        %v1475 = vld [vmem:[%s1345] sm:$0xf]
        %v1476 = vld [vmem:[%s1345 + $0x18] sm:$0xf]
        %v1477 = vld [vmem:[%s1345 + $0x30] sm:$0xf]
        %v1478 = vld [vmem:[%s1345 + $0x48] sm:$0xf]
        %1483 = vrot.lane.b32.xlu0 %v1475, 12
        %v1484 = vpop.permute.xlu0 %1483
        %1485 = vrot.lane.b32.xlu0 %v1476, 12
        %v1486 = vpop.permute.xlu0 %1485
        %1487 = vrot.lane.b32.xlu0 %v1477, 12
        %v1488 = vpop.permute.xlu0 %1487
        %1489 = vrot.lane.b32.xlu0 %v1478, 12
        %v1490 = vpop.permute.xlu0 %1489
        %1495 = vst.msk [vmem:[%s1350] sm:$0xf] %vm412, %v1484
        %1496 = vst.msk [vmem:[%s1350 + $0x4] sm:$0xf] %vm412, %v1486
        %1497 = vst.msk [vmem:[%s1350 + $0x8] sm:$0xf] %vm412, %v1488
        %1498 = vst.msk [vmem:[%s1350 + $0xc] sm:$0xf] %vm412, %v1490
        %v1499 = vld [vmem:[%s1345] sm:$0xf]
        %v1500 = vld [vmem:[%s1345 + $0x18] sm:$0xf]
        %v1501 = vld [vmem:[%s1345 + $0x30] sm:$0xf]
        %v1502 = vld [vmem:[%s1345 + $0x48] sm:$0xf]
        %1507 = vrot.lane.b32.xlu0 %v1499, 14
        %v1508 = vpop.permute.xlu0 %1507
        %1509 = vrot.lane.b32.xlu0 %v1500, 14
        %v1510 = vpop.permute.xlu0 %1509
        %1511 = vrot.lane.b32.xlu0 %v1501, 14
        %v1512 = vpop.permute.xlu0 %1511
        %1513 = vrot.lane.b32.xlu0 %v1502, 14
        %v1514 = vpop.permute.xlu0 %1513
        %1519 = vst.msk [vmem:[%s1350] sm:$0xf] %vm437, %v1508
        %1520 = vst.msk [vmem:[%s1350 + $0x4] sm:$0xf] %vm437, %v1510
        %1521 = vst.msk [vmem:[%s1350 + $0x8] sm:$0xf] %vm437, %v1512
        %1522 = vst.msk [vmem:[%s1350 + $0xc] sm:$0xf] %vm437, %v1514
        %s1523 = sadd.s32 %s442, 7
        %s1524 = smul.u32 %s1523, 2
        %s1525 = scalar_lea.vmem [#allocation2], %s1524
        %v1526 = vld [vmem:[%s1525] sm:$0xf]
        %v1527 = vld [vmem:[%s1525 + $0x18] sm:$0xf]
        %v1528 = vld [vmem:[%s1525 + $0x30] sm:$0xf]
        %v1529 = vld [vmem:[%s1525 + $0x48] sm:$0xf]
        %s1530 = scalar_lea.vmem %s162, 112 [#allocation6]
        %1531 = vst.msk [vmem:[%s1530] sm:$0xf] %vm262, %v1526
        %1532 = vst.msk [vmem:[%s1530 + $0x4] sm:$0xf] %vm262, %v1527
        %1533 = vst.msk [vmem:[%s1530 + $0x8] sm:$0xf] %vm262, %v1528
        %1534 = vst.msk [vmem:[%s1530 + $0xc] sm:$0xf] %vm262, %v1529
        %v1535 = vld [vmem:[%s1525] sm:$0xf]
        %v1536 = vld [vmem:[%s1525 + $0x18] sm:$0xf]
        %v1537 = vld [vmem:[%s1525 + $0x30] sm:$0xf]
        %v1538 = vld [vmem:[%s1525 + $0x48] sm:$0xf]
        %1543 = vrot.lane.b32.xlu0 %v1535, 2
        %v1544 = vpop.permute.xlu0 %1543
        %1545 = vrot.lane.b32.xlu0 %v1536, 2
        %v1546 = vpop.permute.xlu0 %1545
        %1547 = vrot.lane.b32.xlu0 %v1537, 2
        %v1548 = vpop.permute.xlu0 %1547
        %1549 = vrot.lane.b32.xlu0 %v1538, 2
        %v1550 = vpop.permute.xlu0 %1549
        %1555 = vst.msk [vmem:[%s1530] sm:$0xf] %vm287, %v1544
        %1556 = vst.msk [vmem:[%s1530 + $0x4] sm:$0xf] %vm287, %v1546
        %1557 = vst.msk [vmem:[%s1530 + $0x8] sm:$0xf] %vm287, %v1548
        %1558 = vst.msk [vmem:[%s1530 + $0xc] sm:$0xf] %vm287, %v1550
        %v1559 = vld [vmem:[%s1525] sm:$0xf]
        %v1560 = vld [vmem:[%s1525 + $0x18] sm:$0xf]
        %v1561 = vld [vmem:[%s1525 + $0x30] sm:$0xf]
        %v1562 = vld [vmem:[%s1525 + $0x48] sm:$0xf]
        %1567 = vrot.lane.b32.xlu0 %v1559, 4
        %v1568 = vpop.permute.xlu0 %1567
        %1569 = vrot.lane.b32.xlu0 %v1560, 4
        %v1570 = vpop.permute.xlu0 %1569
        %1571 = vrot.lane.b32.xlu0 %v1561, 4
        %v1572 = vpop.permute.xlu0 %1571
        %1573 = vrot.lane.b32.xlu0 %v1562, 4
        %v1574 = vpop.permute.xlu0 %1573
        %1579 = vst.msk [vmem:[%s1530] sm:$0xf] %vm312, %v1568
        %1580 = vst.msk [vmem:[%s1530 + $0x4] sm:$0xf] %vm312, %v1570
        %1581 = vst.msk [vmem:[%s1530 + $0x8] sm:$0xf] %vm312, %v1572
        %1582 = vst.msk [vmem:[%s1530 + $0xc] sm:$0xf] %vm312, %v1574
        %v1583 = vld [vmem:[%s1525] sm:$0xf]
        %v1584 = vld [vmem:[%s1525 + $0x18] sm:$0xf]
        %v1585 = vld [vmem:[%s1525 + $0x30] sm:$0xf]
        %v1586 = vld [vmem:[%s1525 + $0x48] sm:$0xf]
        %1591 = vrot.lane.b32.xlu0 %v1583, 6
        %v1592 = vpop.permute.xlu0 %1591
        %1593 = vrot.lane.b32.xlu0 %v1584, 6
        %v1594 = vpop.permute.xlu0 %1593
        %1595 = vrot.lane.b32.xlu0 %v1585, 6
        %v1596 = vpop.permute.xlu0 %1595
        %1597 = vrot.lane.b32.xlu0 %v1586, 6
        %v1598 = vpop.permute.xlu0 %1597
        %1603 = vst.msk [vmem:[%s1530] sm:$0xf] %vm337, %v1592
        %1604 = vst.msk [vmem:[%s1530 + $0x4] sm:$0xf] %vm337, %v1594
        %1605 = vst.msk [vmem:[%s1530 + $0x8] sm:$0xf] %vm337, %v1596
        %1606 = vst.msk [vmem:[%s1530 + $0xc] sm:$0xf] %vm337, %v1598
        %v1607 = vld [vmem:[%s1525] sm:$0xf]
        %v1608 = vld [vmem:[%s1525 + $0x18] sm:$0xf]
        %v1609 = vld [vmem:[%s1525 + $0x30] sm:$0xf]
        %v1610 = vld [vmem:[%s1525 + $0x48] sm:$0xf]
        %1615 = vrot.lane.b32.xlu0 %v1607, 8
        %v1616 = vpop.permute.xlu0 %1615
        %1617 = vrot.lane.b32.xlu0 %v1608, 8
        %v1618 = vpop.permute.xlu0 %1617
        %1619 = vrot.lane.b32.xlu0 %v1609, 8
        %v1620 = vpop.permute.xlu0 %1619
        %1621 = vrot.lane.b32.xlu0 %v1610, 8
        %v1622 = vpop.permute.xlu0 %1621
        %1627 = vst.msk [vmem:[%s1530] sm:$0xf] %vm362, %v1616
        %1628 = vst.msk [vmem:[%s1530 + $0x4] sm:$0xf] %vm362, %v1618
        %1629 = vst.msk [vmem:[%s1530 + $0x8] sm:$0xf] %vm362, %v1620
        %1630 = vst.msk [vmem:[%s1530 + $0xc] sm:$0xf] %vm362, %v1622
        %v1631 = vld [vmem:[%s1525] sm:$0xf]
        %v1632 = vld [vmem:[%s1525 + $0x18] sm:$0xf]
        %v1633 = vld [vmem:[%s1525 + $0x30] sm:$0xf]
        %v1634 = vld [vmem:[%s1525 + $0x48] sm:$0xf]
        %1639 = vrot.lane.b32.xlu0 %v1631, 10
        %v1640 = vpop.permute.xlu0 %1639
        %1641 = vrot.lane.b32.xlu0 %v1632, 10
        %v1642 = vpop.permute.xlu0 %1641
        %1643 = vrot.lane.b32.xlu0 %v1633, 10
        %v1644 = vpop.permute.xlu0 %1643
        %1645 = vrot.lane.b32.xlu0 %v1634, 10
        %v1646 = vpop.permute.xlu0 %1645
        %1651 = vst.msk [vmem:[%s1530] sm:$0xf] %vm387, %v1640
        %1652 = vst.msk [vmem:[%s1530 + $0x4] sm:$0xf] %vm387, %v1642
        %1653 = vst.msk [vmem:[%s1530 + $0x8] sm:$0xf] %vm387, %v1644
        %1654 = vst.msk [vmem:[%s1530 + $0xc] sm:$0xf] %vm387, %v1646
        %v1655 = vld [vmem:[%s1525] sm:$0xf]
        %v1656 = vld [vmem:[%s1525 + $0x18] sm:$0xf]
        %v1657 = vld [vmem:[%s1525 + $0x30] sm:$0xf]
        %v1658 = vld [vmem:[%s1525 + $0x48] sm:$0xf]
        %1663 = vrot.lane.b32.xlu0 %v1655, 12
        %v1664 = vpop.permute.xlu0 %1663
        %1665 = vrot.lane.b32.xlu0 %v1656, 12
        %v1666 = vpop.permute.xlu0 %1665
        %1667 = vrot.lane.b32.xlu0 %v1657, 12
        %v1668 = vpop.permute.xlu0 %1667
        %1669 = vrot.lane.b32.xlu0 %v1658, 12
        %v1670 = vpop.permute.xlu0 %1669
        %1675 = vst.msk [vmem:[%s1530] sm:$0xf] %vm412, %v1664
        %1676 = vst.msk [vmem:[%s1530 + $0x4] sm:$0xf] %vm412, %v1666
        %1677 = vst.msk [vmem:[%s1530 + $0x8] sm:$0xf] %vm412, %v1668
        %1678 = vst.msk [vmem:[%s1530 + $0xc] sm:$0xf] %vm412, %v1670
        %v1679 = vld [vmem:[%s1525] sm:$0xf]
        %v1680 = vld [vmem:[%s1525 + $0x18] sm:$0xf]
        %v1681 = vld [vmem:[%s1525 + $0x30] sm:$0xf]
        %v1682 = vld [vmem:[%s1525 + $0x48] sm:$0xf]
        %1687 = vrot.lane.b32.xlu0 %v1679, 14
        %v1688 = vpop.permute.xlu0 %1687
        %1689 = vrot.lane.b32.xlu0 %v1680, 14
        %v1690 = vpop.permute.xlu0 %1689
        %1691 = vrot.lane.b32.xlu0 %v1681, 14
        %v1692 = vpop.permute.xlu0 %1691
        %1693 = vrot.lane.b32.xlu0 %v1682, 14
        %v1694 = vpop.permute.xlu0 %1693
        %1699 = vst.msk [vmem:[%s1530] sm:$0xf] %vm437, %v1688
        %1700 = vst.msk [vmem:[%s1530 + $0x4] sm:$0xf] %vm437, %v1690
        %1701 = vst.msk [vmem:[%s1530 + $0x8] sm:$0xf] %vm437, %v1692
        %1702 = vst.msk [vmem:[%s1530 + $0xc] sm:$0xf] %vm437, %v1694
        %s1703 = sand.u32 %s77, 1
        %s1704 = scalar_lea.sflag [#allocation5], %s1703
        %s1705 = sand.u32 %s77, 1
        %s1706 = smul.addr %s1705, 128
        %s1707 = scalar_lea.vmem [#allocation6], %s1706
        // Predicated region
        $region33: #{tpu_custom_call.1} parent=23 // pred_check
          %p1708 = pneg %p87
        $region34: #{tpu_custom_call.1} parent=23 // pred_check_branch
          %1710 = sbr.rel (%p1708) target = $region36
        $region35: #{tpu_custom_call.1} parent=23 // pred_region
          %s1711 = smul.u32 8, %s25
          %s1712 = smul.u32 4, %s24
          %s1714 = ssub.s32 2048, 2048
          %1715 = vsyncadd %s1704, %s1714
          %s1716 = smul.addr %s1711, 4
          %s1717 = sadd.s32 %s1712, %s1716
          %s1718 = smul.addr %s23, 32
          %s1719 = sadd.s32 %s1717, %s1718
          %s1720 = smul.addr %s1719, 64
          %s1721 = scalar_lea.hbm %s1, %s1720
          %s1722 = sshll.u32 %s1707, 4
          %s1723 = int_to_ptr.vmem [resolvable:$true] %s1722
          %1728 = dma.vmem_to_hbm [thread:$0]  %s1723, 2048, %s1721, %s1704, 64, 64, 4
        $region36: #{tpu_custom_call.1} parent=23 // pred_fallthru
          _
      $region24: #{tpu_custom_call.1} parent=5 // pred_fallthru
        _
      %p1729 = scmp.le.s32.totalorder 2, %s13
      // Predicated region
      $region37: #{tpu_custom_call.1} parent=5 // pred_check
        %p1730 = pneg %p1729
      $region38: #{tpu_custom_call.1} parent=5 // pred_check_branch
        %1732 = sbr.rel (%p1730) target = $region40
      $region39: #{tpu_custom_call.1} parent=5 // pred_region
        %s1733 = ssub.s32 %s13, 2
        // Predicated region
        $region41: #{tpu_custom_call.1} parent=39 // pred_check
          %p1734 = pneg %p93
        $region42: #{tpu_custom_call.1} parent=39 // pred_check_branch
          %1736 = sbr.rel (%p1734) target = $region44
        $region43: #{tpu_custom_call.1} parent=39 // pred_region
          %s1737 = sand.u32 %s78, 1
          %s1738 = scalar_lea.sflag [#allocation5], %s1737
          %s1739 = sand.u32 %s78, 1
          %s1740 = smul.addr %s1739, 128
          %s1741 = scalar_lea.vmem [#allocation6], %s1740
          %1742 = dma.done %s1738, 2048
        $region44: #{tpu_custom_call.1} parent=39 // pred_fallthru
          _
      $region40: #{tpu_custom_call.1} parent=5 // pred_fallthru
        _
    $region6: #{tpu_custom_call.1} parent=1 // loop_footer
      %s17 = sadd.s32 1, %s13
    $region7: #{tpu_custom_call.1} parent=1 // loop_footer_branch
      %12 = sbr.rel target = $region3
    $region8: #{tpu_custom_call.1} parent=1 // loop_exit
      _
    %1743 = vsyncpa [#allocation4], 1
    %s1744 = scalar_lea.sflag [#allocation4], 1
    %1745 = vsyncpa %s1744, 1
    %1746 = vsyncpa [#allocation5], 1
    %s1747 = scalar_lea.sflag [#allocation5], 1
    %1748 = vsyncpa %s1747, 1

</llo_original>
